<compile_context>
chip_gen: v7x
topology: tpu7x:2x2x1
jax: 0.10.0
libtpu: 0.0.40
codegen_flags: <defaults>
</compile_context>

<pallas_src>
import math
import functools

import jax
import jax.numpy as jnp
from jax import lax
from jax.experimental import pallas as pl
from jax.experimental.pallas import tpu as pltpu

BF16 = jnp.bfloat16
NEG_INF = -1e9
LN_EPS = 1e-5
VMEM_LIMIT = 48 * 1024 * 1024        # < v7x's 64 MiB physical VMEM per core


# ----------------------------- Pallas kernels ------------------------------

def _fused_transformer_body_kernel(
        # activations / tables
        xe_ref, ye_ref, pe_ref,
        # encoder self-attention + LN
        e_wqkv, e_bqkv, e_wo, e_bo, e_ln1g, e_ln1b,
        # encoder FFN + LN
        e_w1, e_fb1, e_w2, e_fb2, e_ln2g, e_ln2b,
        # decoder masked self-attention + LN
        d_wqkv, d_bqkv, d_wo, d_bo, d_ln1g, d_ln1b,
        # decoder cross-attention + LN
        c_wq, c_bq, c_wkv, c_bkv, c_wo, c_bo, d_ln2g, d_ln2b,
        # decoder FFN + LN
        f_w1, f_fb1, f_w2, f_fb2, d_ln3g, d_ln3b,
        # output
        out_ref, *, hp, scale):
    """Whole encoder+decoder stack for one batch tile; residual stays in VMEM."""
    bb, S, D = xe_ref.shape
    T = ye_ref.shape[1]

    def layer_norm(x2, g_ref, b_ref):
        mu = jnp.mean(x2, axis=-1, keepdims=True)
        xc = x2 - mu
        var = jnp.mean(xc * xc, axis=-1, keepdims=True)
        return xc * lax.rsqrt(var + LN_EPS) * g_ref[...] + b_ref[...]

    def sdpa(q, k, v, causal):
        # q: (bb, Lq, hp), k/v: (bb, Lk, hp), f32 -> (bb, Lq, hp) f32
        s = jnp.einsum('bqd,bkd->bqk', q.astype(BF16), k.astype(BF16),
                       preferred_element_type=jnp.float32) * scale
        if causal:
            row = lax.broadcasted_iota(jnp.int32, s.shape, 1)
            col = lax.broadcasted_iota(jnp.int32, s.shape, 2)
            s = jnp.where(col > row, NEG_INF, s)
        m = jnp.max(s, axis=-1, keepdims=True)
        p = jnp.exp(s - m)
        p = p * pl.reciprocal(jnp.sum(p, axis=-1, keepdims=True), approx=True)
        return jnp.einsum('bqk,bkd->bqd', p.astype(BF16), v.astype(BF16),
                          preferred_element_type=jnp.float32)

    def self_attn(x2, n, wqkv_ref, bqkv_ref, wo_ref, bo_ref, causal):
        # x2: (bb*n, D) f32 — QKV projected on the flattened slab (tall matmul)
        qkv = jnp.dot(x2.astype(BF16), wqkv_ref[...],
                      preferred_element_type=jnp.float32) + bqkv_ref[...]
        qkv = qkv.reshape(bb, n, 3 * hp)
        a = sdpa(qkv[..., :hp], qkv[..., hp:2 * hp], qkv[..., 2 * hp:], causal)
        return jnp.dot(a.reshape(bb * n, hp).astype(BF16), wo_ref[...],
                       preferred_element_type=jnp.float32) + bo_ref[...]

    def ffn(x2, w1_ref, b1_ref, w2_ref, b2_ref):
        h = jnp.dot(x2.astype(BF16), w1_ref[...],
                    preferred_element_type=jnp.float32) + b1_ref[...]
        h = jnp.maximum(h, 0.0)
        return jnp.dot(h.astype(BF16), w2_ref[...],
                       preferred_element_type=jnp.float32) + b2_ref[...]

    pe = pe_ref[...]                                            # (L, D) f32

    # ---------------- encoder ----------------
    x2 = (xe_ref[...].astype(jnp.float32) + pe[:S][None]).reshape(bb * S, D)
    x2 = layer_norm(x2 + self_attn(x2, S, e_wqkv, e_bqkv, e_wo, e_bo, False),
                    e_ln1g, e_ln1b)
    x2 = layer_norm(x2 + ffn(x2, e_w1, e_fb1, e_w2, e_fb2), e_ln2g, e_ln2b)
    h2 = x2                                                     # (bb*S, D) enc out

    # ---------------- decoder ----------------
    y2 = (ye_ref[...].astype(jnp.float32) + pe[:T][None]).reshape(bb * T, D)
    y2 = layer_norm(y2 + self_attn(y2, T, d_wqkv, d_bqkv, d_wo, d_bo, True),
                    d_ln1g, d_ln1b)
    # cross-attention: Q from decoder stream, K/V projected from encoder output
    q = (jnp.dot(y2.astype(BF16), c_wq[...],
                 preferred_element_type=jnp.float32) + c_bq[...]).reshape(bb, T, hp)
    kv = (jnp.dot(h2.astype(BF16), c_wkv[...],
                  preferred_element_type=jnp.float32) + c_bkv[...]).reshape(bb, S, 2 * hp)
    a = sdpa(q, kv[..., :hp], kv[..., hp:], False)
    cross = jnp.dot(a.reshape(bb * T, hp).astype(BF16), c_wo[...],
                    preferred_element_type=jnp.float32) + c_bo[...]
    y2 = layer_norm(y2 + cross, d_ln2g, d_ln2b)
    y2 = layer_norm(y2 + ffn(y2, f_w1, f_fb1, f_w2, f_fb2), d_ln3g, d_ln3b)

    out_ref[...] = y2.astype(out_ref.dtype)                     # (bb*T, D) bf16


def _generator_loss_kernel(x_ref, w_ref, b_ref, tgt_ref, loss_ref,
                           m_sc, l_sc, c_sc,
                           *, v_chunk, confidence, fill, coef, row_const):
    """Fused Generator (linear + log_softmax) + LabelSmoothing KLDiv(sum).

    Per row:  loss_r = row_const - sum_v(td_v * logp_v)
                     = row_const - c_r + coef * lse_r
    where c_r = sum_v(logits_v * td_v), td_v in {fill, confidence},
    coef = fill*(V-1)+confidence, so only the online LSE and one weighted
    logit-sum accumulator are needed per vocab chunk.
    """
    j = pl.program_id(1)

    @pl.when(j == 0)
    def _():
        m_sc[...] = jnp.full_like(m_sc, -jnp.inf)
        l_sc[...] = jnp.zeros_like(l_sc)
        c_sc[...] = jnp.zeros_like(c_sc)

    # x block is already bf16 — no per-chunk re-cast of the resident rows.
    logits = jnp.dot(x_ref[...], w_ref[...],
                     preferred_element_type=jnp.float32) + b_ref[...]   # (R, VC)

    # online logsumexp over vocab chunks
    m_new = jnp.maximum(m_sc[...], jnp.max(logits, axis=-1, keepdims=True))
    alpha = jnp.exp(m_sc[...] - m_new)
    l_sc[...] = alpha * l_sc[...] + jnp.sum(jnp.exp(logits - m_new),
                                            axis=-1, keepdims=True)
    m_sc[...] = m_new

    # single merged accumulator: sum_v logits_v * true_dist_v
    col = j * v_chunk + lax.broadcasted_iota(jnp.int32, logits.shape, 1)
    wgt = jnp.where(col == tgt_ref[...], confidence, fill)
    c_sc[...] = c_sc[...] + jnp.sum(logits * wgt, axis=-1, keepdims=True)

    @pl.when(j == pl.num_programs(1) - 1)
    def _():
        lse = m_sc[...] + jnp.log(l_sc[...])
        loss_ref[...] = row_const - c_sc[...] + coef * lse      # (tr, 1)


# ------------------------------ kernel wrappers -----------------------------

def _rep_spec(a):
    """Full-array block replicated at every grid step (weights / tables)."""
    n = a.ndim
    return pl.BlockSpec(a.shape, lambda *idx: (0,) * n)


def _pick_row_tile(R, max_tile=256):
    """Largest multiple-of-8 divisor of R (< R, <= max_tile) so the generator
    gets a parallel row-tile axis of length >= 2; falls back to R."""
    cands = [t for t in range(8, R, 8) if R % t == 0 and t <= max_tile]
    return max(cands) if cands else R


def _pick_v_chunk(V, max_chunk=2048):
    if V <= max_chunk:
        return V
    cands = [c for c in range(128, max_chunk + 1, 128) if V % c == 0]
    return max(cands) if cands else V


def fused_transformer_body(Xe, Ye, pe, weights, *, hp, scale):
    """One pallas_call for the whole encoder+decoder stack."""
    B, S, D = Xe.shape
    T = Ye.shape[1]
    # Leading "parallel" batch-tile axis of length >= 2 when legal (v7x: 2 TCs).
    nb = 2 if (B % 2 == 0 and B >= 2 and ((B // 2) * T) % 8 == 0) else 1
    bb = B // nb
    return pl.pallas_call(
        functools.partial(_fused_transformer_body_kernel, hp=hp, scale=scale),
        out_shape=jax.ShapeDtypeStruct((B * T, D), BF16),
        grid=(nb,),
        in_specs=[pl.BlockSpec((bb, S, D), lambda i: (i, 0, 0)),
                  pl.BlockSpec((bb, T, D), lambda i: (i, 0, 0)),
                  _rep_spec(pe)] + [_rep_spec(w) for w in weights],
        out_specs=pl.BlockSpec((bb * T, D), lambda i: (i, 0)),
        compiler_params=pltpu.CompilerParams(
            dimension_semantics=("parallel",),
            vmem_limit_bytes=VMEM_LIMIT),
    )(Xe, Ye, pe, *weights)


def generator_loss(x2d, w, b, targets, *, smoothing, v_chunk=None, row_tile=None):
    """Generator linear + log_softmax + LabelSmoothing KLDiv(sum), fused."""
    R, D = x2d.shape
    V = w.shape[1]
    if v_chunk is None:
        v_chunk = _pick_v_chunk(V)
    assert V % v_chunk == 0
    if row_tile is None:
        row_tile = _pick_row_tile(R)
    assert R % row_tile == 0
    nr, nj = R // row_tile, V // v_chunk

    confidence = 1.0 - smoothing
    fill = smoothing / (V - 1)
    coef = fill * (V - 1) + confidence           # == 1.0 for this smoothing scheme
    # sum_v true_dist*log(true_dist) per row (compile-time constant)
    row_const = confidence * math.log(confidence) + smoothing * math.log(fill)

    loss_rows = pl.pallas_call(
        functools.partial(_generator_loss_kernel, v_chunk=v_chunk,
                          confidence=confidence, fill=fill, coef=coef,
                          row_const=row_const),
        out_shape=jax.ShapeDtypeStruct((R, 1), jnp.float32),
        grid=(nr, nj),
        in_specs=[pl.BlockSpec((row_tile, D), lambda i, j: (i, 0)),
                  pl.BlockSpec((D, v_chunk), lambda i, j: (0, j)),
                  pl.BlockSpec((1, v_chunk), lambda i, j: (0, j)),
                  pl.BlockSpec((row_tile, 1), lambda i, j: (i, 0))],
        out_specs=pl.BlockSpec((row_tile, 1), lambda i, j: (i, 0)),
        scratch_shapes=[pltpu.VMEM((row_tile, 1), jnp.float32)] * 3,
        compiler_params=pltpu.CompilerParams(
            dimension_semantics=("parallel", "arbitrary"),
            vmem_limit_bytes=VMEM_LIMIT),
    )(x2d, w, b, targets.reshape(R, 1).astype(jnp.int32))
    return jnp.sum(loss_rows)


# ------------------------------- JAX glue ----------------------------------

def positional_encoding_table(L, D):
    """Matches TransformerModel.PositionalEncoding (dropout=identity, eval)."""
    pos = jnp.arange(L, dtype=jnp.float32)[:, None]                    # (L, 1)
    div = jnp.exp(jnp.arange(0, D, 2, dtype=jnp.float32)
                  * (-math.log(10000.0) / D))                          # (D/2,)
    ang = pos * div                                                    # (L, D/2)
    return jnp.stack([jnp.sin(ang), jnp.cos(ang)], axis=-1).reshape(L, D)


def _dense(key, din, dout):
    kw, kb = jax.random.split(key)
    w = jax.random.normal(kw, (din, dout), jnp.float32) / math.sqrt(din)
    b = jax.random.normal(kb, (dout,), jnp.float32) * 0.01
    return w, b


def _pad_cols(w, b, n_to):
    din, n = w.shape
    wp = jnp.zeros((din, n_to), jnp.float32).at[:, :n].set(w)
    bp = jnp.zeros((1, n_to), jnp.float32).at[:, :n].set(b)
    return wp, bp


def _pad_rows(w, n_to):
    n, dout = w.shape
    return jnp.zeros((n_to, dout), jnp.float32).at[:n, :].set(w)


def init_params(key, v_src, v_tgt, d_model, d_k, d_v, d_ff, hp):
    # TODO(synk): zero-padding d_k/d_v to hp=128 doubles head-dim MXU work; pack
    #             two 64-wide heads per 128-lane tile if scaled to multi-head.
    assert hp % 128 == 0 and hp >= max(d_k, d_v)
    keys = iter(jax.random.split(key, 32))

    def attn_block_params():
        wq, bq = _dense(next(keys), d_model, d_k)
        wk, bk = _dense(next(keys), d_model, d_k)
        wv, bv = _dense(next(keys), d_model, d_v)
        wo, bo = _dense(next(keys), d_v, d_model)
        wq_p, bq_p = _pad_cols(wq, bq, hp)
        wk_p, bk_p = _pad_cols(wk, bk, hp)
        wv_p, bv_p = _pad_cols(wv, bv, hp)
        return {'wqkv': jnp.concatenate([wq_p, wk_p, wv_p], 1).astype(BF16),
                'bqkv': jnp.concatenate([bq_p, bk_p, bv_p], 1),
                'wo': _pad_rows(wo, hp).astype(BF16),
                'bo': bo.reshape(1, d_model)}

    def cross_block_params():
        wq, bq = _dense(next(keys), d_model, d_k)
        wk, bk = _dense(next(keys), d_model, d_k)
        wv, bv = _dense(next(keys), d_model, d_v)
        wo, bo = _dense(next(keys), d_v, d_model)
        wq_p, bq_p = _pad_cols(wq, bq, hp)
        wk_p, bk_p = _pad_cols(wk, bk, hp)
        wv_p, bv_p = _pad_cols(wv, bv, hp)
        return {'wq': wq_p.astype(BF16), 'bq': bq_p,
                'wkv': jnp.concatenate([wk_p, wv_p], 1).astype(BF16),
                'bkv': jnp.concatenate([bk_p, bv_p], 1),
                'wo': _pad_rows(wo, hp).astype(BF16),
                'bo': bo.reshape(1, d_model)}

    def ffn_params():
        w1, b1 = _dense(next(keys), d_model, d_ff)
        w2, b2 = _dense(next(keys), d_ff, d_model)
        return {'w1': w1.astype(BF16), 'b1': b1.reshape(1, d_ff),
                'w2': w2.astype(BF16), 'b2': b2.reshape(1, d_model)}

    def ln_params():
        return {'g': jnp.ones((1, d_model), jnp.float32),
                'b': jnp.zeros((1, d_model), jnp.float32)}

    params = {'enc_attn': attn_block_params(),
              'enc_ffn': ffn_params(),
              'dec_attn': attn_block_params(),
              'dec_cross': cross_block_params(),
              'dec_ffn': ffn_params(),
              'ln': {'enc1': ln_params(), 'enc2': ln_params(),
                     'dec1': ln_params(), 'dec2': ln_params(),
                     'dec3': ln_params()}}
    wg, bg = _dense(next(keys), d_model, v_tgt)
    params['gen'] = {'w': wg.astype(BF16), 'b': bg.reshape(1, v_tgt)}
    params['emb_src'] = (jax.random.normal(next(keys), (v_src, d_model),
                                           jnp.float32) / math.sqrt(d_model))
    params['emb_tgt'] = (jax.random.normal(next(keys), (v_tgt, d_model),
                                           jnp.float32) / math.sqrt(d_model))
    return params


def _body_weight_list(params):
    """Flat weight list in the exact kernel-argument order."""
    ea, ef = params['enc_attn'], params['enc_ffn']
    da, dc, df = params['dec_attn'], params['dec_cross'], params['dec_ffn']
    ln = params['ln']
    return [
        ea['wqkv'], ea['bqkv'], ea['wo'], ea['bo'], ln['enc1']['g'], ln['enc1']['b'],
        ef['w1'], ef['b1'], ef['w2'], ef['b2'], ln['enc2']['g'], ln['enc2']['b'],
        da['wqkv'], da['bqkv'], da['wo'], da['bo'], ln['dec1']['g'], ln['dec1']['b'],
        dc['wq'], dc['bq'], dc['wkv'], dc['bkv'], dc['wo'], dc['bo'],
        ln['dec2']['g'], ln['dec2']['b'],
        df['w1'], df['b1'], df['w2'], df['b2'], ln['dec3']['g'], ln['dec3']['b'],
    ]


def transformer_forward(params, source_padded, target_padded, *, d_k, hp,
                        smoothing=0.1, v_chunk=None):
    """source_padded: (S, B) int32 ; target_padded: (T_full, B) int32.
    Returns the scalar LabelSmoothing KL-divergence (sum) loss (the PyTorch
    forward's `scores`)."""
    S, B = source_padded.shape
    T = target_padded.shape[0] - 1
    D = params['emb_src'].shape[1]
    scale = 1.0 / math.sqrt(d_k)

    # batch-major token ids; flattened rows of Y3 are ordered (b, t) just like
    # the flattened targets, so the summed loss matches the (T, B) reference.
    src_bm = source_padded.T                                    # (B, S)
    tgt_in_bm = target_padded[:-1].T                            # (B, T)
    tgt_out = target_padded[1:].T.reshape(B * T)                # (B*T,)

    # Embedding gathers stay in XLA (tiny); activations enter the kernel in
    # bf16, PE add + the whole encoder/decoder stack happen inside one kernel.
    Xe = jnp.take(params['emb_src'], src_bm, axis=0).astype(BF16)   # (B, S, D)
    Ye = jnp.take(params['emb_tgt'], tgt_in_bm, axis=0).astype(BF16)
    pe = positional_encoding_table(max(S, T), D)

    Y3 = fused_transformer_body(Xe, Ye, pe, _body_weight_list(params),
                                hp=hp, scale=scale)             # (B*T, D) bf16

    pg = params['gen']
    return generator_loss(Y3, pg['w'], pg['b'], tgt_out,
                          smoothing=smoothing, v_chunk=v_chunk)


# --------------------------------- main -------------------------------------

if __name__ == "__main__":
    key = jax.random.PRNGKey(0)
    # small shapes consistent with the module (d_model/d_k/d_v/d_ff scaled down)
    V_SRC = V_TGT = 512
    D_MODEL, D_K, D_V, D_FF = 128, 64, 64, 256
    HP = 128                      # head dims zero-padded to a full 128-lane tile
    S, T_FULL, B = 16, 17, 4      # source len 16, target (with <s>/</s>) 17, batch 4

    kp, ksrc, ktgt = jax.random.split(key, 3)
    params = init_params(kp, V_SRC, V_TGT, D_MODEL, D_K, D_V, D_FF, HP)
    source_padded = jax.random.randint(ksrc, (S, B), 0, V_SRC, dtype=jnp.int32)
    target_padded = jax.random.randint(ktgt, (T_FULL, B), 0, V_TGT, dtype=jnp.int32)

    fwd = jax.jit(functools.partial(transformer_forward, d_k=D_K, hp=HP,
                                    smoothing=0.1))
    loss = jax.block_until_ready(fwd(params, source_padded, target_padded))
    assert bool(jnp.isfinite(loss)), "loss is not finite"
    print("KERNEL_OK")
</pallas_src>

<mosaic_0001>
module attributes {stable_mosaic.version = 11 : i64} {
  func.func @_fused_transformer_body_kernel(%arg0: i32, %arg1: memref<2x16x128xbf16, #tpu.memory_space<vmem>>, %arg2: memref<2x16x128xbf16, #tpu.memory_space<vmem>>, %arg3: memref<16x128xf32, #tpu.memory_space<vmem>>, %arg4: memref<128x384xbf16, #tpu.memory_space<vmem>>, %arg5: memref<1x384xf32, #tpu.memory_space<vmem>>, %arg6: memref<128x128xbf16, #tpu.memory_space<vmem>>, %arg7: memref<1x128xf32, #tpu.memory_space<vmem>>, %arg8: memref<1x128xf32, #tpu.memory_space<vmem>>, %arg9: memref<1x128xf32, #tpu.memory_space<vmem>>, %arg10: memref<128x256xbf16, #tpu.memory_space<vmem>>, %arg11: memref<1x256xf32, #tpu.memory_space<vmem>>, %arg12: memref<256x128xbf16, #tpu.memory_space<vmem>>, %arg13: memref<1x128xf32, #tpu.memory_space<vmem>>, %arg14: memref<1x128xf32, #tpu.memory_space<vmem>>, %arg15: memref<1x128xf32, #tpu.memory_space<vmem>>, %arg16: memref<128x384xbf16, #tpu.memory_space<vmem>>, %arg17: memref<1x384xf32, #tpu.memory_space<vmem>>, %arg18: memref<128x128xbf16, #tpu.memory_space<vmem>>, %arg19: memref<1x128xf32, #tpu.memory_space<vmem>>, %arg20: memref<1x128xf32, #tpu.memory_space<vmem>>, %arg21: memref<1x128xf32, #tpu.memory_space<vmem>>, %arg22: memref<128x128xbf16, #tpu.memory_space<vmem>>, %arg23: memref<1x128xf32, #tpu.memory_space<vmem>>, %arg24: memref<128x256xbf16, #tpu.memory_space<vmem>>, %arg25: memref<1x256xf32, #tpu.memory_space<vmem>>, %arg26: memref<128x128xbf16, #tpu.memory_space<vmem>>, %arg27: memref<1x128xf32, #tpu.memory_space<vmem>>, %arg28: memref<1x128xf32, #tpu.memory_space<vmem>>, %arg29: memref<1x128xf32, #tpu.memory_space<vmem>>, %arg30: memref<128x256xbf16, #tpu.memory_space<vmem>>, %arg31: memref<1x256xf32, #tpu.memory_space<vmem>>, %arg32: memref<256x128xbf16, #tpu.memory_space<vmem>>, %arg33: memref<1x128xf32, #tpu.memory_space<vmem>>, %arg34: memref<1x128xf32, #tpu.memory_space<vmem>>, %arg35: memref<1x128xf32, #tpu.memory_space<vmem>>, %arg36: memref<32x128xbf16, #tpu.memory_space<vmem>>) attributes {dimension_semantics = [#tpu.dimension_semantics<parallel>], iteration_bounds = array<i64: 2>, scalar_prefetch = 0 : i64, scratch_operands = 0 : i64, tpu.core_type = #tpu.core_type<tc>, window_params = [{transform_indices = @transform_0, window_bounds = array<i64: 2, 16, 128>}, {transform_indices = @transform_1, window_bounds = array<i64: 2, 16, 128>}, {pipeline_mode = #tpu.pipeline_mode<synchronous>, transform_indices = @transform_2, window_bounds = array<i64: 16, 128>}, {pipeline_mode = #tpu.pipeline_mode<synchronous>, transform_indices = @transform_3, window_bounds = array<i64: 128, 384>}, {pipeline_mode = #tpu.pipeline_mode<synchronous>, transform_indices = @transform_4, window_bounds = array<i64: 1, 384>}, {pipeline_mode = #tpu.pipeline_mode<synchronous>, transform_indices = @transform_5, window_bounds = array<i64: 128, 128>}, {pipeline_mode = #tpu.pipeline_mode<synchronous>, transform_indices = @transform_6, window_bounds = array<i64: 1, 128>}, {pipeline_mode = #tpu.pipeline_mode<synchronous>, transform_indices = @transform_7, window_bounds = array<i64: 1, 128>}, {pipeline_mode = #tpu.pipeline_mode<synchronous>, transform_indices = @transform_8, window_bounds = array<i64: 1, 128>}, {pipeline_mode = #tpu.pipeline_mode<synchronous>, transform_indices = @transform_9, window_bounds = array<i64: 128, 256>}, {pipeline_mode = #tpu.pipeline_mode<synchronous>, transform_indices = @transform_10, window_bounds = array<i64: 1, 256>}, {pipeline_mode = #tpu.pipeline_mode<synchronous>, transform_indices = @transform_11, window_bounds = array<i64: 256, 128>}, {pipeline_mode = #tpu.pipeline_mode<synchronous>, transform_indices = @transform_12, window_bounds = array<i64: 1, 128>}, {pipeline_mode = #tpu.pipeline_mode<synchronous>, transform_indices = @transform_13, window_bounds = array<i64: 1, 128>}, {pipeline_mode = #tpu.pipeline_mode<synchronous>, transform_indices = @transform_14, window_bounds = array<i64: 1, 128>}, {pipeline_mode = #tpu.pipeline_mode<synchronous>, transform_indices = @transform_15, window_bounds = array<i64: 128, 384>}, {pipeline_mode = #tpu.pipeline_mode<synchronous>, transform_indices = @transform_16, window_bounds = array<i64: 1, 384>}, {pipeline_mode = #tpu.pipeline_mode<synchronous>, transform_indices = @transform_17, window_bounds = array<i64: 128, 128>}, {pipeline_mode = #tpu.pipeline_mode<synchronous>, transform_indices = @transform_18, window_bounds = array<i64: 1, 128>}, {pipeline_mode = #tpu.pipeline_mode<synchronous>, transform_indices = @transform_19, window_bounds = array<i64: 1, 128>}, {pipeline_mode = #tpu.pipeline_mode<synchronous>, transform_indices = @transform_20, window_bounds = array<i64: 1, 128>}, {pipeline_mode = #tpu.pipeline_mode<synchronous>, transform_indices = @transform_21, window_bounds = array<i64: 128, 128>}, {pipeline_mode = #tpu.pipeline_mode<synchronous>, transform_indices = @transform_22, window_bounds = array<i64: 1, 128>}, {pipeline_mode = #tpu.pipeline_mode<synchronous>, transform_indices = @transform_23, window_bounds = array<i64: 128, 256>}, {pipeline_mode = #tpu.pipeline_mode<synchronous>, transform_indices = @transform_24, window_bounds = array<i64: 1, 256>}, {pipeline_mode = #tpu.pipeline_mode<synchronous>, transform_indices = @transform_25, window_bounds = array<i64: 128, 128>}, {pipeline_mode = #tpu.pipeline_mode<synchronous>, transform_indices = @transform_26, window_bounds = array<i64: 1, 128>}, {pipeline_mode = #tpu.pipeline_mode<synchronous>, transform_indices = @transform_27, window_bounds = array<i64: 1, 128>}, {pipeline_mode = #tpu.pipeline_mode<synchronous>, transform_indices = @transform_28, window_bounds = array<i64: 1, 128>}, {pipeline_mode = #tpu.pipeline_mode<synchronous>, transform_indices = @transform_29, window_bounds = array<i64: 128, 256>}, {pipeline_mode = #tpu.pipeline_mode<synchronous>, transform_indices = @transform_30, window_bounds = array<i64: 1, 256>}, {pipeline_mode = #tpu.pipeline_mode<synchronous>, transform_indices = @transform_31, window_bounds = array<i64: 256, 128>}, {pipeline_mode = #tpu.pipeline_mode<synchronous>, transform_indices = @transform_32, window_bounds = array<i64: 1, 128>}, {pipeline_mode = #tpu.pipeline_mode<synchronous>, transform_indices = @transform_33, window_bounds = array<i64: 1, 128>}, {pipeline_mode = #tpu.pipeline_mode<synchronous>, transform_indices = @transform_34, window_bounds = array<i64: 1, 128>}, {transform_indices = @transform_35, window_bounds = array<i64: 32, 128>}]} {
    %c0 = arith.constant 0 : index
    %c0_0 = arith.constant 0 : index
    %0 = vector.load %arg3[%c0, %c0_0] : memref<16x128xf32, #tpu.memory_space<vmem>>, vector<16x128xf32>
    %c0_1 = arith.constant 0 : index
    %c0_2 = arith.constant 0 : index
    %c0_3 = arith.constant 0 : index
    %1 = vector.load %arg1[%c0_1, %c0_2, %c0_3] : memref<2x16x128xbf16, #tpu.memory_space<vmem>>, vector<2x16x128xbf16>
    %2 = arith.extf %1 : vector<2x16x128xbf16> to vector<2x16x128xf32>
    %3 = vector.shape_cast %0 : vector<16x128xf32> to vector<1x16x128xf32>
    %4 = vector.broadcast %3 : vector<1x16x128xf32> to vector<2x16x128xf32>
    %5 = arith.addf %2, %4 : vector<2x16x128xf32>
    %6 = vector.shape_cast %5 : vector<2x16x128xf32> to vector<32x128xf32>
    %7 = arith.truncf %6 : vector<32x128xf32> to vector<32x128xbf16>
    %c0_4 = arith.constant 0 : index
    %c0_5 = arith.constant 0 : index
    %8 = vector.load %arg4[%c0_4, %c0_5] : memref<128x384xbf16, #tpu.memory_space<vmem>>, vector<128x384xbf16>
    %cst = arith.constant dense<0.000000e+00> : vector<32x384xf32>
    %9 = tpu.matmul %7, %8, %cst {dimension_numbers = #tpu.dot_dimension_numbers<[1], [0], [0], [1], [0, 0, 1, 1], [], []>} : vector<32x128xbf16>, vector<128x384xbf16>, vector<32x384xf32> -> vector<32x384xf32>
    %c0_6 = arith.constant 0 : index
    %c0_7 = arith.constant 0 : index
    %10 = vector.load %arg5[%c0_6, %c0_7] : memref<1x384xf32, #tpu.memory_space<vmem>>, vector<1x384xf32>
    %11 = vector.broadcast %10 : vector<1x384xf32> to vector<32x384xf32>
    %12 = arith.addf %9, %11 : vector<32x384xf32>
    %13 = vector.shape_cast %12 : vector<32x384xf32> to vector<2x16x384xf32>
    %14 = vector.extract_strided_slice %13 {offsets = [0, 0, 0], sizes = [2, 16, 128], strides = [1, 1, 1]} : vector<2x16x384xf32> to vector<2x16x128xf32>
    %15 = vector.extract_strided_slice %13 {offsets = [0, 0, 128], sizes = [2, 16, 128], strides = [1, 1, 1]} : vector<2x16x384xf32> to vector<2x16x128xf32>
    %16 = vector.extract_strided_slice %13 {offsets = [0, 0, 256], sizes = [2, 16, 128], strides = [1, 1, 1]} : vector<2x16x384xf32> to vector<2x16x128xf32>
    %17 = arith.truncf %14 : vector<2x16x128xf32> to vector<2x16x128xbf16>
    %18 = arith.truncf %15 : vector<2x16x128xf32> to vector<2x16x128xbf16>
    "tpu.trace_start"() <{level = 10 : i32, message = "bqd,bkd->bqk"}> : () -> ()
    %cst_8 = arith.constant dense<0.000000e+00> : vector<2x16x16xf32>
    %19 = tpu.matmul %17, %18, %cst_8 {dimension_numbers = #tpu.dot_dimension_numbers<[2], [2], [1], [1], [0, 0, 0, 1, 1, 1], [0], [0]>} : vector<2x16x128xbf16>, vector<2x16x128xbf16>, vector<2x16x16xf32> -> vector<2x16x16xf32>
    "tpu.trace_stop"() : () -> ()
    %cst_9 = arith.constant 1.250000e-01 : f32
    %20 = vector.broadcast %cst_9 : f32 to vector<2x16x16xf32>
    %21 = arith.mulf %19, %20 : vector<2x16x16xf32>
    %cst_10 = arith.constant dense<0xFF800000> : vector<2x16xf32>
    %22 = vector.multi_reduction <maximumf>, %21, %cst_10 [2] : vector<2x16x16xf32> to vector<2x16xf32>
    %23 = vector.shape_cast %22 : vector<2x16xf32> to vector<2x16x1xf32>
    %24 = vector.broadcast %23 : vector<2x16x1xf32> to vector<2x16x16xf32>
    %25 = arith.subf %21, %24 : vector<2x16x16xf32>
    %26 = math.exp %25 : vector<2x16x16xf32>
    %cst_11 = arith.constant dense<0.000000e+00> : vector<2x16xf32>
    %27 = vector.multi_reduction <add>, %26, %cst_11 [2] : vector<2x16x16xf32> to vector<2x16xf32>
    %28 = vector.shape_cast %27 : vector<2x16xf32> to vector<2x16x1xf32>
    %29 = tpu.reciprocal %28 {approx = true} : vector<2x16x1xf32> -> vector<2x16x1xf32>
    %30 = vector.broadcast %29 : vector<2x16x1xf32> to vector<2x16x16xf32>
    %31 = arith.mulf %26, %30 : vector<2x16x16xf32>
    %32 = arith.truncf %31 : vector<2x16x16xf32> to vector<2x16x16xbf16>
    %33 = arith.truncf %16 : vector<2x16x128xf32> to vector<2x16x128xbf16>
    "tpu.trace_start"() <{level = 10 : i32, message = "bqk,bkd->bqd"}> : () -> ()
    %cst_12 = arith.constant dense<0.000000e+00> : vector<2x16x128xf32>
    %34 = tpu.matmul %32, %33, %cst_12 {dimension_numbers = #tpu.dot_dimension_numbers<[2], [1], [1], [2], [0, 0, 0, 1, 1, 2], [0], [0]>} : vector<2x16x16xbf16>, vector<2x16x128xbf16>, vector<2x16x128xf32> -> vector<2x16x128xf32>
    "tpu.trace_stop"() : () -> ()
    %35 = vector.shape_cast %34 : vector<2x16x128xf32> to vector<32x128xf32>
    %36 = arith.truncf %35 : vector<32x128xf32> to vector<32x128xbf16>
    %c0_13 = arith.constant 0 : index
    %c0_14 = arith.constant 0 : index
    %37 = vector.load %arg6[%c0_13, %c0_14] : memref<128x128xbf16, #tpu.memory_space<vmem>>, vector<128x128xbf16>
    %cst_15 = arith.constant dense<0.000000e+00> : vector<32x128xf32>
    %38 = tpu.matmul %36, %37, %cst_15 {dimension_numbers = #tpu.dot_dimension_numbers<[1], [0], [0], [1], [0, 0, 1, 1], [], []>} : vector<32x128xbf16>, vector<128x128xbf16>, vector<32x128xf32> -> vector<32x128xf32>
    %c0_16 = arith.constant 0 : index
    %c0_17 = arith.constant 0 : index
    %39 = vector.load %arg7[%c0_16, %c0_17] : memref<1x128xf32, #tpu.memory_space<vmem>>, vector<1x128xf32>
    %40 = vector.broadcast %39 : vector<1x128xf32> to vector<32x128xf32>
    %41 = arith.addf %38, %40 : vector<32x128xf32>
    %42 = arith.addf %6, %41 : vector<32x128xf32>
    %cst_18 = arith.constant dense<0.000000e+00> : vector<32xf32>
    %43 = vector.multi_reduction <add>, %42, %cst_18 [1] : vector<32x128xf32> to vector<32xf32>
    %44 = vector.shape_cast %43 : vector<32xf32> to vector<32x1xf32>
    %cst_19 = arith.constant 1.280000e+02 : f32
    %45 = vector.broadcast %cst_19 : f32 to vector<32x1xf32>
    %46 = arith.divf %44, %45 : vector<32x1xf32>
    %47 = vector.broadcast %46 : vector<32x1xf32> to vector<32x128xf32>
    %48 = arith.subf %42, %47 : vector<32x128xf32>
    %49 = arith.mulf %48, %48 : vector<32x128xf32>
    %cst_20 = arith.constant dense<0.000000e+00> : vector<32xf32>
    %50 = vector.multi_reduction <add>, %49, %cst_20 [1] : vector<32x128xf32> to vector<32xf32>
    %51 = vector.shape_cast %50 : vector<32xf32> to vector<32x1xf32>
    %cst_21 = arith.constant 1.280000e+02 : f32
    %52 = vector.broadcast %cst_21 : f32 to vector<32x1xf32>
    %53 = arith.divf %51, %52 : vector<32x1xf32>
    %cst_22 = arith.constant 9.99999974E-6 : f32
    %54 = vector.broadcast %cst_22 : f32 to vector<32x1xf32>
    %55 = arith.addf %53, %54 : vector<32x1xf32>
    %56 = math.rsqrt %55 : vector<32x1xf32>
    %57 = vector.broadcast %56 : vector<32x1xf32> to vector<32x128xf32>
    %58 = arith.mulf %48, %57 : vector<32x128xf32>
    %c0_23 = arith.constant 0 : index
    %c0_24 = arith.constant 0 : index
    %59 = vector.load %arg8[%c0_23, %c0_24] : memref<1x128xf32, #tpu.memory_space<vmem>>, vector<1x128xf32>
    %60 = vector.broadcast %59 : vector<1x128xf32> to vector<32x128xf32>
    %61 = arith.mulf %58, %60 : vector<32x128xf32>
    %c0_25 = arith.constant 0 : index
    %c0_26 = arith.constant 0 : index
    %62 = vector.load %arg9[%c0_25, %c0_26] : memref<1x128xf32, #tpu.memory_space<vmem>>, vector<1x128xf32>
    %63 = vector.broadcast %62 : vector<1x128xf32> to vector<32x128xf32>
    %64 = arith.addf %61, %63 : vector<32x128xf32>
    %65 = arith.truncf %64 : vector<32x128xf32> to vector<32x128xbf16>
    %c0_27 = arith.constant 0 : index
    %c0_28 = arith.constant 0 : index
    %66 = vector.load %arg10[%c0_27, %c0_28] : memref<128x256xbf16, #tpu.memory_space<vmem>>, vector<128x256xbf16>
    %cst_29 = arith.constant dense<0.000000e+00> : vector<32x256xf32>
    %67 = tpu.matmul %65, %66, %cst_29 {dimension_numbers = #tpu.dot_dimension_numbers<[1], [0], [0], [1], [0, 0, 1, 1], [], []>} : vector<32x128xbf16>, vector<128x256xbf16>, vector<32x256xf32> -> vector<32x256xf32>
    %c0_30 = arith.constant 0 : index
    %c0_31 = arith.constant 0 : index
    %68 = vector.load %arg11[%c0_30, %c0_31] : memref<1x256xf32, #tpu.memory_space<vmem>>, vector<1x256xf32>
    %69 = vector.broadcast %68 : vector<1x256xf32> to vector<32x256xf32>
    %70 = arith.addf %67, %69 : vector<32x256xf32>
    %cst_32 = arith.constant 0.000000e+00 : f32
    %71 = vector.broadcast %cst_32 : f32 to vector<32x256xf32>
    %72 = arith.maximumf %70, %71 : vector<32x256xf32>
    %73 = arith.truncf %72 : vector<32x256xf32> to vector<32x256xbf16>
    %c0_33 = arith.constant 0 : index
    %c0_34 = arith.constant 0 : index
    %74 = vector.load %arg12[%c0_33, %c0_34] : memref<256x128xbf16, #tpu.memory_space<vmem>>, vector<256x128xbf16>
    %cst_35 = arith.constant dense<0.000000e+00> : vector<32x128xf32>
    %75 = tpu.matmul %73, %74, %cst_35 {dimension_numbers = #tpu.dot_dimension_numbers<[1], [0], [0], [1], [0, 0, 1, 1], [], []>} : vector<32x256xbf16>, vector<256x128xbf16>, vector<32x128xf32> -> vector<32x128xf32>
    %c0_36 = arith.constant 0 : index
    %c0_37 = arith.constant 0 : index
    %76 = vector.load %arg13[%c0_36, %c0_37] : memref<1x128xf32, #tpu.memory_space<vmem>>, vector<1x128xf32>
    %77 = vector.broadcast %76 : vector<1x128xf32> to vector<32x128xf32>
    %78 = arith.addf %75, %77 : vector<32x128xf32>
    %79 = arith.addf %64, %78 : vector<32x128xf32>
    %cst_38 = arith.constant dense<0.000000e+00> : vector<32xf32>
    %80 = vector.multi_reduction <add>, %79, %cst_38 [1] : vector<32x128xf32> to vector<32xf32>
    %81 = vector.shape_cast %80 : vector<32xf32> to vector<32x1xf32>
    %cst_39 = arith.constant 1.280000e+02 : f32
    %82 = vector.broadcast %cst_39 : f32 to vector<32x1xf32>
    %83 = arith.divf %81, %82 : vector<32x1xf32>
    %84 = vector.broadcast %83 : vector<32x1xf32> to vector<32x128xf32>
    %85 = arith.subf %79, %84 : vector<32x128xf32>
    %86 = arith.mulf %85, %85 : vector<32x128xf32>
    %cst_40 = arith.constant dense<0.000000e+00> : vector<32xf32>
    %87 = vector.multi_reduction <add>, %86, %cst_40 [1] : vector<32x128xf32> to vector<32xf32>
    %88 = vector.shape_cast %87 : vector<32xf32> to vector<32x1xf32>
    %cst_41 = arith.constant 1.280000e+02 : f32
    %89 = vector.broadcast %cst_41 : f32 to vector<32x1xf32>
    %90 = arith.divf %88, %89 : vector<32x1xf32>
    %cst_42 = arith.constant 9.99999974E-6 : f32
    %91 = vector.broadcast %cst_42 : f32 to vector<32x1xf32>
    %92 = arith.addf %90, %91 : vector<32x1xf32>
    %93 = math.rsqrt %92 : vector<32x1xf32>
    %94 = vector.broadcast %93 : vector<32x1xf32> to vector<32x128xf32>
    %95 = arith.mulf %85, %94 : vector<32x128xf32>
    %c0_43 = arith.constant 0 : index
    %c0_44 = arith.constant 0 : index
    %96 = vector.load %arg14[%c0_43, %c0_44] : memref<1x128xf32, #tpu.memory_space<vmem>>, vector<1x128xf32>
    %97 = vector.broadcast %96 : vector<1x128xf32> to vector<32x128xf32>
    %98 = arith.mulf %95, %97 : vector<32x128xf32>
    %c0_45 = arith.constant 0 : index
    %c0_46 = arith.constant 0 : index
    %99 = vector.load %arg15[%c0_45, %c0_46] : memref<1x128xf32, #tpu.memory_space<vmem>>, vector<1x128xf32>
    %100 = vector.broadcast %99 : vector<1x128xf32> to vector<32x128xf32>
    %101 = arith.addf %98, %100 : vector<32x128xf32>
    %c0_47 = arith.constant 0 : index
    %c0_48 = arith.constant 0 : index
    %c0_49 = arith.constant 0 : index
    %102 = vector.load %arg2[%c0_47, %c0_48, %c0_49] : memref<2x16x128xbf16, #tpu.memory_space<vmem>>, vector<2x16x128xbf16>
    %103 = arith.extf %102 : vector<2x16x128xbf16> to vector<2x16x128xf32>
    %104 = vector.shape_cast %0 : vector<16x128xf32> to vector<1x16x128xf32>
    %105 = vector.broadcast %104 : vector<1x16x128xf32> to vector<2x16x128xf32>
    %106 = arith.addf %103, %105 : vector<2x16x128xf32>
    %107 = vector.shape_cast %106 : vector<2x16x128xf32> to vector<32x128xf32>
    %108 = arith.truncf %107 : vector<32x128xf32> to vector<32x128xbf16>
    %c0_50 = arith.constant 0 : index
    %c0_51 = arith.constant 0 : index
    %109 = vector.load %arg16[%c0_50, %c0_51] : memref<128x384xbf16, #tpu.memory_space<vmem>>, vector<128x384xbf16>
    %cst_52 = arith.constant dense<0.000000e+00> : vector<32x384xf32>
    %110 = tpu.matmul %108, %109, %cst_52 {dimension_numbers = #tpu.dot_dimension_numbers<[1], [0], [0], [1], [0, 0, 1, 1], [], []>} : vector<32x128xbf16>, vector<128x384xbf16>, vector<32x384xf32> -> vector<32x384xf32>
    %c0_53 = arith.constant 0 : index
    %c0_54 = arith.constant 0 : index
    %111 = vector.load %arg17[%c0_53, %c0_54] : memref<1x384xf32, #tpu.memory_space<vmem>>, vector<1x384xf32>
    %112 = vector.broadcast %111 : vector<1x384xf32> to vector<32x384xf32>
    %113 = arith.addf %110, %112 : vector<32x384xf32>
    %114 = vector.shape_cast %113 : vector<32x384xf32> to vector<2x16x384xf32>
    %115 = vector.extract_strided_slice %114 {offsets = [0, 0, 0], sizes = [2, 16, 128], strides = [1, 1, 1]} : vector<2x16x384xf32> to vector<2x16x128xf32>
    %116 = vector.extract_strided_slice %114 {offsets = [0, 0, 128], sizes = [2, 16, 128], strides = [1, 1, 1]} : vector<2x16x384xf32> to vector<2x16x128xf32>
    %117 = vector.extract_strided_slice %114 {offsets = [0, 0, 256], sizes = [2, 16, 128], strides = [1, 1, 1]} : vector<2x16x384xf32> to vector<2x16x128xf32>
    %118 = arith.truncf %115 : vector<2x16x128xf32> to vector<2x16x128xbf16>
    %119 = arith.truncf %116 : vector<2x16x128xf32> to vector<2x16x128xbf16>
    "tpu.trace_start"() <{level = 10 : i32, message = "bqd,bkd->bqk"}> : () -> ()
    %cst_55 = arith.constant dense<0.000000e+00> : vector<2x16x16xf32>
    %120 = tpu.matmul %118, %119, %cst_55 {dimension_numbers = #tpu.dot_dimension_numbers<[2], [2], [1], [1], [0, 0, 0, 1, 1, 1], [0], [0]>} : vector<2x16x128xbf16>, vector<2x16x128xbf16>, vector<2x16x16xf32> -> vector<2x16x16xf32>
    "tpu.trace_stop"() : () -> ()
    %cst_56 = arith.constant 1.250000e-01 : f32
    %121 = vector.broadcast %cst_56 : f32 to vector<2x16x16xf32>
    %122 = arith.mulf %120, %121 : vector<2x16x16xf32>
    %123 = tpu.iota {dimensions = array<i32: 1>} : vector<2x16x16xi32>
    %124 = tpu.iota {dimensions = array<i32: 2>} : vector<2x16x16xi32>
    %125 = arith.cmpi sgt, %124, %123 : vector<2x16x16xi32>
    %cst_57 = arith.constant -1.000000e+09 : f32
    %126 = vector.broadcast %cst_57 : f32 to vector<2x16x16xf32>
    %127 = arith.select %125, %126, %122 : vector<2x16x16xi1>, vector<2x16x16xf32>
    %cst_58 = arith.constant dense<0xFF800000> : vector<2x16xf32>
    %128 = vector.multi_reduction <maximumf>, %127, %cst_58 [2] : vector<2x16x16xf32> to vector<2x16xf32>
    %129 = vector.shape_cast %128 : vector<2x16xf32> to vector<2x16x1xf32>
    %130 = vector.broadcast %129 : vector<2x16x1xf32> to vector<2x16x16xf32>
    %131 = arith.subf %127, %130 : vector<2x16x16xf32>
    %132 = math.exp %131 : vector<2x16x16xf32>
    %cst_59 = arith.constant dense<0.000000e+00> : vector<2x16xf32>
    %133 = vector.multi_reduction <add>, %132, %cst_59 [2] : vector<2x16x16xf32> to vector<2x16xf32>
    %134 = vector.shape_cast %133 : vector<2x16xf32> to vector<2x16x1xf32>
    %135 = tpu.reciprocal %134 {approx = true} : vector<2x16x1xf32> -> vector<2x16x1xf32>
    %136 = vector.broadcast %135 : vector<2x16x1xf32> to vector<2x16x16xf32>
    %137 = arith.mulf %132, %136 : vector<2x16x16xf32>
    %138 = arith.truncf %137 : vector<2x16x16xf32> to vector<2x16x16xbf16>
    %139 = arith.truncf %117 : vector<2x16x128xf32> to vector<2x16x128xbf16>
    "tpu.trace_start"() <{level = 10 : i32, message = "bqk,bkd->bqd"}> : () -> ()
    %cst_60 = arith.constant dense<0.000000e+00> : vector<2x16x128xf32>
    %140 = tpu.matmul %138, %139, %cst_60 {dimension_numbers = #tpu.dot_dimension_numbers<[2], [1], [1], [2], [0, 0, 0, 1, 1, 2], [0], [0]>} : vector<2x16x16xbf16>, vector<2x16x128xbf16>, vector<2x16x128xf32> -> vector<2x16x128xf32>
    "tpu.trace_stop"() : () -> ()
    %141 = vector.shape_cast %140 : vector<2x16x128xf32> to vector<32x128xf32>
    %142 = arith.truncf %141 : vector<32x128xf32> to vector<32x128xbf16>
    %c0_61 = arith.constant 0 : index
    %c0_62 = arith.constant 0 : index
    %143 = vector.load %arg18[%c0_61, %c0_62] : memref<128x128xbf16, #tpu.memory_space<vmem>>, vector<128x128xbf16>
    %cst_63 = arith.constant dense<0.000000e+00> : vector<32x128xf32>
    %144 = tpu.matmul %142, %143, %cst_63 {dimension_numbers = #tpu.dot_dimension_numbers<[1], [0], [0], [1], [0, 0, 1, 1], [], []>} : vector<32x128xbf16>, vector<128x128xbf16>, vector<32x128xf32> -> vector<32x128xf32>
    %c0_64 = arith.constant 0 : index
    %c0_65 = arith.constant 0 : index
    %145 = vector.load %arg19[%c0_64, %c0_65] : memref<1x128xf32, #tpu.memory_space<vmem>>, vector<1x128xf32>
    %146 = vector.broadcast %145 : vector<1x128xf32> to vector<32x128xf32>
    %147 = arith.addf %144, %146 : vector<32x128xf32>
    %148 = arith.addf %107, %147 : vector<32x128xf32>
    %cst_66 = arith.constant dense<0.000000e+00> : vector<32xf32>
    %149 = vector.multi_reduction <add>, %148, %cst_66 [1] : vector<32x128xf32> to vector<32xf32>
    %150 = vector.shape_cast %149 : vector<32xf32> to vector<32x1xf32>
    %cst_67 = arith.constant 1.280000e+02 : f32
    %151 = vector.broadcast %cst_67 : f32 to vector<32x1xf32>
    %152 = arith.divf %150, %151 : vector<32x1xf32>
    %153 = vector.broadcast %152 : vector<32x1xf32> to vector<32x128xf32>
    %154 = arith.subf %148, %153 : vector<32x128xf32>
    %155 = arith.mulf %154, %154 : vector<32x128xf32>
    %cst_68 = arith.constant dense<0.000000e+00> : vector<32xf32>
    %156 = vector.multi_reduction <add>, %155, %cst_68 [1] : vector<32x128xf32> to vector<32xf32>
    %157 = vector.shape_cast %156 : vector<32xf32> to vector<32x1xf32>
    %cst_69 = arith.constant 1.280000e+02 : f32
    %158 = vector.broadcast %cst_69 : f32 to vector<32x1xf32>
    %159 = arith.divf %157, %158 : vector<32x1xf32>
    %cst_70 = arith.constant 9.99999974E-6 : f32
    %160 = vector.broadcast %cst_70 : f32 to vector<32x1xf32>
    %161 = arith.addf %159, %160 : vector<32x1xf32>
    %162 = math.rsqrt %161 : vector<32x1xf32>
    %163 = vector.broadcast %162 : vector<32x1xf32> to vector<32x128xf32>
    %164 = arith.mulf %154, %163 : vector<32x128xf32>
    %c0_71 = arith.constant 0 : index
    %c0_72 = arith.constant 0 : index
    %165 = vector.load %arg20[%c0_71, %c0_72] : memref<1x128xf32, #tpu.memory_space<vmem>>, vector<1x128xf32>
    %166 = vector.broadcast %165 : vector<1x128xf32> to vector<32x128xf32>
    %167 = arith.mulf %164, %166 : vector<32x128xf32>
    %c0_73 = arith.constant 0 : index
    %c0_74 = arith.constant 0 : index
    %168 = vector.load %arg21[%c0_73, %c0_74] : memref<1x128xf32, #tpu.memory_space<vmem>>, vector<1x128xf32>
    %169 = vector.broadcast %168 : vector<1x128xf32> to vector<32x128xf32>
    %170 = arith.addf %167, %169 : vector<32x128xf32>
    %171 = arith.truncf %170 : vector<32x128xf32> to vector<32x128xbf16>
    %c0_75 = arith.constant 0 : index
    %c0_76 = arith.constant 0 : index
    %172 = vector.load %arg22[%c0_75, %c0_76] : memref<128x128xbf16, #tpu.memory_space<vmem>>, vector<128x128xbf16>
    %cst_77 = arith.constant dense<0.000000e+00> : vector<32x128xf32>
    %173 = tpu.matmul %171, %172, %cst_77 {dimension_numbers = #tpu.dot_dimension_numbers<[1], [0], [0], [1], [0, 0, 1, 1], [], []>} : vector<32x128xbf16>, vector<128x128xbf16>, vector<32x128xf32> -> vector<32x128xf32>
    %c0_78 = arith.constant 0 : index
    %c0_79 = arith.constant 0 : index
    %174 = vector.load %arg23[%c0_78, %c0_79] : memref<1x128xf32, #tpu.memory_space<vmem>>, vector<1x128xf32>
    %175 = vector.broadcast %174 : vector<1x128xf32> to vector<32x128xf32>
    %176 = arith.addf %173, %175 : vector<32x128xf32>
    %177 = vector.shape_cast %176 : vector<32x128xf32> to vector<2x16x128xf32>
    %178 = arith.truncf %101 : vector<32x128xf32> to vector<32x128xbf16>
    %c0_80 = arith.constant 0 : index
    %c0_81 = arith.constant 0 : index
    %179 = vector.load %arg24[%c0_80, %c0_81] : memref<128x256xbf16, #tpu.memory_space<vmem>>, vector<128x256xbf16>
    %cst_82 = arith.constant dense<0.000000e+00> : vector<32x256xf32>
    %180 = tpu.matmul %178, %179, %cst_82 {dimension_numbers = #tpu.dot_dimension_numbers<[1], [0], [0], [1], [0, 0, 1, 1], [], []>} : vector<32x128xbf16>, vector<128x256xbf16>, vector<32x256xf32> -> vector<32x256xf32>
    %c0_83 = arith.constant 0 : index
    %c0_84 = arith.constant 0 : index
    %181 = vector.load %arg25[%c0_83, %c0_84] : memref<1x256xf32, #tpu.memory_space<vmem>>, vector<1x256xf32>
    %182 = vector.broadcast %181 : vector<1x256xf32> to vector<32x256xf32>
    %183 = arith.addf %180, %182 : vector<32x256xf32>
    %184 = vector.shape_cast %183 : vector<32x256xf32> to vector<2x16x256xf32>
    %185 = vector.extract_strided_slice %184 {offsets = [0, 0, 0], sizes = [2, 16, 128], strides = [1, 1, 1]} : vector<2x16x256xf32> to vector<2x16x128xf32>
    %186 = vector.extract_strided_slice %184 {offsets = [0, 0, 128], sizes = [2, 16, 128], strides = [1, 1, 1]} : vector<2x16x256xf32> to vector<2x16x128xf32>
    %187 = arith.truncf %177 : vector<2x16x128xf32> to vector<2x16x128xbf16>
    %188 = arith.truncf %185 : vector<2x16x128xf32> to vector<2x16x128xbf16>
    "tpu.trace_start"() <{level = 10 : i32, message = "bqd,bkd->bqk"}> : () -> ()
    %cst_85 = arith.constant dense<0.000000e+00> : vector<2x16x16xf32>
    %189 = tpu.matmul %187, %188, %cst_85 {dimension_numbers = #tpu.dot_dimension_numbers<[2], [2], [1], [1], [0, 0, 0, 1, 1, 1], [0], [0]>} : vector<2x16x128xbf16>, vector<2x16x128xbf16>, vector<2x16x16xf32> -> vector<2x16x16xf32>
    "tpu.trace_stop"() : () -> ()
    %cst_86 = arith.constant 1.250000e-01 : f32
    %190 = vector.broadcast %cst_86 : f32 to vector<2x16x16xf32>
    %191 = arith.mulf %189, %190 : vector<2x16x16xf32>
    %cst_87 = arith.constant dense<0xFF800000> : vector<2x16xf32>
    %192 = vector.multi_reduction <maximumf>, %191, %cst_87 [2] : vector<2x16x16xf32> to vector<2x16xf32>
    %193 = vector.shape_cast %192 : vector<2x16xf32> to vector<2x16x1xf32>
    %194 = vector.broadcast %193 : vector<2x16x1xf32> to vector<2x16x16xf32>
    %195 = arith.subf %191, %194 : vector<2x16x16xf32>
    %196 = math.exp %195 : vector<2x16x16xf32>
    %cst_88 = arith.constant dense<0.000000e+00> : vector<2x16xf32>
    %197 = vector.multi_reduction <add>, %196, %cst_88 [2] : vector<2x16x16xf32> to vector<2x16xf32>
    %198 = vector.shape_cast %197 : vector<2x16xf32> to vector<2x16x1xf32>
    %199 = tpu.reciprocal %198 {approx = true} : vector<2x16x1xf32> -> vector<2x16x1xf32>
    %200 = vector.broadcast %199 : vector<2x16x1xf32> to vector<2x16x16xf32>
    %201 = arith.mulf %196, %200 : vector<2x16x16xf32>
    %202 = arith.truncf %201 : vector<2x16x16xf32> to vector<2x16x16xbf16>
    %203 = arith.truncf %186 : vector<2x16x128xf32> to vector<2x16x128xbf16>
    "tpu.trace_start"() <{level = 10 : i32, message = "bqk,bkd->bqd"}> : () -> ()
    %cst_89 = arith.constant dense<0.000000e+00> : vector<2x16x128xf32>
    %204 = tpu.matmul %202, %203, %cst_89 {dimension_numbers = #tpu.dot_dimension_numbers<[2], [1], [1], [2], [0, 0, 0, 1, 1, 2], [0], [0]>} : vector<2x16x16xbf16>, vector<2x16x128xbf16>, vector<2x16x128xf32> -> vector<2x16x128xf32>
    "tpu.trace_stop"() : () -> ()
    %205 = vector.shape_cast %204 : vector<2x16x128xf32> to vector<32x128xf32>
    %206 = arith.truncf %205 : vector<32x128xf32> to vector<32x128xbf16>
    %c0_90 = arith.constant 0 : index
    %c0_91 = arith.constant 0 : index
    %207 = vector.load %arg26[%c0_90, %c0_91] : memref<128x128xbf16, #tpu.memory_space<vmem>>, vector<128x128xbf16>
    %cst_92 = arith.constant dense<0.000000e+00> : vector<32x128xf32>
    %208 = tpu.matmul %206, %207, %cst_92 {dimension_numbers = #tpu.dot_dimension_numbers<[1], [0], [0], [1], [0, 0, 1, 1], [], []>} : vector<32x128xbf16>, vector<128x128xbf16>, vector<32x128xf32> -> vector<32x128xf32>
    %c0_93 = arith.constant 0 : index
    %c0_94 = arith.constant 0 : index
    %209 = vector.load %arg27[%c0_93, %c0_94] : memref<1x128xf32, #tpu.memory_space<vmem>>, vector<1x128xf32>
    %210 = vector.broadcast %209 : vector<1x128xf32> to vector<32x128xf32>
    %211 = arith.addf %208, %210 : vector<32x128xf32>
    %212 = arith.addf %170, %211 : vector<32x128xf32>
    %cst_95 = arith.constant dense<0.000000e+00> : vector<32xf32>
    %213 = vector.multi_reduction <add>, %212, %cst_95 [1] : vector<32x128xf32> to vector<32xf32>
    %214 = vector.shape_cast %213 : vector<32xf32> to vector<32x1xf32>
    %cst_96 = arith.constant 1.280000e+02 : f32
    %215 = vector.broadcast %cst_96 : f32 to vector<32x1xf32>
    %216 = arith.divf %214, %215 : vector<32x1xf32>
    %217 = vector.broadcast %216 : vector<32x1xf32> to vector<32x128xf32>
    %218 = arith.subf %212, %217 : vector<32x128xf32>
    %219 = arith.mulf %218, %218 : vector<32x128xf32>
    %cst_97 = arith.constant dense<0.000000e+00> : vector<32xf32>
    %220 = vector.multi_reduction <add>, %219, %cst_97 [1] : vector<32x128xf32> to vector<32xf32>
    %221 = vector.shape_cast %220 : vector<32xf32> to vector<32x1xf32>
    %cst_98 = arith.constant 1.280000e+02 : f32
    %222 = vector.broadcast %cst_98 : f32 to vector<32x1xf32>
    %223 = arith.divf %221, %222 : vector<32x1xf32>
    %cst_99 = arith.constant 9.99999974E-6 : f32
    %224 = vector.broadcast %cst_99 : f32 to vector<32x1xf32>
    %225 = arith.addf %223, %224 : vector<32x1xf32>
    %226 = math.rsqrt %225 : vector<32x1xf32>
    %227 = vector.broadcast %226 : vector<32x1xf32> to vector<32x128xf32>
    %228 = arith.mulf %218, %227 : vector<32x128xf32>
    %c0_100 = arith.constant 0 : index
    %c0_101 = arith.constant 0 : index
    %229 = vector.load %arg28[%c0_100, %c0_101] : memref<1x128xf32, #tpu.memory_space<vmem>>, vector<1x128xf32>
    %230 = vector.broadcast %229 : vector<1x128xf32> to vector<32x128xf32>
    %231 = arith.mulf %228, %230 : vector<32x128xf32>
    %c0_102 = arith.constant 0 : index
    %c0_103 = arith.constant 0 : index
    %232 = vector.load %arg29[%c0_102, %c0_103] : memref<1x128xf32, #tpu.memory_space<vmem>>, vector<1x128xf32>
    %233 = vector.broadcast %232 : vector<1x128xf32> to vector<32x128xf32>
    %234 = arith.addf %231, %233 : vector<32x128xf32>
    %235 = arith.truncf %234 : vector<32x128xf32> to vector<32x128xbf16>
    %c0_104 = arith.constant 0 : index
    %c0_105 = arith.constant 0 : index
    %236 = vector.load %arg30[%c0_104, %c0_105] : memref<128x256xbf16, #tpu.memory_space<vmem>>, vector<128x256xbf16>
    %cst_106 = arith.constant dense<0.000000e+00> : vector<32x256xf32>
    %237 = tpu.matmul %235, %236, %cst_106 {dimension_numbers = #tpu.dot_dimension_numbers<[1], [0], [0], [1], [0, 0, 1, 1], [], []>} : vector<32x128xbf16>, vector<128x256xbf16>, vector<32x256xf32> -> vector<32x256xf32>
    %c0_107 = arith.constant 0 : index
    %c0_108 = arith.constant 0 : index
    %238 = vector.load %arg31[%c0_107, %c0_108] : memref<1x256xf32, #tpu.memory_space<vmem>>, vector<1x256xf32>
    %239 = vector.broadcast %238 : vector<1x256xf32> to vector<32x256xf32>
    %240 = arith.addf %237, %239 : vector<32x256xf32>
    %cst_109 = arith.constant 0.000000e+00 : f32
    %241 = vector.broadcast %cst_109 : f32 to vector<32x256xf32>
    %242 = arith.maximumf %240, %241 : vector<32x256xf32>
    %243 = arith.truncf %242 : vector<32x256xf32> to vector<32x256xbf16>
    %c0_110 = arith.constant 0 : index
    %c0_111 = arith.constant 0 : index
    %244 = vector.load %arg32[%c0_110, %c0_111] : memref<256x128xbf16, #tpu.memory_space<vmem>>, vector<256x128xbf16>
    %cst_112 = arith.constant dense<0.000000e+00> : vector<32x128xf32>
    %245 = tpu.matmul %243, %244, %cst_112 {dimension_numbers = #tpu.dot_dimension_numbers<[1], [0], [0], [1], [0, 0, 1, 1], [], []>} : vector<32x256xbf16>, vector<256x128xbf16>, vector<32x128xf32> -> vector<32x128xf32>
    %c0_113 = arith.constant 0 : index
    %c0_114 = arith.constant 0 : index
    %246 = vector.load %arg33[%c0_113, %c0_114] : memref<1x128xf32, #tpu.memory_space<vmem>>, vector<1x128xf32>
    %247 = vector.broadcast %246 : vector<1x128xf32> to vector<32x128xf32>
    %248 = arith.addf %245, %247 : vector<32x128xf32>
    %249 = arith.addf %234, %248 : vector<32x128xf32>
    %cst_115 = arith.constant dense<0.000000e+00> : vector<32xf32>
    %250 = vector.multi_reduction <add>, %249, %cst_115 [1] : vector<32x128xf32> to vector<32xf32>
    %251 = vector.shape_cast %250 : vector<32xf32> to vector<32x1xf32>
    %cst_116 = arith.constant 1.280000e+02 : f32
    %252 = vector.broadcast %cst_116 : f32 to vector<32x1xf32>
    %253 = arith.divf %251, %252 : vector<32x1xf32>
    %254 = vector.broadcast %253 : vector<32x1xf32> to vector<32x128xf32>
    %255 = arith.subf %249, %254 : vector<32x128xf32>
    %256 = arith.mulf %255, %255 : vector<32x128xf32>
    %cst_117 = arith.constant dense<0.000000e+00> : vector<32xf32>
    %257 = vector.multi_reduction <add>, %256, %cst_117 [1] : vector<32x128xf32> to vector<32xf32>
    %258 = vector.shape_cast %257 : vector<32xf32> to vector<32x1xf32>
    %cst_118 = arith.constant 1.280000e+02 : f32
    %259 = vector.broadcast %cst_118 : f32 to vector<32x1xf32>
    %260 = arith.divf %258, %259 : vector<32x1xf32>
    %cst_119 = arith.constant 9.99999974E-6 : f32
    %261 = vector.broadcast %cst_119 : f32 to vector<32x1xf32>
    %262 = arith.addf %260, %261 : vector<32x1xf32>
    %263 = math.rsqrt %262 : vector<32x1xf32>
    %264 = vector.broadcast %263 : vector<32x1xf32> to vector<32x128xf32>
    %265 = arith.mulf %255, %264 : vector<32x128xf32>
    %c0_120 = arith.constant 0 : index
    %c0_121 = arith.constant 0 : index
    %266 = vector.load %arg34[%c0_120, %c0_121] : memref<1x128xf32, #tpu.memory_space<vmem>>, vector<1x128xf32>
    %267 = vector.broadcast %266 : vector<1x128xf32> to vector<32x128xf32>
    %268 = arith.mulf %265, %267 : vector<32x128xf32>
    %c0_122 = arith.constant 0 : index
    %c0_123 = arith.constant 0 : index
    %269 = vector.load %arg35[%c0_122, %c0_123] : memref<1x128xf32, #tpu.memory_space<vmem>>, vector<1x128xf32>
    %270 = vector.broadcast %269 : vector<1x128xf32> to vector<32x128xf32>
    %271 = arith.addf %268, %270 : vector<32x128xf32>
    %272 = arith.truncf %271 : vector<32x128xf32> to vector<32x128xbf16>
    %c0_124 = arith.constant 0 : index
    %c0_125 = arith.constant 0 : index
    %273 = vector.load %arg36[%c0_124, %c0_125] : memref<32x128xbf16, #tpu.memory_space<vmem>>, vector<32x128xbf16>
    tpu.vector_store %arg36[%c0_124, %c0_125], %272 {strides = array<i32>} : memref<32x128xbf16, #tpu.memory_space<vmem>>, vector<32x128xbf16>,
    return
  }
  func.func @transform_0(%arg0: i32) -> (i32, i32, i32) {
    %c0_i32 = arith.constant 0 : i32
    %c0_i32_0 = arith.constant 0 : i32
    %c0_i32_1 = arith.constant 0 : i32
    return %arg0, %c0_i32, %c0_i32_0 : i32, i32, i32
  }
  func.func @transform_1(%arg0: i32) -> (i32, i32, i32) {
    %c0_i32 = arith.constant 0 : i32
    %c0_i32_0 = arith.constant 0 : i32
    %c0_i32_1 = arith.constant 0 : i32
    return %arg0, %c0_i32, %c0_i32_0 : i32, i32, i32
  }
  func.func @transform_2(%arg0: i32) -> (i32, i32) {
    %c0_i32 = arith.constant 0 : i32
    %c0_i32_0 = arith.constant 0 : i32
    %c0_i32_1 = arith.constant 0 : i32
    return %c0_i32, %c0_i32_0 : i32, i32
  }
  func.func @transform_3(%arg0: i32) -> (i32, i32) {
    %c0_i32 = arith.constant 0 : i32
    %c0_i32_0 = arith.constant 0 : i32
    %c0_i32_1 = arith.constant 0 : i32
    return %c0_i32, %c0_i32_0 : i32, i32
  }
  func.func @transform_4(%arg0: i32) -> (i32, i32) {
    %c0_i32 = arith.constant 0 : i32
    %c0_i32_0 = arith.constant 0 : i32
    %c0_i32_1 = arith.constant 0 : i32
    return %c0_i32, %c0_i32_0 : i32, i32
  }
  func.func @transform_5(%arg0: i32) -> (i32, i32) {
    %c0_i32 = arith.constant 0 : i32
    %c0_i32_0 = arith.constant 0 : i32
    %c0_i32_1 = arith.constant 0 : i32
    return %c0_i32, %c0_i32_0 : i32, i32
  }
  func.func @transform_6(%arg0: i32) -> (i32, i32) {
    %c0_i32 = arith.constant 0 : i32
    %c0_i32_0 = arith.constant 0 : i32
    %c0_i32_1 = arith.constant 0 : i32
    return %c0_i32, %c0_i32_0 : i32, i32
  }
  func.func @transform_7(%arg0: i32) -> (i32, i32) {
    %c0_i32 = arith.constant 0 : i32
    %c0_i32_0 = arith.constant 0 : i32
    %c0_i32_1 = arith.constant 0 : i32
    return %c0_i32, %c0_i32_0 : i32, i32
  }
  func.func @transform_8(%arg0: i32) -> (i32, i32) {
    %c0_i32 = arith.constant 0 : i32
    %c0_i32_0 = arith.constant 0 : i32
    %c0_i32_1 = arith.constant 0 : i32
    return %c0_i32, %c0_i32_0 : i32, i32
  }
  func.func @transform_9(%arg0: i32) -> (i32, i32) {
    %c0_i32 = arith.constant 0 : i32
    %c0_i32_0 = arith.constant 0 : i32
    %c0_i32_1 = arith.constant 0 : i32
    return %c0_i32, %c0_i32_0 : i32, i32
  }
  func.func @transform_10(%arg0: i32) -> (i32, i32) {
    %c0_i32 = arith.constant 0 : i32
    %c0_i32_0 = arith.constant 0 : i32
    %c0_i32_1 = arith.constant 0 : i32
    return %c0_i32, %c0_i32_0 : i32, i32
  }
  func.func @transform_11(%arg0: i32) -> (i32, i32) {
    %c0_i32 = arith.constant 0 : i32
    %c0_i32_0 = arith.constant 0 : i32
    %c0_i32_1 = arith.constant 0 : i32
    return %c0_i32, %c0_i32_0 : i32, i32
  }
  func.func @transform_12(%arg0: i32) -> (i32, i32) {
    %c0_i32 = arith.constant 0 : i32
    %c0_i32_0 = arith.constant 0 : i32
    %c0_i32_1 = arith.constant 0 : i32
    return %c0_i32, %c0_i32_0 : i32, i32
  }
  func.func @transform_13(%arg0: i32) -> (i32, i32) {
    %c0_i32 = arith.constant 0 : i32
    %c0_i32_0 = arith.constant 0 : i32
    %c0_i32_1 = arith.constant 0 : i32
    return %c0_i32, %c0_i32_0 : i32, i32
  }
  func.func @transform_14(%arg0: i32) -> (i32, i32) {
    %c0_i32 = arith.constant 0 : i32
    %c0_i32_0 = arith.constant 0 : i32
    %c0_i32_1 = arith.constant 0 : i32
    return %c0_i32, %c0_i32_0 : i32, i32
  }
  func.func @transform_15(%arg0: i32) -> (i32, i32) {
    %c0_i32 = arith.constant 0 : i32
    %c0_i32_0 = arith.constant 0 : i32
    %c0_i32_1 = arith.constant 0 : i32
    return %c0_i32, %c0_i32_0 : i32, i32
  }
  func.func @transform_16(%arg0: i32) -> (i32, i32) {
    %c0_i32 = arith.constant 0 : i32
    %c0_i32_0 = arith.constant 0 : i32
    %c0_i32_1 = arith.constant 0 : i32
    return %c0_i32, %c0_i32_0 : i32, i32
  }
  func.func @transform_17(%arg0: i32) -> (i32, i32) {
    %c0_i32 = arith.constant 0 : i32
    %c0_i32_0 = arith.constant 0 : i32
    %c0_i32_1 = arith.constant 0 : i32
    return %c0_i32, %c0_i32_0 : i32, i32
  }
  func.func @transform_18(%arg0: i32) -> (i32, i32) {
    %c0_i32 = arith.constant 0 : i32
    %c0_i32_0 = arith.constant 0 : i32
    %c0_i32_1 = arith.constant 0 : i32
    return %c0_i32, %c0_i32_0 : i32, i32
  }
  func.func @transform_19(%arg0: i32) -> (i32, i32) {
    %c0_i32 = arith.constant 0 : i32
    %c0_i32_0 = arith.constant 0 : i32
    %c0_i32_1 = arith.constant 0 : i32
    return %c0_i32, %c0_i32_0 : i32, i32
  }
  func.func @transform_20(%arg0: i32) -> (i32, i32) {
    %c0_i32 = arith.constant 0 : i32
    %c0_i32_0 = arith.constant 0 : i32
    %c0_i32_1 = arith.constant 0 : i32
    return %c0_i32, %c0_i32_0 : i32, i32
  }
  func.func @transform_21(%arg0: i32) -> (i32, i32) {
    %c0_i32 = arith.constant 0 : i32
    %c0_i32_0 = arith.constant 0 : i32
    %c0_i32_1 = arith.constant 0 : i32
    return %c0_i32, %c0_i32_0 : i32, i32
  }
  func.func @transform_22(%arg0: i32) -> (i32, i32) {
    %c0_i32 = arith.constant 0 : i32
    %c0_i32_0 = arith.constant 0 : i32
    %c0_i32_1 = arith.constant 0 : i32
    return %c0_i32, %c0_i32_0 : i32, i32
  }
  func.func @transform_23(%arg0: i32) -> (i32, i32) {
    %c0_i32 = arith.constant 0 : i32
    %c0_i32_0 = arith.constant 0 : i32
    %c0_i32_1 = arith.constant 0 : i32
    return %c0_i32, %c0_i32_0 : i32, i32
  }
  func.func @transform_24(%arg0: i32) -> (i32, i32) {
    %c0_i32 = arith.constant 0 : i32
    %c0_i32_0 = arith.constant 0 : i32
    %c0_i32_1 = arith.constant 0 : i32
    return %c0_i32, %c0_i32_0 : i32, i32
  }
  func.func @transform_25(%arg0: i32) -> (i32, i32) {
    %c0_i32 = arith.constant 0 : i32
    %c0_i32_0 = arith.constant 0 : i32
    %c0_i32_1 = arith.constant 0 : i32
    return %c0_i32, %c0_i32_0 : i32, i32
  }
  func.func @transform_26(%arg0: i32) -> (i32, i32) {
    %c0_i32 = arith.constant 0 : i32
    %c0_i32_0 = arith.constant 0 : i32
    %c0_i32_1 = arith.constant 0 : i32
    return %c0_i32, %c0_i32_0 : i32, i32
  }
  func.func @transform_27(%arg0: i32) -> (i32, i32) {
    %c0_i32 = arith.constant 0 : i32
    %c0_i32_0 = arith.constant 0 : i32
    %c0_i32_1 = arith.constant 0 : i32
    return %c0_i32, %c0_i32_0 : i32, i32
  }
  func.func @transform_28(%arg0: i32) -> (i32, i32) {
    %c0_i32 = arith.constant 0 : i32
    %c0_i32_0 = arith.constant 0 : i32
    %c0_i32_1 = arith.constant 0 : i32
    return %c0_i32, %c0_i32_0 : i32, i32
  }
  func.func @transform_29(%arg0: i32) -> (i32, i32) {
    %c0_i32 = arith.constant 0 : i32
    %c0_i32_0 = arith.constant 0 : i32
    %c0_i32_1 = arith.constant 0 : i32
    return %c0_i32, %c0_i32_0 : i32, i32
  }
  func.func @transform_30(%arg0: i32) -> (i32, i32) {
    %c0_i32 = arith.constant 0 : i32
    %c0_i32_0 = arith.constant 0 : i32
    %c0_i32_1 = arith.constant 0 : i32
    return %c0_i32, %c0_i32_0 : i32, i32
  }
  func.func @transform_31(%arg0: i32) -> (i32, i32) {
    %c0_i32 = arith.constant 0 : i32
    %c0_i32_0 = arith.constant 0 : i32
    %c0_i32_1 = arith.constant 0 : i32
    return %c0_i32, %c0_i32_0 : i32, i32
  }
  func.func @transform_32(%arg0: i32) -> (i32, i32) {
    %c0_i32 = arith.constant 0 : i32
    %c0_i32_0 = arith.constant 0 : i32
    %c0_i32_1 = arith.constant 0 : i32
    return %c0_i32, %c0_i32_0 : i32, i32
  }
  func.func @transform_33(%arg0: i32) -> (i32, i32) {
    %c0_i32 = arith.constant 0 : i32
    %c0_i32_0 = arith.constant 0 : i32
    %c0_i32_1 = arith.constant 0 : i32
    return %c0_i32, %c0_i32_0 : i32, i32
  }
  func.func @transform_34(%arg0: i32) -> (i32, i32) {
    %c0_i32 = arith.constant 0 : i32
    %c0_i32_0 = arith.constant 0 : i32
    %c0_i32_1 = arith.constant 0 : i32
    return %c0_i32, %c0_i32_0 : i32, i32
  }
  func.func @transform_35(%arg0: i32) -> (i32, i32) {
    %c0_i32 = arith.constant 0 : i32
    %c0_i32_0 = arith.constant 0 : i32
    return %arg0, %c0_i32 : i32, i32
  }
}

module attributes {stable_mosaic.version = 11 : i64} {
  func.func @_generator_loss_kernel(%arg0: i32, %arg1: i32, %arg2: memref<32x128xbf16, #tpu.memory_space<vmem>>, %arg3: memref<128x512xbf16, #tpu.memory_space<vmem>>, %arg4: memref<1x512xf32, #tpu.memory_space<vmem>>, %arg5: memref<32x1xi32, #tpu.memory_space<vmem>>, %arg6: memref<32x1xf32, #tpu.memory_space<vmem>>, %arg7: memref<32x1xf32, #tpu.memory_space<vmem>>, %arg8: memref<32x1xf32, #tpu.memory_space<vmem>>, %arg9: memref<32x1xf32, #tpu.memory_space<vmem>>) attributes {dimension_semantics = [#tpu.dimension_semantics<parallel>, #tpu.dimension_semantics<arbitrary>], iteration_bounds = array<i64: 2, 1>, scalar_prefetch = 0 : i64, scratch_operands = 3 : i64, tpu.core_type = #tpu.core_type<tc>, window_params = [{transform_indices = @transform_0, window_bounds = array<i64: 32, 128>}, {transform_indices = @transform_1, window_bounds = array<i64: 128, 512>}, {transform_indices = @transform_2, window_bounds = array<i64: 1, 512>}, {transform_indices = @transform_3, window_bounds = array<i64: 32, 1>}, {transform_indices = @transform_4, window_bounds = array<i64: 32, 1>}]} {
    %c0_i32 = arith.constant 0 : i32
    %0 = arith.cmpi eq, %arg1, %c0_i32 : i32
    %1 = arith.extui %0 : i1 to i32
    %c0_i32_0 = arith.constant 0 : i32
    %2 = arith.cmpi ne, %1, %c0_i32_0 : i32
    scf.if %2 {
      %cst_29 = arith.constant 0xFF800000 : f32
      %45 = vector.broadcast %cst_29 : f32 to vector<32x1xf32>
      %c0_30 = arith.constant 0 : index
      %c0_31 = arith.constant 0 : index
      %46 = vector.load %arg7[%c0_30, %c0_31] : memref<32x1xf32, #tpu.memory_space<vmem>>, vector<32x1xf32>
      tpu.vector_store %arg7[%c0_30, %c0_31], %45 {strides = array<i32>} : memref<32x1xf32, #tpu.memory_space<vmem>>, vector<32x1xf32>,
      %cst_32 = arith.constant 0.000000e+00 : f32
      %47 = vector.broadcast %cst_32 : f32 to vector<32x1xf32>
      %c0_33 = arith.constant 0 : index
      %c0_34 = arith.constant 0 : index
      %48 = vector.load %arg8[%c0_33, %c0_34] : memref<32x1xf32, #tpu.memory_space<vmem>>, vector<32x1xf32>
      tpu.vector_store %arg8[%c0_33, %c0_34], %47 {strides = array<i32>} : memref<32x1xf32, #tpu.memory_space<vmem>>, vector<32x1xf32>,
      %cst_35 = arith.constant 0.000000e+00 : f32
      %49 = vector.broadcast %cst_35 : f32 to vector<32x1xf32>
      %c0_36 = arith.constant 0 : index
      %c0_37 = arith.constant 0 : index
      %50 = vector.load %arg9[%c0_36, %c0_37] : memref<32x1xf32, #tpu.memory_space<vmem>>, vector<32x1xf32>
      tpu.vector_store %arg9[%c0_36, %c0_37], %49 {strides = array<i32>} : memref<32x1xf32, #tpu.memory_space<vmem>>, vector<32x1xf32>,
    } else {
    }
    %c0 = arith.constant 0 : index
    %c0_1 = arith.constant 0 : index
    %3 = vector.load %arg2[%c0, %c0_1] : memref<32x128xbf16, #tpu.memory_space<vmem>>, vector<32x128xbf16>
    %c0_2 = arith.constant 0 : index
    %c0_3 = arith.constant 0 : index
    %4 = vector.load %arg3[%c0_2, %c0_3] : memref<128x512xbf16, #tpu.memory_space<vmem>>, vector<128x512xbf16>
    %cst = arith.constant dense<0.000000e+00> : vector<32x512xf32>
    %5 = tpu.matmul %3, %4, %cst {dimension_numbers = #tpu.dot_dimension_numbers<[1], [0], [0], [1], [0, 0, 1, 1], [], []>} : vector<32x128xbf16>, vector<128x512xbf16>, vector<32x512xf32> -> vector<32x512xf32>
    %c0_4 = arith.constant 0 : index
    %c0_5 = arith.constant 0 : index
    %6 = vector.load %arg4[%c0_4, %c0_5] : memref<1x512xf32, #tpu.memory_space<vmem>>, vector<1x512xf32>
    %7 = vector.broadcast %6 : vector<1x512xf32> to vector<32x512xf32>
    %8 = arith.addf %5, %7 : vector<32x512xf32>
    %c0_6 = arith.constant 0 : index
    %c0_7 = arith.constant 0 : index
    %9 = vector.load %arg7[%c0_6, %c0_7] : memref<32x1xf32, #tpu.memory_space<vmem>>, vector<32x1xf32>
    %cst_8 = arith.constant dense<0xFF800000> : vector<32xf32>
    %10 = vector.multi_reduction <maximumf>, %8, %cst_8 [1] : vector<32x512xf32> to vector<32xf32>
    %11 = vector.shape_cast %10 : vector<32xf32> to vector<32x1xf32>
    %12 = arith.maximumf %9, %11 : vector<32x1xf32>
    %c0_9 = arith.constant 0 : index
    %c0_10 = arith.constant 0 : index
    %13 = vector.load %arg7[%c0_9, %c0_10] : memref<32x1xf32, #tpu.memory_space<vmem>>, vector<32x1xf32>
    %14 = arith.subf %13, %12 : vector<32x1xf32>
    %15 = math.exp %14 : vector<32x1xf32>
    %c0_11 = arith.constant 0 : index
    %c0_12 = arith.constant 0 : index
    %16 = vector.load %arg8[%c0_11, %c0_12] : memref<32x1xf32, #tpu.memory_space<vmem>>, vector<32x1xf32>
    %17 = arith.mulf %15, %16 : vector<32x1xf32>
    %18 = vector.broadcast %12 : vector<32x1xf32> to vector<32x512xf32>
    %19 = arith.subf %8, %18 : vector<32x512xf32>
    %20 = math.exp %19 : vector<32x512xf32>
    %cst_13 = arith.constant dense<0.000000e+00> : vector<32xf32>
    %21 = vector.multi_reduction <add>, %20, %cst_13 [1] : vector<32x512xf32> to vector<32xf32>
    %22 = vector.shape_cast %21 : vector<32xf32> to vector<32x1xf32>
    %23 = arith.addf %17, %22 : vector<32x1xf32>
    %c0_14 = arith.constant 0 : index
    %c0_15 = arith.constant 0 : index
    %24 = vector.load %arg8[%c0_14, %c0_15] : memref<32x1xf32, #tpu.memory_space<vmem>>, vector<32x1xf32>
    tpu.vector_store %arg8[%c0_14, %c0_15], %23 {strides = array<i32>} : memref<32x1xf32, #tpu.memory_space<vmem>>, vector<32x1xf32>,
    %c0_16 = arith.constant 0 : index
    %c0_17 = arith.constant 0 : index
    %25 = vector.load %arg7[%c0_16, %c0_17] : memref<32x1xf32, #tpu.memory_space<vmem>>, vector<32x1xf32>
    tpu.vector_store %arg7[%c0_16, %c0_17], %12 {strides = array<i32>} : memref<32x1xf32, #tpu.memory_space<vmem>>, vector<32x1xf32>,
    %c512_i32 = arith.constant 512 : i32
    %26 = arith.muli %arg1, %c512_i32 : i32
    %27 = tpu.iota {dimensions = array<i32: 1>} : vector<32x512xi32>
    %28 = vector.broadcast %26 : i32 to vector<32x512xi32>
    %29 = arith.addi %28, %27 : vector<32x512xi32>
    %c0_18 = arith.constant 0 : index
    %c0_19 = arith.constant 0 : index
    %30 = vector.load %arg5[%c0_18, %c0_19] : memref<32x1xi32, #tpu.memory_space<vmem>>, vector<32x1xi32>
    %31 = vector.broadcast %30 : vector<32x1xi32> to vector<32x512xi32>
    %32 = arith.cmpi eq, %29, %31 : vector<32x512xi32>
    %cst_20 = arith.constant 0.899999976 : f32
    %cst_21 = arith.constant 1.95694724E-4 : f32
    %33 = vector.broadcast %cst_20 : f32 to vector<32x512xf32>
    %34 = vector.broadcast %cst_21 : f32 to vector<32x512xf32>
    %35 = arith.select %32, %33, %34 : vector<32x512xi1>, vector<32x512xf32>
    %c0_22 = arith.constant 0 : index
    %c0_23 = arith.constant 0 : index
    %36 = vector.load %arg9[%c0_22, %c0_23] : memref<32x1xf32, #tpu.memory_space<vmem>>, vector<32x1xf32>
    %37 = arith.mulf %8, %35 : vector<32x512xf32>
    %cst_24 = arith.constant dense<0.000000e+00> : vector<32xf32>
    %38 = vector.multi_reduction <add>, %37, %cst_24 [1] : vector<32x512xf32> to vector<32xf32>
    %39 = vector.shape_cast %38 : vector<32xf32> to vector<32x1xf32>
    %40 = arith.addf %36, %39 : vector<32x1xf32>
    %c0_25 = arith.constant 0 : index
    %c0_26 = arith.constant 0 : index
    %41 = vector.load %arg9[%c0_25, %c0_26] : memref<32x1xf32, #tpu.memory_space<vmem>>, vector<32x1xf32>
    tpu.vector_store %arg9[%c0_25, %c0_26], %40 {strides = array<i32>} : memref<32x1xf32, #tpu.memory_space<vmem>>, vector<32x1xf32>,
    %c0_i32_27 = arith.constant 0 : i32
    %42 = arith.cmpi eq, %arg1, %c0_i32_27 : i32
    %43 = arith.extui %42 : i1 to i32
    %c0_i32_28 = arith.constant 0 : i32
    %44 = arith.cmpi ne, %43, %c0_i32_28 : i32
    scf.if %44 {
      %c0_29 = arith.constant 0 : index
      %c0_30 = arith.constant 0 : index
      %45 = vector.load %arg7[%c0_29, %c0_30] : memref<32x1xf32, #tpu.memory_space<vmem>>, vector<32x1xf32>
      %c0_31 = arith.constant 0 : index
      %c0_32 = arith.constant 0 : index
      %46 = vector.load %arg8[%c0_31, %c0_32] : memref<32x1xf32, #tpu.memory_space<vmem>>, vector<32x1xf32>
      %47 = math.log %46 : vector<32x1xf32>
      %48 = arith.addf %45, %47 : vector<32x1xf32>
      %c0_33 = arith.constant 0 : index
      %c0_34 = arith.constant 0 : index
      %49 = vector.load %arg9[%c0_33, %c0_34] : memref<32x1xf32, #tpu.memory_space<vmem>>, vector<32x1xf32>
      %cst_35 = arith.constant -0.948719918 : f32
      %50 = vector.broadcast %cst_35 : f32 to vector<32x1xf32>
      %51 = arith.subf %50, %49 : vector<32x1xf32>
      %cst_36 = arith.constant 1.000000e+00 : f32
      %52 = vector.broadcast %cst_36 : f32 to vector<32x1xf32>
      %53 = arith.mulf %52, %48 : vector<32x1xf32>
      %54 = arith.addf %51, %53 : vector<32x1xf32>
      %c0_37 = arith.constant 0 : index
      %c0_38 = arith.constant 0 : index
      %55 = vector.load %arg6[%c0_37, %c0_38] : memref<32x1xf32, #tpu.memory_space<vmem>>, vector<32x1xf32>
      tpu.vector_store %arg6[%c0_37, %c0_38], %54 {strides = array<i32>} : memref<32x1xf32, #tpu.memory_space<vmem>>, vector<32x1xf32>,
    } else {
    }
    return
  }
  func.func @transform_0(%arg0: i32, %arg1: i32) -> (i32, i32) {
    %c0_i32 = arith.constant 0 : i32
    %c0_i32_0 = arith.constant 0 : i32
    return %arg0, %c0_i32 : i32, i32
  }
  func.func @transform_1(%arg0: i32, %arg1: i32) -> (i32, i32) {
    %c0_i32 = arith.constant 0 : i32
    %c0_i32_0 = arith.constant 0 : i32
    return %c0_i32, %arg1 : i32, i32
  }
  func.func @transform_2(%arg0: i32, %arg1: i32) -> (i32, i32) {
    %c0_i32 = arith.constant 0 : i32
    %c0_i32_0 = arith.constant 0 : i32
    return %c0_i32, %arg1 : i32, i32
  }
  func.func @transform_3(%arg0: i32, %arg1: i32) -> (i32, i32) {
    %c0_i32 = arith.constant 0 : i32
    %c0_i32_0 = arith.constant 0 : i32
    return %arg0, %c0_i32 : i32, i32
  }
  func.func @transform_4(%arg0: i32, %arg1: i32) -> (i32, i32) {
    %c0_i32 = arith.constant 0 : i32
    %c0_i32_0 = arith.constant 0 : i32
    return %arg0, %c0_i32 : i32, i32
  }
}

</mosaic_0001>

<llo_original>
// kernel: transformer_forward.3
$region0: #{transformer_forward.3}
  #allocation0 [shape = 'u32[]', space=smem, size = 0x4, offset = 0x4, fixed_abs, tag = 'smem constant byte address 0x4 - core index']
  #allocation1 [shape = 'u32[144,128]{1,0:T(1,128)}', space=vmem, size = 0x12000, scoped, tag = 'internal scratch']
  #allocation2 [shape = 'f32[32,1]{1,0:T(8,128)}', space=vmem, size = 0x4000, scoped, tag = 'scratch operand']
  #allocation3 [shape = 'f32[32,1]{1,0:T(8,128)}', space=vmem, size = 0x4000, scoped, tag = 'scratch operand']
  #allocation4 [shape = 'f32[32,1]{1,0:T(8,128)}', space=vmem, size = 0x4000, scoped, tag = 'scratch operand']
  %s0 = inlined_call_operand.vmem [shape: bf16[64,128], index: 0, kind: input, shape index: {}]
  %s1 = inlined_call_operand.vmem [shape: bf16[128,512], index: 1, kind: input, shape index: {}]
  %s2 = inlined_call_operand.vmem [shape: f32[1,512], index: 2, kind: input, shape index: {}]
  %s3 = inlined_call_operand.vmem [shape: s32[64,1], index: 3, kind: input, shape index: {}]
  %s4 = inlined_call_operand.vmem [shape: f32[64,1], index: 4, kind: output, shape index: {}]
  %s5 = sld [smem:[#allocation0]]
  $region57: #{transformer_forward.3} parent=0
    _
  %s7 = ssub.s32 1, %s5
  %s8 = scalar_select 0, %s7, %s5
  loop: start=0, step=1, limit=4
  $region2: #{transformer_forward.3} parent=0 // loop_pre_header
    _
  $region3: #{transformer_forward.3} parent=0 // loop_header
    %s10 = sphi 0, %s14
    %p11 = scmp.ge.s32.totalorder %s10, 4
    %s17 = sphi 0, %s29
    %s18 = sphi 0, %s25
    %s19 = sphi 0, %s17
    %s20 = sphi 0, %s18
    %s21 = sphi 0, %s19
    %s22 = sphi 0, %s20
    %s32 = sphi 0, %s34
    %s35 = sphi 0, %s32
    %s36 = sphi 0, %s35
    %s52 = sphi 0, %s36
    %s58 = sphi 0, %s60
    %s61 = sphi 0, %s58
    %s62 = sphi 0, %s61
    %s78 = sphi 0, %s62
    %s84 = sphi 0, %s86
    %s87 = sphi 0, %s84
    %s88 = sphi 0, %s87
    %s104 = sphi 0, %s88
    %s110 = sphi 0, %s112
    %s113 = sphi 0, %s110
    %s114 = sphi 0, %s113
    %s130 = sphi 0, %s114
    %s136 = sphi 0, %s138
    %s139 = sphi 0, %s136
    %s140 = sphi 0, %s139
    %s156 = sphi 0, %s140
  $region4: #{transformer_forward.3} parent=0 // loop_header_branch
    %13 = sbr.rel (%p11) target = $region8
  $region5: #{transformer_forward.3} parent=0 // loop_body
    %s15 = ssub.s32 %s10, 1
    %s16 = ssub.s32 %s10, 2
    %s23 = sadd.s32 1, %s18
    %p24 = scmp.ge.s32.totalorder %s23, 1
    %s25 = scalar_select %p24, 0, %s23
    %s26 = sadd.s32 1, %s17
    %s27 = scalar_select %p24, %s26, %s17
    %p28 = scmp.ge.s32.totalorder %s27, 2
    %s29 = scalar_select %p28, 0, %s27
    %s30 = ssub.s32 %s17, %s29
    %p31 = scmp.eq.s32.totalorder %s30, 0
    %s33 = sadd.s32 %s32, 1
    %s34 = scalar_select %p31, %s32, %s33
    %p37 = pneg %p31
    %p38 = scmp.eq.s32.totalorder %s10, 1
    %p39 = por %p37, %p38
    %p40 = scmp.ne.s32.totalorder %s32, %s35
    %p41 = scmp.eq.s32.totalorder %s10, 0
    %p42 = por %p40, %p41
    %p43 = scmp.ne.s32.totalorder %s32, %s35
    %p44 = scmp.eq.s32.totalorder %s15, 1
    %p45 = por %p43, %p44
    %p46 = scmp.ne.s32.totalorder %s35, %s36
    %p47 = scmp.eq.s32.totalorder %s15, 0
    %p48 = por %p46, %p47
    %p49 = scmp.ne.s32.totalorder %s35, %s36
    %p50 = scmp.eq.s32.totalorder %s16, 1
    %p51 = por %p49, %p50
    %p53 = scmp.ne.s32.totalorder %s36, %s52
    %p54 = scmp.eq.s32.totalorder %s16, 0
    %p55 = por %p53, %p54
    %s56 = ssub.s32 %s18, %s25
    %p57 = scmp.eq.s32.totalorder %s56, 0
    %s59 = sadd.s32 %s58, 1
    %s60 = scalar_select %p57, %s58, %s59
    %p63 = pneg %p57
    %p64 = scmp.eq.s32.totalorder %s10, 1
    %p65 = por %p63, %p64
    %p66 = scmp.ne.s32.totalorder %s58, %s61
    %p67 = scmp.eq.s32.totalorder %s10, 0
    %p68 = por %p66, %p67
    %p69 = scmp.ne.s32.totalorder %s58, %s61
    %p70 = scmp.eq.s32.totalorder %s15, 1
    %p71 = por %p69, %p70
    %p72 = scmp.ne.s32.totalorder %s61, %s62
    %p73 = scmp.eq.s32.totalorder %s15, 0
    %p74 = por %p72, %p73
    %p75 = scmp.ne.s32.totalorder %s61, %s62
    %p76 = scmp.eq.s32.totalorder %s16, 1
    %p77 = por %p75, %p76
    %p79 = scmp.ne.s32.totalorder %s62, %s78
    %p80 = scmp.eq.s32.totalorder %s16, 0
    %p81 = por %p79, %p80
    %s82 = ssub.s32 %s18, %s25
    %p83 = scmp.eq.s32.totalorder %s82, 0
    %s85 = sadd.s32 %s84, 1
    %s86 = scalar_select %p83, %s84, %s85
    %p89 = pneg %p83
    %p90 = scmp.eq.s32.totalorder %s10, 1
    %p91 = por %p89, %p90
    %p92 = scmp.ne.s32.totalorder %s84, %s87
    %p93 = scmp.eq.s32.totalorder %s10, 0
    %p94 = por %p92, %p93
    %p95 = scmp.ne.s32.totalorder %s84, %s87
    %p96 = scmp.eq.s32.totalorder %s15, 1
    %p97 = por %p95, %p96
    %p98 = scmp.ne.s32.totalorder %s87, %s88
    %p99 = scmp.eq.s32.totalorder %s15, 0
    %p100 = por %p98, %p99
    %p101 = scmp.ne.s32.totalorder %s87, %s88
    %p102 = scmp.eq.s32.totalorder %s16, 1
    %p103 = por %p101, %p102
    %p105 = scmp.ne.s32.totalorder %s88, %s104
    %p106 = scmp.eq.s32.totalorder %s16, 0
    %p107 = por %p105, %p106
    %s108 = ssub.s32 %s17, %s29
    %p109 = scmp.eq.s32.totalorder %s108, 0
    %s111 = sadd.s32 %s110, 1
    %s112 = scalar_select %p109, %s110, %s111
    %p115 = pneg %p109
    %p116 = scmp.eq.s32.totalorder %s10, 1
    %p117 = por %p115, %p116
    %p118 = scmp.ne.s32.totalorder %s110, %s113
    %p119 = scmp.eq.s32.totalorder %s10, 0
    %p120 = por %p118, %p119
    %p121 = scmp.ne.s32.totalorder %s110, %s113
    %p122 = scmp.eq.s32.totalorder %s15, 1
    %p123 = por %p121, %p122
    %p124 = scmp.ne.s32.totalorder %s113, %s114
    %p125 = scmp.eq.s32.totalorder %s15, 0
    %p126 = por %p124, %p125
    %p127 = scmp.ne.s32.totalorder %s113, %s114
    %p128 = scmp.eq.s32.totalorder %s16, 1
    %p129 = por %p127, %p128
    %p131 = scmp.ne.s32.totalorder %s114, %s130
    %p132 = scmp.eq.s32.totalorder %s16, 0
    %p133 = por %p131, %p132
    %s134 = ssub.s32 %s17, %s29
    %p135 = scmp.eq.s32.totalorder %s134, 0
    %s137 = sadd.s32 %s136, 1
    %s138 = scalar_select %p135, %s136, %s137
    %p141 = pneg %p135
    %p142 = scmp.eq.s32.totalorder %s10, 1
    %p143 = por %p141, %p142
    %p144 = scmp.ne.s32.totalorder %s136, %s139
    %p145 = scmp.eq.s32.totalorder %s10, 0
    %p146 = por %p144, %p145
    %p147 = scmp.ne.s32.totalorder %s136, %s139
    %p148 = scmp.eq.s32.totalorder %s15, 1
    %p149 = por %p147, %p148
    %p150 = scmp.ne.s32.totalorder %s139, %s140
    %p151 = scmp.eq.s32.totalorder %s15, 0
    %p152 = por %p150, %p151
    %p153 = scmp.ne.s32.totalorder %s139, %s140
    %p154 = scmp.eq.s32.totalorder %s16, 1
    %p155 = por %p153, %p154
    %p157 = scmp.ne.s32.totalorder %s140, %s156
    %p158 = scmp.eq.s32.totalorder %s16, 0
    %p159 = por %p157, %p158
    %p160 = scmp.le.s32.totalorder 1, %s10
    %p161 = scmp.lt.s32.totalorder %s10, 3
    %p162 = pnand %p160, %p161
    %p163 = pneg %p162
    // Predicated region
    $region9: #{transformer_forward.3} parent=5 // pred_check
      _
    $region10: #{transformer_forward.3} parent=5 // pred_check_branch
      %165 = sbr.rel (%p162) target = $region12
    $region11: #{transformer_forward.3} parent=5 // pred_region
      %s166 = ssub.s32 %s10, 1
      // Predicated region
      $region13: #{transformer_forward.3} parent=11 // pred_check
        %p167 = pneg %p74
      $region14: #{transformer_forward.3} parent=11 // pred_check_branch
        %169 = sbr.rel (%p167) target = $region16
      $region15: #{transformer_forward.3} parent=11 // pred_region
        %s170 = smul.u32 4, %s20
        %p171 = scmp.lt.s32.totalorder %s170, 3
        %s172 = scalar_select %p171, %s170, 3
        %s173 = smul.addr %s172, 4
        %s174 = scalar_lea.vmem %s1, %s173
        %s175 = smul.u32 4, %s20
      $region16: #{transformer_forward.3} parent=11 // pred_fallthru
        _
      // Predicated region
      $region17: #{transformer_forward.3} parent=11 // pred_check
        %p176 = pneg %p100
      $region18: #{transformer_forward.3} parent=11 // pred_check_branch
        %178 = sbr.rel (%p176) target = $region20
      $region19: #{transformer_forward.3} parent=11 // pred_region
        %s179 = smul.u32 4, %s20
        %p180 = scmp.lt.s32.totalorder %s179, 3
        %s181 = scalar_select %p180, %s179, 3
        %s182 = scalar_lea.vmem %s2, %s181
        %s183 = smul.u32 4, %s20
      $region20: #{transformer_forward.3} parent=11 // pred_fallthru
        _
    $region12: #{transformer_forward.3} parent=5 // pred_fallthru
      _
    %p184 = scmp.lt.s32.totalorder %s10, 2
    // Predicated region
    $region21: #{transformer_forward.3} parent=5 // pred_check
      %p185 = pneg %p184
    $region22: #{transformer_forward.3} parent=5 // pred_check_branch
      %187 = sbr.rel (%p185) target = $region24
    $region23: #{transformer_forward.3} parent=5 // pred_region
      // Predicated region
      $region25: #{transformer_forward.3} parent=23 // pred_check
        %p188 = pneg %p42
      $region26: #{transformer_forward.3} parent=23 // pred_check_branch
        %190 = sbr.rel (%p188) target = $region28
      $region27: #{transformer_forward.3} parent=23 // pred_region
        %s191 = smul.u32 4, %s17
        %p192 = scmp.lt.s32.totalorder %s191, 7
        %s193 = scalar_select %p192, %s191, 7
        %s194 = smul.addr %s193, 4
        %s195 = scalar_lea.vmem %s0, %s194
        %s196 = smul.u32 4, %s17
      $region28: #{transformer_forward.3} parent=23 // pred_fallthru
        _
      // Predicated region
      $region29: #{transformer_forward.3} parent=23 // pred_check
        %p197 = pneg %p120
      $region30: #{transformer_forward.3} parent=23 // pred_check_branch
        %199 = sbr.rel (%p197) target = $region32
      $region31: #{transformer_forward.3} parent=23 // pred_region
        %s200 = smul.u32 4, %s17
        %p201 = scmp.lt.s32.totalorder %s200, 7
        %s202 = scalar_select %p201, %s200, 7
        %s203 = smul.addr %s202, 8
        %s204 = scalar_lea.vmem %s3, %s203
        %s205 = smul.u32 4, %s17
      $region32: #{transformer_forward.3} parent=23 // pred_fallthru
        _
    $region24: #{transformer_forward.3} parent=5 // pred_fallthru
      _
    %p206 = scmp.le.s32.totalorder 1, %s10
    %p207 = scmp.lt.s32.totalorder %s10, 3
    %p208 = pnand %p206, %p207
    %p209 = pneg %p208
    // Predicated region
    $region33: #{transformer_forward.3} parent=5 // pred_check
      _
    $region34: #{transformer_forward.3} parent=5 // pred_check_branch
      %211 = sbr.rel (%p208) target = $region36
    $region35: #{transformer_forward.3} parent=5 // pred_region
      %s212 = ssub.s32 %s10, 1
      %s213 = smul.u32 4, %s19
      %p214 = scmp.lt.s32.totalorder %s213, 7
      %s215 = scalar_select %p214, %s213, 7
      %s216 = smul.addr %s215, 4
      %s217 = scalar_lea.vmem %s0, %s216
      %p218 = pneg %p48
      %p219 = pneg %p45
      %s220 = smul.u32 4, %s20
      %p221 = scmp.lt.s32.totalorder %s220, 3
      %s222 = scalar_select %p221, %s220, 3
      %s223 = smul.addr %s222, 4
      %s224 = scalar_lea.vmem %s1, %s223
      %p225 = pneg %p74
      %p226 = pneg %p71
      %s227 = smul.u32 4, %s20
      %p228 = scmp.lt.s32.totalorder %s227, 3
      %s229 = scalar_select %p228, %s227, 3
      %s230 = scalar_lea.vmem %s2, %s229
      %p231 = pneg %p100
      %p232 = pneg %p97
      %s233 = smul.u32 4, %s19
      %p234 = scmp.lt.s32.totalorder %s233, 7
      %s235 = scalar_select %p234, %s233, 7
      %s236 = smul.addr %s235, 8
      %s237 = scalar_lea.vmem %s3, %s236
      %p238 = pneg %p126
      %p239 = pneg %p123
      %p240 = pneg %p152
      %p241 = pneg %p149
      %s242 = smul.u32 4, %s19
      %p243 = scmp.lt.s32.totalorder %s242, 7
      %s244 = scalar_select %p243, %s242, 7
      %s245 = smul.addr %s244, 8
      %s246 = scalar_lea.vmem %s4, %s245
      %s247 = smul.u32 4, %s19
      %p248 = scmp.lt.s32.totalorder %s247, 7
      %s249 = scalar_select %p248, %s247, 7
      %s250 = smul.addr %s249, 4
      %s251 = scalar_lea.vmem %s0, %s250
      %s252 = smul.u32 4, %s19
      %s253 = smul.u32 4, %s20
      %p254 = scmp.lt.s32.totalorder %s253, 3
      %s255 = scalar_select %p254, %s253, 3
      %s256 = smul.addr %s255, 4
      %s257 = scalar_lea.vmem %s1, %s256
      %s258 = smul.u32 4, %s20
      %s259 = smul.u32 4, %s20
      %p260 = scmp.lt.s32.totalorder %s259, 3
      %s261 = scalar_select %p260, %s259, 3
      %s262 = scalar_lea.vmem %s2, %s261
      %s263 = smul.u32 4, %s20
      %s264 = smul.u32 4, %s19
      %p265 = scmp.lt.s32.totalorder %s264, 7
      %s266 = scalar_select %p265, %s264, 7
      %s267 = smul.addr %s266, 8
      %s268 = scalar_lea.vmem %s3, %s267
      %s269 = smul.u32 4, %s19
      %s270 = smul.u32 4, %s19
      %p271 = scmp.lt.s32.totalorder %s270, 7
      %s272 = scalar_select %p271, %s270, 7
      %s273 = smul.addr %s272, 8
      %s274 = scalar_lea.vmem %s4, %s273
      %s275 = smul.u32 4, %s19
      %p277 = scmp.eq.s32.totalorder %s20, 0
      // Predicated region
      $region37: #{transformer_forward.3} parent=35 // pred_check
        %p278 = pneg %p277
      $region38: #{transformer_forward.3} parent=35 // pred_check_branch
        %280 = sbr.rel (%p278) target = $region40
      $region39: #{transformer_forward.3} parent=35 // pred_region
        %vm281 = vcmask 7168
        %282 = vst.msk [vmem:[#allocation2] sm:$0xff] %vm281, -inf
        %283 = vst.msk [vmem:[#allocation2 + $0x8] sm:$0xff] %vm281, -inf
        %284 = vst.msk [vmem:[#allocation2 + $0x10] sm:$0xff] %vm281, -inf
        %285 = vst.msk [vmem:[#allocation2 + $0x18] sm:$0xff] %vm281, -inf
        %286 = vst.msk [vmem:[#allocation3] sm:$0xff] %vm281, 0.0
        %287 = vst.msk [vmem:[#allocation3 + $0x8] sm:$0xff] %vm281, 0.0
        %288 = vst.msk [vmem:[#allocation3 + $0x10] sm:$0xff] %vm281, 0.0
        %289 = vst.msk [vmem:[#allocation3 + $0x18] sm:$0xff] %vm281, 0.0
        %290 = vst.msk [vmem:[#allocation4] sm:$0xff] %vm281, 0.0
        %291 = vst.msk [vmem:[#allocation4 + $0x8] sm:$0xff] %vm281, 0.0
        %292 = vst.msk [vmem:[#allocation4 + $0x10] sm:$0xff] %vm281, 0.0
        %293 = vst.msk [vmem:[#allocation4 + $0x18] sm:$0xff] %vm281, 0.0
      $region40: #{transformer_forward.3} parent=35 // pred_fallthru
        _
      %v294 = vld [vmem:[%s251] sm:$0xf]
      %v295 = vld [vmem:[%s251 + $0x4] sm:$0xf]
      %v296 = vld [vmem:[%s251 + $0x8] sm:$0xf]
      %v297 = vld [vmem:[%s251 + $0xc] sm:$0xf]
      %v298 = vld [vmem:[%s257] sm:$0xff]
      %v299 = vld [vmem:[%s257 + $0x8] sm:$0xff]
      %v300 = vld [vmem:[%s257 + $0x10] sm:$0xff]
      %v301 = vld [vmem:[%s257 + $0x18] sm:$0xff]
      %v302 = vld [vmem:[%s257 + $0x20] sm:$0xff]
      %v303 = vld [vmem:[%s257 + $0x28] sm:$0xff]
      %v304 = vld [vmem:[%s257 + $0x30] sm:$0xff]
      %v305 = vld [vmem:[%s257 + $0x38] sm:$0xff]
      %v306 = vld [vmem:[%s257 + $0x40] sm:$0xff]
      %v307 = vld [vmem:[%s257 + $0x48] sm:$0xff]
      %v308 = vld [vmem:[%s257 + $0x50] sm:$0xff]
      %v309 = vld [vmem:[%s257 + $0x58] sm:$0xff]
      %v310 = vld [vmem:[%s257 + $0x60] sm:$0xff]
      %v311 = vld [vmem:[%s257 + $0x68] sm:$0xff]
      %v312 = vld [vmem:[%s257 + $0x70] sm:$0xff]
      %v313 = vld [vmem:[%s257 + $0x78] sm:$0xff]
      %v314 = vld [vmem:[%s257 + $0x80] sm:$0xff]
      %v315 = vld [vmem:[%s257 + $0x88] sm:$0xff]
      %v316 = vld [vmem:[%s257 + $0x90] sm:$0xff]
      %v317 = vld [vmem:[%s257 + $0x98] sm:$0xff]
      %v318 = vld [vmem:[%s257 + $0xa0] sm:$0xff]
      %v319 = vld [vmem:[%s257 + $0xa8] sm:$0xff]
      %v320 = vld [vmem:[%s257 + $0xb0] sm:$0xff]
      %v321 = vld [vmem:[%s257 + $0xb8] sm:$0xff]
      %v322 = vld [vmem:[%s257 + $0xc0] sm:$0xff]
      %v323 = vld [vmem:[%s257 + $0xc8] sm:$0xff]
      %v324 = vld [vmem:[%s257 + $0xd0] sm:$0xff]
      %v325 = vld [vmem:[%s257 + $0xd8] sm:$0xff]
      %v326 = vld [vmem:[%s257 + $0xe0] sm:$0xff]
      %v327 = vld [vmem:[%s257 + $0xe8] sm:$0xff]
      %v328 = vld [vmem:[%s257 + $0xf0] sm:$0xff]
      %v329 = vld [vmem:[%s257 + $0xf8] sm:$0xff]
      %v330 = vld [vmem:[%s262] sm:$0xf]
      %v332 = vlaneseq
      %v333 = vshrl.u32 %v332, 7
      %v334 = vsub.s32 0, %v333
      %v335 = vrot.slane %v330, %v334
      %v336 = vlaneseq
      %v337 = vshrl.u32 %v336, 7
      %v338 = vsub.s32 1, %v337
      %v339 = vrot.slane %v330, %v338
      %v340 = vlaneseq
      %v341 = vshrl.u32 %v340, 7
      %v342 = vsub.s32 2, %v341
      %v343 = vrot.slane %v330, %v342
      %v344 = vlaneseq
      %v345 = vshrl.u32 %v344, 7
      %v346 = vsub.s32 3, %v345
      %v347 = vrot.slane %v330, %v346
      %v356 = vunpack.c.l.b16 %v294
      %v357 = vunpack.c.l.b16 %v295
      %v358 = vunpack.c.l.b16 %v296
      %v359 = vunpack.c.l.b16 %v297
      %v360 = vpack.c.b16 %v357, %v356
      %v361 = vpack.c.b16 %v359, %v358
      %v396 = vunpack.c.l.b16 %v298
      %v397 = vunpack.c.h.b16 %v298
      %v398 = vunpack.c.l.b16 %v299
      %v399 = vunpack.c.h.b16 %v299
      %v400 = vunpack.c.l.b16 %v300
      %v401 = vunpack.c.h.b16 %v300
      %v402 = vunpack.c.l.b16 %v301
      %v403 = vunpack.c.h.b16 %v301
      %v404 = vunpack.c.l.b16 %v302
      %v405 = vunpack.c.h.b16 %v302
      %v406 = vunpack.c.l.b16 %v303
      %v407 = vunpack.c.h.b16 %v303
      %v408 = vunpack.c.l.b16 %v304
      %v409 = vunpack.c.h.b16 %v304
      %v410 = vunpack.c.l.b16 %v305
      %v411 = vunpack.c.h.b16 %v305
      %v412 = vunpack.c.l.b16 %v306
      %v413 = vunpack.c.h.b16 %v306
      %v414 = vunpack.c.l.b16 %v307
      %v415 = vunpack.c.h.b16 %v307
      %v416 = vunpack.c.l.b16 %v308
      %v417 = vunpack.c.h.b16 %v308
      %v418 = vunpack.c.l.b16 %v309
      %v419 = vunpack.c.h.b16 %v309
      %v420 = vunpack.c.l.b16 %v310
      %v421 = vunpack.c.h.b16 %v310
      %v422 = vunpack.c.l.b16 %v311
      %v423 = vunpack.c.h.b16 %v311
      %v424 = vunpack.c.l.b16 %v312
      %v425 = vunpack.c.h.b16 %v312
      %v426 = vunpack.c.l.b16 %v313
      %v427 = vunpack.c.h.b16 %v313
      %v428 = vunpack.c.l.b16 %v314
      %v429 = vunpack.c.h.b16 %v314
      %v430 = vunpack.c.l.b16 %v315
      %v431 = vunpack.c.h.b16 %v315
      %v432 = vunpack.c.l.b16 %v316
      %v433 = vunpack.c.h.b16 %v316
      %v434 = vunpack.c.l.b16 %v317
      %v435 = vunpack.c.h.b16 %v317
      %v436 = vunpack.c.l.b16 %v318
      %v437 = vunpack.c.h.b16 %v318
      %v438 = vunpack.c.l.b16 %v319
      %v439 = vunpack.c.h.b16 %v319
      %v440 = vunpack.c.l.b16 %v320
      %v441 = vunpack.c.h.b16 %v320
      %v442 = vunpack.c.l.b16 %v321
      %v443 = vunpack.c.h.b16 %v321
      %v444 = vunpack.c.l.b16 %v322
      %v445 = vunpack.c.h.b16 %v322
      %v446 = vunpack.c.l.b16 %v323
      %v447 = vunpack.c.h.b16 %v323
      %v448 = vunpack.c.l.b16 %v324
      %v449 = vunpack.c.h.b16 %v324
      %v450 = vunpack.c.l.b16 %v325
      %v451 = vunpack.c.h.b16 %v325
      %v452 = vunpack.c.l.b16 %v326
      %v453 = vunpack.c.h.b16 %v326
      %v454 = vunpack.c.l.b16 %v327
      %v455 = vunpack.c.h.b16 %v327
      %v456 = vunpack.c.l.b16 %v328
      %v457 = vunpack.c.h.b16 %v328
      %v458 = vunpack.c.l.b16 %v329
      %v459 = vunpack.c.h.b16 %v329
      %v460 = vpack.c.b16 %v400, %v396
      %v461 = vpack.c.b16 %v401, %v397
      %v462 = vpack.c.b16 %v402, %v398
      %v463 = vpack.c.b16 %v403, %v399
      %v464 = vpack.c.b16 %v408, %v404
      %v465 = vpack.c.b16 %v409, %v405
      %v466 = vpack.c.b16 %v410, %v406
      %v467 = vpack.c.b16 %v411, %v407
      %v468 = vpack.c.b16 %v416, %v412
      %v469 = vpack.c.b16 %v417, %v413
      %v470 = vpack.c.b16 %v418, %v414
      %v471 = vpack.c.b16 %v419, %v415
      %v472 = vpack.c.b16 %v424, %v420
      %v473 = vpack.c.b16 %v425, %v421
      %v474 = vpack.c.b16 %v426, %v422
      %v475 = vpack.c.b16 %v427, %v423
      %v476 = vpack.c.b16 %v432, %v428
      %v477 = vpack.c.b16 %v433, %v429
      %v478 = vpack.c.b16 %v434, %v430
      %v479 = vpack.c.b16 %v435, %v431
      %v480 = vpack.c.b16 %v440, %v436
      %v481 = vpack.c.b16 %v441, %v437
      %v482 = vpack.c.b16 %v442, %v438
      %v483 = vpack.c.b16 %v443, %v439
      %v484 = vpack.c.b16 %v448, %v444
      %v485 = vpack.c.b16 %v449, %v445
      %v486 = vpack.c.b16 %v450, %v446
      %v487 = vpack.c.b16 %v451, %v447
      %v488 = vpack.c.b16 %v456, %v452
      %v489 = vpack.c.b16 %v457, %v453
      %v490 = vpack.c.b16 %v458, %v454
      %v491 = vpack.c.b16 %v459, %v455
      %524 = vmatprep.subr.bf16.mxu0 %v461
      %525 = vmatpush1.bf16.msra.mxu0 %v460
      %526 = vmatprep.subr.bf16.mxu0 %v465
      %527 = vmatpush1.bf16.msra.mxu0 %v464
      %528 = vmatprep.subr.bf16.mxu0 %v469
      %529 = vmatpush1.bf16.msra.mxu0 %v468
      %530 = vmatprep.subr.bf16.mxu0 %v473
      %531 = vmatpush1.bf16.msra.mxu0 %v472
      %532 = vmatprep.subr.bf16.mxu0 %v477
      %533 = vmatpush1.bf16.msra.mxu0 %v476
      %534 = vmatprep.subr.bf16.mxu0 %v481
      %535 = vmatpush1.bf16.msra.mxu0 %v480
      %536 = vmatprep.subr.bf16.mxu0 %v485
      %537 = vmatpush1.bf16.msra.mxu0 %v484
      %538 = vmatprep.subr.bf16.mxu0 %v489
      %539 = vmatpush1.bf16.msra.mxu0 %v488
      %540 = vmatprep.subr.bf16.mxu0 0
      %541 = vmatpush1.bf16.msra.mxu0 0
      %542 = vmatprep.subr.bf16.mxu0 0
      %543 = vmatpush1.bf16.msra.mxu0 0
      %544 = vmatprep.subr.bf16.mxu0 0
      %545 = vmatpush1.bf16.msra.mxu0 0
      %546 = vmatprep.subr.bf16.mxu0 0
      %547 = vmatpush1.bf16.msra.mxu0 0
      %548 = vmatprep.subr.bf16.mxu0 0
      %549 = vmatpush1.bf16.msra.mxu0 0
      %550 = vmatprep.subr.bf16.mxu0 0
      %551 = vmatpush1.bf16.msra.mxu0 0
      %552 = vmatprep.subr.bf16.mxu0 0
      %553 = vmatpush1.bf16.msra.mxu0 0
      %554 = vmatprep.subr.bf16.mxu0 0
      %555 = vmatpush1.bf16.msra.mxu0 0
      %556 = vmatprep.mubr.bf16.mxu0 0
      %557 = vmatmul.mubr.bf16.gmra.mrb[0].mxu0 %v360
      %v558 = vpop.f32.mrb[0].mxu0
      %v559 = vadd.f32 %v335, %v558
      %v560 = vpop.f32.mrb[0].mxu0
      %v561 = vadd.f32 %v339, %v560
      %v562 = vpop.f32.mrb[0].mxu0
      %v563 = vadd.f32 %v335, %v562
      %v564 = vpop.f32.mrb[0].mxu0
      %v565 = vadd.f32 %v339, %v564
      %566 = vmatprep.mubr.bf16.mxu0 0
      %567 = vmatmul.mubr.bf16.gmra.mrb[0].mxu0 %v361
      %v568 = vpop.f32.mrb[0].mxu0
      %v569 = vadd.f32 %v335, %v568
      %v570 = vpop.f32.mrb[0].mxu0
      %v571 = vadd.f32 %v339, %v570
      %v572 = vpop.f32.mrb[0].mxu0
      %v573 = vadd.f32 %v335, %v572
      %v574 = vpop.f32.mrb[0].mxu0
      %v575 = vadd.f32 %v339, %v574
      %576 = vdwg.mxu0
      %577 = vmatprep.subr.bf16.mxu0 %v463
      %578 = vmatpush1.bf16.msra.mxu0 %v462
      %579 = vmatprep.subr.bf16.mxu0 %v467
      %580 = vmatpush1.bf16.msra.mxu0 %v466
      %581 = vmatprep.subr.bf16.mxu0 %v471
      %582 = vmatpush1.bf16.msra.mxu0 %v470
      %583 = vmatprep.subr.bf16.mxu0 %v475
      %584 = vmatpush1.bf16.msra.mxu0 %v474
      %585 = vmatprep.subr.bf16.mxu0 %v479
      %586 = vmatpush1.bf16.msra.mxu0 %v478
      %587 = vmatprep.subr.bf16.mxu0 %v483
      %588 = vmatpush1.bf16.msra.mxu0 %v482
      %589 = vmatprep.subr.bf16.mxu0 %v487
      %590 = vmatpush1.bf16.msra.mxu0 %v486
      %591 = vmatprep.subr.bf16.mxu0 %v491
      %592 = vmatpush1.bf16.msra.mxu0 %v490
      %593 = vmatprep.subr.bf16.mxu0 0
      %594 = vmatpush1.bf16.msra.mxu0 0
      %595 = vmatprep.subr.bf16.mxu0 0
      %596 = vmatpush1.bf16.msra.mxu0 0
      %597 = vmatprep.subr.bf16.mxu0 0
      %598 = vmatpush1.bf16.msra.mxu0 0
      %599 = vmatprep.subr.bf16.mxu0 0
      %600 = vmatpush1.bf16.msra.mxu0 0
      %601 = vmatprep.subr.bf16.mxu0 0
      %602 = vmatpush1.bf16.msra.mxu0 0
      %603 = vmatprep.subr.bf16.mxu0 0
      %604 = vmatpush1.bf16.msra.mxu0 0
      %605 = vmatprep.subr.bf16.mxu0 0
      %606 = vmatpush1.bf16.msra.mxu0 0
      %607 = vmatprep.subr.bf16.mxu0 0
      %608 = vmatpush1.bf16.msra.mxu0 0
      %609 = vmatprep.mubr.bf16.mxu0 0
      %610 = vmatmul.mubr.bf16.gmra.mrb[0].mxu0 %v360
      %v611 = vpop.f32.mrb[0].mxu0
      %v612 = vadd.f32 %v343, %v611
      %v613 = vpop.f32.mrb[0].mxu0
      %v614 = vadd.f32 %v347, %v613
      %v615 = vpop.f32.mrb[0].mxu0
      %v616 = vadd.f32 %v343, %v615
      %v617 = vpop.f32.mrb[0].mxu0
      %v618 = vadd.f32 %v347, %v617
      %619 = vmatprep.mubr.bf16.mxu0 0
      %620 = vmatmul.mubr.bf16.gmra.mrb[0].mxu0 %v361
      %v621 = vpop.f32.mrb[0].mxu0
      %v622 = vadd.f32 %v343, %v621
      %v623 = vpop.f32.mrb[0].mxu0
      %v624 = vadd.f32 %v347, %v623
      %v625 = vpop.f32.mrb[0].mxu0
      %v626 = vadd.f32 %v343, %v625
      %v627 = vpop.f32.mrb[0].mxu0
      %v628 = vadd.f32 %v347, %v627
      %629 = vdwg.mxu0
      %v630 = vld [vmem:[#allocation2] sm:$0xff]
      %v631 = vld [vmem:[#allocation2 + $0x8] sm:$0xff]
      %v632 = vld [vmem:[#allocation2 + $0x10] sm:$0xff]
      %v633 = vld [vmem:[#allocation2 + $0x18] sm:$0xff]
      %v634 = vmax.f32 %v559, %v561
      %v635 = vmax.f32 %v634, %v612
      %v636 = vmax.f32 %v635, %v614
      %637 = vmax.xlane.f32.xlu0 %v636
      %v638 = vpop.xlane.xlu0 %637
      %v639 = vmax.f32 %v563, %v565
      %v640 = vmax.f32 %v639, %v616
      %v641 = vmax.f32 %v640, %v618
      %642 = vmax.xlane.f32.xlu0 %v641
      %v643 = vpop.xlane.xlu0 %642
      %v644 = vmax.f32 %v569, %v571
      %v645 = vmax.f32 %v644, %v622
      %v646 = vmax.f32 %v645, %v624
      %647 = vmax.xlane.f32.xlu0 %v646
      %v648 = vpop.xlane.xlu0 %647
      %v649 = vmax.f32 %v573, %v575
      %v650 = vmax.f32 %v649, %v626
      %v651 = vmax.f32 %v650, %v628
      %652 = vmax.xlane.f32.xlu0 %v651
      %v653 = vpop.xlane.xlu0 %652
      %v654 = vmax.f32 %v630, %v638
      %v655 = vmax.f32 %v631, %v643
      %v656 = vmax.f32 %v632, %v648
      %v657 = vmax.f32 %v633, %v653
      %v658 = vsub.f32 %v630, %v654
      %v659 = vsub.f32 %v631, %v655
      %v660 = vsub.f32 %v632, %v656
      %v661 = vsub.f32 %v633, %v657
      %v662 = vmul.f32 %v658, 1.442695
      %v663 = vpow.pop %v662
      %v664 = vmul.f32 %v659, 1.442695
      %v665 = vpow.pop %v664
      %v666 = vmul.f32 %v660, 1.442695
      %v667 = vpow.pop %v666
      %v668 = vmul.f32 %v661, 1.442695
      %v669 = vpow.pop %v668
      %v670 = vld [vmem:[#allocation3] sm:$0xff]
      %v671 = vld [vmem:[#allocation3 + $0x8] sm:$0xff]
      %v672 = vld [vmem:[#allocation3 + $0x10] sm:$0xff]
      %v673 = vld [vmem:[#allocation3 + $0x18] sm:$0xff]
      %v674 = vmul.f32 %v663, %v670
      %v675 = vmul.f32 %v665, %v671
      %v676 = vmul.f32 %v667, %v672
      %v677 = vmul.f32 %v669, %v673
      %679 = vset.pattern.permute.xlu0 0
      %680 = vperm.xlu0 %679, %v654
      %v681 = vpop.permute.xlu0 %680
      %684 = vset.pattern.permute.xlu0 0
      %685 = vperm.xlu0 %684, %v655
      %v686 = vpop.permute.xlu0 %685
      %689 = vset.pattern.permute.xlu0 0
      %690 = vperm.xlu0 %689, %v656
      %v691 = vpop.permute.xlu0 %690
      %694 = vset.pattern.permute.xlu0 0
      %695 = vperm.xlu0 %694, %v657
      %v696 = vpop.permute.xlu0 %695
      %v698 = vsub.f32 %v559, %v681
      %v699 = vsub.f32 %v561, %v681
      %v700 = vsub.f32 %v612, %v681
      %v701 = vsub.f32 %v614, %v681
      %v702 = vsub.f32 %v563, %v686
      %v703 = vsub.f32 %v565, %v686
      %v704 = vsub.f32 %v616, %v686
      %v705 = vsub.f32 %v618, %v686
      %v706 = vsub.f32 %v569, %v691
      %v707 = vsub.f32 %v571, %v691
      %v708 = vsub.f32 %v622, %v691
      %v709 = vsub.f32 %v624, %v691
      %v710 = vsub.f32 %v573, %v696
      %v711 = vsub.f32 %v575, %v696
      %v712 = vsub.f32 %v626, %v696
      %v713 = vsub.f32 %v628, %v696
      %v714 = vmul.f32 %v698, 1.442695
      %v715 = vpow.pop %v714
      %v716 = vmul.f32 %v699, 1.442695
      %v717 = vpow.pop %v716
      %v718 = vmul.f32 %v700, 1.442695
      %v719 = vpow.pop %v718
      %v720 = vmul.f32 %v701, 1.442695
      %v721 = vpow.pop %v720
      %v722 = vmul.f32 %v702, 1.442695
      %v723 = vpow.pop %v722
      %v724 = vmul.f32 %v703, 1.442695
      %v725 = vpow.pop %v724
      %v726 = vmul.f32 %v704, 1.442695
      %v727 = vpow.pop %v726
      %v728 = vmul.f32 %v705, 1.442695
      %v729 = vpow.pop %v728
      %v730 = vmul.f32 %v706, 1.442695
      %v731 = vpow.pop %v730
      %v732 = vmul.f32 %v707, 1.442695
      %v733 = vpow.pop %v732
      %v734 = vmul.f32 %v708, 1.442695
      %v735 = vpow.pop %v734
      %v736 = vmul.f32 %v709, 1.442695
      %v737 = vpow.pop %v736
      %v738 = vmul.f32 %v710, 1.442695
      %v739 = vpow.pop %v738
      %v740 = vmul.f32 %v711, 1.442695
      %v741 = vpow.pop %v740
      %v742 = vmul.f32 %v712, 1.442695
      %v743 = vpow.pop %v742
      %v744 = vmul.f32 %v713, 1.442695
      %v745 = vpow.pop %v744
      %v746 = vadd.f32 %v715, %v717
      %v747 = vadd.f32 %v746, %v719
      %v748 = vadd.f32 %v747, %v721
      %749 = vadd.xlane.f32.xlu0 %v748
      %v750 = vpop.xlane.xlu0 %749
      %v751 = vadd.f32 %v723, %v725
      %v752 = vadd.f32 %v751, %v727
      %v753 = vadd.f32 %v752, %v729
      %754 = vadd.xlane.f32.xlu0 %v753
      %v755 = vpop.xlane.xlu0 %754
      %v756 = vadd.f32 %v731, %v733
      %v757 = vadd.f32 %v756, %v735
      %v758 = vadd.f32 %v757, %v737
      %759 = vadd.xlane.f32.xlu0 %v758
      %v760 = vpop.xlane.xlu0 %759
      %v761 = vadd.f32 %v739, %v741
      %v762 = vadd.f32 %v761, %v743
      %v763 = vadd.f32 %v762, %v745
      %764 = vadd.xlane.f32.xlu0 %v763
      %v765 = vpop.xlane.xlu0 %764
      %v766 = vadd.f32 %v674, %v750
      %v767 = vadd.f32 %v675, %v755
      %v768 = vadd.f32 %v676, %v760
      %v769 = vadd.f32 %v677, %v765
      %vm770 = vcmask 7168
      %771 = vst.msk [vmem:[#allocation3] sm:$0xff] %vm770, %v766
      %772 = vst.msk [vmem:[#allocation3 + $0x8] sm:$0xff] %vm770, %v767
      %773 = vst.msk [vmem:[#allocation3 + $0x10] sm:$0xff] %vm770, %v768
      %774 = vst.msk [vmem:[#allocation3 + $0x18] sm:$0xff] %vm770, %v769
      %775 = vst.msk [vmem:[#allocation2] sm:$0xff] %vm770, %v654
      %776 = vst.msk [vmem:[#allocation2 + $0x8] sm:$0xff] %vm770, %v655
      %777 = vst.msk [vmem:[#allocation2 + $0x10] sm:$0xff] %vm770, %v656
      %778 = vst.msk [vmem:[#allocation2 + $0x18] sm:$0xff] %vm770, %v657
      %s779 = smul.u32 %s20, 512
      %v780 = vlaneseq
      %v781 = vand.u32 %v780, 127
      %v782 = vadd.s32 %v781, 128
      %v783 = vadd.s32 %v781, 256
      %v784 = vadd.s32 %v781, 384
      %v785 = vstv %s779
      %v786 = vadd.s32 %v785, %v781
      %v787 = vadd.s32 %v785, %v782
      %v788 = vadd.s32 %v785, %v783
      %v789 = vadd.s32 %v785, %v784
      %v790 = vld [vmem:[%s268] sm:$0xff]
      %v791 = vld [vmem:[%s268 + $0x8] sm:$0xff]
      %v792 = vld [vmem:[%s268 + $0x10] sm:$0xff]
      %v793 = vld [vmem:[%s268 + $0x18] sm:$0xff]
      %794 = vset.pattern.permute.xlu0 0
      %795 = vperm.xlu0 %794, %v790
      %v796 = vpop.permute.xlu0 %795
      %797 = vset.pattern.permute.xlu0 0
      %798 = vperm.xlu0 %797, %v791
      %v799 = vpop.permute.xlu0 %798
      %800 = vset.pattern.permute.xlu0 0
      %801 = vperm.xlu0 %800, %v792
      %v802 = vpop.permute.xlu0 %801
      %803 = vset.pattern.permute.xlu0 0
      %804 = vperm.xlu0 %803, %v793
      %v805 = vpop.permute.xlu0 %804
      %vm806 = vcmp.eq.s32.totalorder %v786, %v796
      %vm807 = vcmp.eq.s32.totalorder %v787, %v796
      %vm808 = vcmp.eq.s32.totalorder %v788, %v796
      %vm809 = vcmp.eq.s32.totalorder %v789, %v796
      %vm810 = vcmp.eq.s32.totalorder %v786, %v799
      %vm811 = vcmp.eq.s32.totalorder %v787, %v799
      %vm812 = vcmp.eq.s32.totalorder %v788, %v799
      %vm813 = vcmp.eq.s32.totalorder %v789, %v799
      %vm814 = vcmp.eq.s32.totalorder %v786, %v802
      %vm815 = vcmp.eq.s32.totalorder %v787, %v802
      %vm816 = vcmp.eq.s32.totalorder %v788, %v802
      %vm817 = vcmp.eq.s32.totalorder %v789, %v802
      %vm818 = vcmp.eq.s32.totalorder %v786, %v805
      %vm819 = vcmp.eq.s32.totalorder %v787, %v805
      %vm820 = vcmp.eq.s32.totalorder %v788, %v805
      %vm821 = vcmp.eq.s32.totalorder %v789, %v805
      %v822 = vsel %vm806, 0.9, 0.00019569472
      %v823 = vsel %vm807, 0.9, 0.00019569472
      %v824 = vsel %vm808, 0.9, 0.00019569472
      %v825 = vsel %vm809, 0.9, 0.00019569472
      %v826 = vsel %vm810, 0.9, 0.00019569472
      %v827 = vsel %vm811, 0.9, 0.00019569472
      %v828 = vsel %vm812, 0.9, 0.00019569472
      %v829 = vsel %vm813, 0.9, 0.00019569472
      %v830 = vsel %vm814, 0.9, 0.00019569472
      %v831 = vsel %vm815, 0.9, 0.00019569472
      %v832 = vsel %vm816, 0.9, 0.00019569472
      %v833 = vsel %vm817, 0.9, 0.00019569472
      %v834 = vsel %vm818, 0.9, 0.00019569472
      %v835 = vsel %vm819, 0.9, 0.00019569472
      %v836 = vsel %vm820, 0.9, 0.00019569472
      %v837 = vsel %vm821, 0.9, 0.00019569472
      %v838 = vld [vmem:[#allocation4] sm:$0xff]
      %v839 = vld [vmem:[#allocation4 + $0x8] sm:$0xff]
      %v840 = vld [vmem:[#allocation4 + $0x10] sm:$0xff]
      %v841 = vld [vmem:[#allocation4 + $0x18] sm:$0xff]
      %v842 = vmul.f32 %v559, %v822
      %v843 = vmul.f32 %v561, %v823
      %v844 = vmul.f32 %v612, %v824
      %v845 = vmul.f32 %v614, %v825
      %v846 = vmul.f32 %v563, %v826
      %v847 = vmul.f32 %v565, %v827
      %v848 = vmul.f32 %v616, %v828
      %v849 = vmul.f32 %v618, %v829
      %v850 = vmul.f32 %v569, %v830
      %v851 = vmul.f32 %v571, %v831
      %v852 = vmul.f32 %v622, %v832
      %v853 = vmul.f32 %v624, %v833
      %v854 = vmul.f32 %v573, %v834
      %v855 = vmul.f32 %v575, %v835
      %v856 = vmul.f32 %v626, %v836
      %v857 = vmul.f32 %v628, %v837
      %v858 = vadd.f32 %v842, %v843
      %v859 = vadd.f32 %v858, %v844
      %v860 = vadd.f32 %v859, %v845
      %861 = vadd.xlane.f32.xlu0 %v860
      %v862 = vpop.xlane.xlu0 %861
      %v863 = vadd.f32 %v846, %v847
      %v864 = vadd.f32 %v863, %v848
      %v865 = vadd.f32 %v864, %v849
      %866 = vadd.xlane.f32.xlu0 %v865
      %v867 = vpop.xlane.xlu0 %866
      %v868 = vadd.f32 %v850, %v851
      %v869 = vadd.f32 %v868, %v852
      %v870 = vadd.f32 %v869, %v853
      %871 = vadd.xlane.f32.xlu0 %v870
      %v872 = vpop.xlane.xlu0 %871
      %v873 = vadd.f32 %v854, %v855
      %v874 = vadd.f32 %v873, %v856
      %v875 = vadd.f32 %v874, %v857
      %876 = vadd.xlane.f32.xlu0 %v875
      %v877 = vpop.xlane.xlu0 %876
      %v878 = vadd.f32 %v838, %v862
      %v879 = vadd.f32 %v839, %v867
      %v880 = vadd.f32 %v840, %v872
      %v881 = vadd.f32 %v841, %v877
      %882 = vst.msk [vmem:[#allocation4] sm:$0xff] %vm770, %v878
      %883 = vst.msk [vmem:[#allocation4 + $0x8] sm:$0xff] %vm770, %v879
      %884 = vst.msk [vmem:[#allocation4 + $0x10] sm:$0xff] %vm770, %v880
      %885 = vst.msk [vmem:[#allocation4 + $0x18] sm:$0xff] %vm770, %v881
      // Predicated region
      $region41: #{transformer_forward.3} parent=35 // pred_check
        %p886 = pneg %p277
      $region42: #{transformer_forward.3} parent=35 // pred_check_branch
        %888 = sbr.rel (%p886) target = $region44
      $region43: #{transformer_forward.3} parent=35 // pred_region
        %v889 = vld [vmem:[#allocation2] sm:$0xff]
        %v890 = vld [vmem:[#allocation2 + $0x8] sm:$0xff]
        %v891 = vld [vmem:[#allocation2 + $0x10] sm:$0xff]
        %v892 = vld [vmem:[#allocation2 + $0x18] sm:$0xff]
        %v893 = vld [vmem:[#allocation3] sm:$0xff]
        %v894 = vld [vmem:[#allocation3 + $0x8] sm:$0xff]
        %v895 = vld [vmem:[#allocation3 + $0x10] sm:$0xff]
        %v896 = vld [vmem:[#allocation3 + $0x18] sm:$0xff]
        %v897 = vlog2.pop %v893
        %v898 = vmul.f32 %v897, 0.6931472
        %v899 = vlog2.pop %v894
        %v900 = vmul.f32 %v899, 0.6931472
        %v901 = vlog2.pop %v895
        %v902 = vmul.f32 %v901, 0.6931472
        %v903 = vlog2.pop %v896
        %v904 = vmul.f32 %v903, 0.6931472
        %v905 = vadd.f32 %v889, %v898
        %v906 = vadd.f32 %v890, %v900
        %v907 = vadd.f32 %v891, %v902
        %v908 = vadd.f32 %v892, %v904
        %v909 = vld [vmem:[#allocation4] sm:$0xff]
        %v910 = vld [vmem:[#allocation4 + $0x8] sm:$0xff]
        %v911 = vld [vmem:[#allocation4 + $0x10] sm:$0xff]
        %v912 = vld [vmem:[#allocation4 + $0x18] sm:$0xff]
        %v913 = vsub.f32 -0.9487199, %v909
        %v914 = vsub.f32 -0.9487199, %v910
        %v915 = vsub.f32 -0.9487199, %v911
        %v916 = vsub.f32 -0.9487199, %v912
        %v917 = vadd.f32 %v913, %v905
        %v918 = vadd.f32 %v914, %v906
        %v919 = vadd.f32 %v915, %v907
        %v920 = vadd.f32 %v916, %v908
        %921 = vst.msk [vmem:[%s274] sm:$0xff] %vm770, %v917
        %922 = vst.msk [vmem:[%s274 + $0x8] sm:$0xff] %vm770, %v918
        %923 = vst.msk [vmem:[%s274 + $0x10] sm:$0xff] %vm770, %v919
        %924 = vst.msk [vmem:[%s274 + $0x18] sm:$0xff] %vm770, %v920
      $region44: #{transformer_forward.3} parent=35 // pred_fallthru
        _
      %s925 = smul.u32 4, %s19
      %p926 = scmp.lt.s32.totalorder %s925, 7
      %s927 = scalar_select %p926, %s925, 7
      %s928 = smul.addr %s927, 8
      %s929 = scalar_lea.vmem %s4, %s928
      // Predicated region
      $region45: #{transformer_forward.3} parent=35 // pred_check
        %p930 = pneg %p149
      $region46: #{transformer_forward.3} parent=35 // pred_check_branch
        %932 = sbr.rel (%p930) target = $region48
      $region47: #{transformer_forward.3} parent=35 // pred_region
        %s933 = smul.u32 4, %s19
      $region48: #{transformer_forward.3} parent=35 // pred_fallthru
        _
    $region36: #{transformer_forward.3} parent=5 // pred_fallthru
      _
    %p934 = scmp.le.s32.totalorder 2, %s10
    // Predicated region
    $region49: #{transformer_forward.3} parent=5 // pred_check
      %p935 = pneg %p934
    $region50: #{transformer_forward.3} parent=5 // pred_check_branch
      %937 = sbr.rel (%p935) target = $region52
    $region51: #{transformer_forward.3} parent=5 // pred_region
      %s938 = ssub.s32 %s10, 2
      // Predicated region
      $region53: #{transformer_forward.3} parent=51 // pred_check
        %p939 = pneg %p155
      $region54: #{transformer_forward.3} parent=51 // pred_check_branch
        %941 = sbr.rel (%p939) target = $region56
      $region55: #{transformer_forward.3} parent=51 // pred_region
        %s942 = smul.u32 4, %s21
        %p943 = scmp.lt.s32.totalorder %s942, 7
        %s944 = scalar_select %p943, %s942, 7
        %s945 = smul.addr %s944, 8
        %s946 = scalar_lea.vmem %s4, %s945
      $region56: #{transformer_forward.3} parent=51 // pred_fallthru
        _
    $region52: #{transformer_forward.3} parent=5 // pred_fallthru
      _
  $region6: #{transformer_forward.3} parent=0 // loop_footer
    %s14 = sadd.s32 1, %s10
  $region7: #{transformer_forward.3} parent=0 // loop_footer_branch
    %9 = sbr.rel target = $region3
  $region8: #{transformer_forward.3} parent=0 // loop_exit
    _

// kernel: transformer_forward.2
$region0: #{transformer_forward.2}
  #allocation0 [shape = 'u32[]', space=smem, size = 0x4, offset = 0x4, fixed_abs, tag = 'smem constant byte address 0x4 - core index']
  #allocation1 [shape = 'u32[144,128]{1,0:T(1,128)}', space=vmem, size = 0x12000, scoped, tag = 'internal scratch']
  %s0 = inlined_call_operand.smem [shape: u32[36], index: -1, kind: input, shape index: {}]
  %s1 = sld [smem:[%s0]]
  %s2 = scalar_lea.smem %s0, 1
  %s3 = sld [smem:[%s2]]
  %s4 = scalar_lea.smem %s0, 2
  %s5 = sld [smem:[%s4]]
  %s6 = scalar_lea.smem %s0, 3
  %s7 = sld [smem:[%s6]]
  %s8 = scalar_lea.smem %s0, 4
  %s9 = sld [smem:[%s8]]
  %s10 = scalar_lea.smem %s0, 5
  %s11 = sld [smem:[%s10]]
  %s12 = scalar_lea.smem %s0, 6
  %s13 = sld [smem:[%s12]]
  %s14 = scalar_lea.smem %s0, 7
  %s15 = sld [smem:[%s14]]
  %s16 = scalar_lea.smem %s0, 8
  %s17 = sld [smem:[%s16]]
  %s18 = scalar_lea.smem %s0, 9
  %s19 = sld [smem:[%s18]]
  %s20 = scalar_lea.smem %s0, 10
  %s21 = sld [smem:[%s20]]
  %s22 = scalar_lea.smem %s0, 11
  %s23 = sld [smem:[%s22]]
  %s24 = scalar_lea.smem %s0, 12
  %s25 = sld [smem:[%s24]]
  %s26 = scalar_lea.smem %s0, 13
  %s27 = sld [smem:[%s26]]
  %s28 = scalar_lea.smem %s0, 14
  %s29 = sld [smem:[%s28]]
  %s30 = scalar_lea.smem %s0, 15
  %s31 = sld [smem:[%s30]]
  %s32 = scalar_lea.smem %s0, 16
  %s33 = sld [smem:[%s32]]
  %s34 = scalar_lea.smem %s0, 17
  %s35 = sld [smem:[%s34]]
  %s36 = scalar_lea.smem %s0, 18
  %s37 = sld [smem:[%s36]]
  %s38 = scalar_lea.smem %s0, 19
  %s39 = sld [smem:[%s38]]
  %s40 = scalar_lea.smem %s0, 20
  %s41 = sld [smem:[%s40]]
  %s42 = scalar_lea.smem %s0, 21
  %s43 = sld [smem:[%s42]]
  %s44 = scalar_lea.smem %s0, 22
  %s45 = sld [smem:[%s44]]
  %s46 = scalar_lea.smem %s0, 23
  %s47 = sld [smem:[%s46]]
  %s48 = scalar_lea.smem %s0, 24
  %s49 = sld [smem:[%s48]]
  %s50 = scalar_lea.smem %s0, 25
  %s51 = sld [smem:[%s50]]
  %s52 = scalar_lea.smem %s0, 26
  %s53 = sld [smem:[%s52]]
  %s54 = scalar_lea.smem %s0, 27
  %s55 = sld [smem:[%s54]]
  %s56 = scalar_lea.smem %s0, 28
  %s57 = sld [smem:[%s56]]
  %s58 = scalar_lea.smem %s0, 29
  %s59 = sld [smem:[%s58]]
  %s60 = scalar_lea.smem %s0, 30
  %s61 = sld [smem:[%s60]]
  %s62 = scalar_lea.smem %s0, 31
  %s63 = sld [smem:[%s62]]
  %s64 = scalar_lea.smem %s0, 32
  %s65 = sld [smem:[%s64]]
  %s66 = scalar_lea.smem %s0, 33
  %s67 = sld [smem:[%s66]]
  %s68 = scalar_lea.smem %s0, 34
  %s69 = sld [smem:[%s68]]
  %s70 = scalar_lea.smem %s0, 35
  %s71 = sld [smem:[%s70]]
  %s72 = sld [smem:[#allocation0]]
  $region197: #{transformer_forward.2} parent=0
    _
  %s74 = ssub.s32 1, %s72
  %s75 = scalar_select 0, %s74, %s72
  $region1: #{transformer_forward.2} parent=0
    #allocation2 [shape = 'u8[32768]{0}', space=vmem, size = 0x8000, scoped, tag = 'input window, operand 5, single buffered']
    #allocation3 [shape = 's32[2]{0}', space=sflag, size = 0x8, scoped, tag = 'scoped memory for transformer_forward.2']
    #allocation4 [shape = 'u8[32768]{0}', space=vmem, size = 0x8000, scoped, tag = 'input window, operand 17, single buffered']
    #allocation5 [shape = 's32[1]{0}', space=sflag, size = 0x4, scoped, tag = 'scoped memory for transformer_forward.2']
    #allocation6 [shape = 'u8[32768]{0}', space=vmem, size = 0x8000, scoped, tag = 'input window, operand 21, single buffered']
    #allocation7 [shape = 'u8[32768]{0}', space=vmem, size = 0x8000, scoped, tag = 'input window, operand 25, single buffered']
    #allocation8 [shape = 's32[1]{0}', space=sflag, size = 0x4, scoped, tag = 'scoped memory for transformer_forward.2']
    #allocation9 [shape = 'u8[65536]{0}', space=vmem, size = 0x10000, scoped, tag = 'input window, operand 29, single buffered']
    #allocation10 [shape = 'u8[65536]{0}', space=vmem, size = 0x10000, scoped, tag = 'input window, operand 31, single buffered']
    #allocation11 [shape = 's32[1]{0}', space=sflag, size = 0x4, scoped, tag = 'scoped memory for transformer_forward.2']
    %76 = vsyncpa [#allocation3], 0
    %77 = vsyncpa [#allocation5], 0
    %78 = vsyncpa [#allocation8], 0
    %79 = vsyncpa [#allocation11], 0
    loop: start=0, step=1, limit=4
    $region2: #{transformer_forward.2} parent=1 // loop_pre_header
      _
    $region3: #{transformer_forward.2} parent=1 // loop_header
      %s81 = sphi 0, %s85
      %p82 = scmp.ge.s32.totalorder %s81, 4
      %s91 = sphi 0, %s93
      %s94 = sphi 0, %s91
      %s95 = sphi 0, %s94
      %s111 = sphi 0, %s95
      %s117 = sphi 0, %s119
      %s120 = sphi 0, %s117
      %s121 = sphi 0, %s120
      %s137 = sphi 0, %s121
      %s141 = sphi 0, %s141
      %s143 = sphi 0, %s141
      %s144 = sphi 0, %s143
      %s158 = sphi 0, %s144
      %s162 = sphi 0, %s162
      %s164 = sphi 0, %s162
      %s165 = sphi 0, %s164
      %s179 = sphi 0, %s165
      %s183 = sphi 0, %s183
      %s185 = sphi 0, %s183
      %s186 = sphi 0, %s185
      %s200 = sphi 0, %s186
      %s204 = sphi 0, %s204
      %s206 = sphi 0, %s204
      %s207 = sphi 0, %s206
      %s221 = sphi 0, %s207
      %s225 = sphi 0, %s225
      %s227 = sphi 0, %s225
      %s228 = sphi 0, %s227
      %s242 = sphi 0, %s228
      %s246 = sphi 0, %s246
      %s248 = sphi 0, %s246
      %s249 = sphi 0, %s248
      %s263 = sphi 0, %s249
      %s267 = sphi 0, %s267
      %s269 = sphi 0, %s267
      %s270 = sphi 0, %s269
      %s284 = sphi 0, %s270
      %s288 = sphi 0, %s288
      %s290 = sphi 0, %s288
      %s291 = sphi 0, %s290
      %s305 = sphi 0, %s291
      %s309 = sphi 0, %s309
      %s311 = sphi 0, %s309
      %s312 = sphi 0, %s311
      %s326 = sphi 0, %s312
      %s330 = sphi 0, %s330
      %s332 = sphi 0, %s330
      %s333 = sphi 0, %s332
      %s347 = sphi 0, %s333
      %s351 = sphi 0, %s351
      %s353 = sphi 0, %s351
      %s354 = sphi 0, %s353
      %s368 = sphi 0, %s354
      %s372 = sphi 0, %s372
      %s374 = sphi 0, %s372
      %s375 = sphi 0, %s374
      %s389 = sphi 0, %s375
      %s393 = sphi 0, %s393
      %s395 = sphi 0, %s393
      %s396 = sphi 0, %s395
      %s410 = sphi 0, %s396
      %s414 = sphi 0, %s414
      %s416 = sphi 0, %s414
      %s417 = sphi 0, %s416
      %s431 = sphi 0, %s417
      %s435 = sphi 0, %s435
      %s437 = sphi 0, %s435
      %s438 = sphi 0, %s437
      %s452 = sphi 0, %s438
      %s456 = sphi 0, %s456
      %s458 = sphi 0, %s456
      %s459 = sphi 0, %s458
      %s473 = sphi 0, %s459
      %s477 = sphi 0, %s477
      %s479 = sphi 0, %s477
      %s480 = sphi 0, %s479
      %s494 = sphi 0, %s480
      %s498 = sphi 0, %s498
      %s500 = sphi 0, %s498
      %s501 = sphi 0, %s500
      %s515 = sphi 0, %s501
      %s519 = sphi 0, %s519
      %s521 = sphi 0, %s519
      %s522 = sphi 0, %s521
      %s536 = sphi 0, %s522
      %s540 = sphi 0, %s540
      %s542 = sphi 0, %s540
      %s543 = sphi 0, %s542
      %s557 = sphi 0, %s543
      %s561 = sphi 0, %s561
      %s563 = sphi 0, %s561
      %s564 = sphi 0, %s563
      %s578 = sphi 0, %s564
      %s582 = sphi 0, %s582
      %s584 = sphi 0, %s582
      %s585 = sphi 0, %s584
      %s599 = sphi 0, %s585
      %s603 = sphi 0, %s603
      %s605 = sphi 0, %s603
      %s606 = sphi 0, %s605
      %s620 = sphi 0, %s606
      %s624 = sphi 0, %s624
      %s626 = sphi 0, %s624
      %s627 = sphi 0, %s626
      %s641 = sphi 0, %s627
      %s645 = sphi 0, %s645
      %s647 = sphi 0, %s645
      %s648 = sphi 0, %s647
      %s662 = sphi 0, %s648
      %s666 = sphi 0, %s666
      %s668 = sphi 0, %s666
      %s669 = sphi 0, %s668
      %s683 = sphi 0, %s669
      %s687 = sphi 0, %s687
      %s689 = sphi 0, %s687
      %s690 = sphi 0, %s689
      %s704 = sphi 0, %s690
      %s708 = sphi 0, %s708
      %s710 = sphi 0, %s708
      %s711 = sphi 0, %s710
      %s725 = sphi 0, %s711
      %s729 = sphi 0, %s729
      %s731 = sphi 0, %s729
      %s732 = sphi 0, %s731
      %s746 = sphi 0, %s732
      %s750 = sphi 0, %s750
      %s752 = sphi 0, %s750
      %s753 = sphi 0, %s752
      %s767 = sphi 0, %s753
      %s771 = sphi 0, %s771
      %s773 = sphi 0, %s771
      %s774 = sphi 0, %s773
      %s788 = sphi 0, %s774
      %s792 = sphi 0, %s792
      %s794 = sphi 0, %s792
      %s795 = sphi 0, %s794
      %s809 = sphi 0, %s795
      %s813 = sphi 0, %s813
      %s815 = sphi 0, %s813
      %s816 = sphi 0, %s815
      %s830 = sphi 0, %s816
      %s836 = sphi 0, %s838
      %s839 = sphi 0, %s836
      %s840 = sphi 0, %s839
      %s856 = sphi 0, %s840
    $region4: #{transformer_forward.2} parent=1 // loop_header_branch
      %84 = sbr.rel (%p82) target = $region8
    $region5: #{transformer_forward.2} parent=1 // loop_body
      %s86 = ssub.s32 %s81, 1
      %s87 = ssub.s32 %s81, 2
      %s88 = sadd.s32 %s81, 1
      %s89 = ssub.s32 %s81, %s88
      %p90 = scmp.eq.s32.totalorder %s89, 0
      %s92 = sadd.s32 %s91, 1
      %s93 = scalar_select %p90, %s91, %s92
      %p96 = pneg %p90
      %p97 = scmp.eq.s32.totalorder %s81, 1
      %p98 = por %p96, %p97
      %p99 = scmp.ne.s32.totalorder %s91, %s94
      %p100 = scmp.eq.s32.totalorder %s81, 0
      %p101 = por %p99, %p100
      %p102 = scmp.ne.s32.totalorder %s91, %s94
      %p103 = scmp.eq.s32.totalorder %s86, 1
      %p104 = por %p102, %p103
      %p105 = scmp.ne.s32.totalorder %s94, %s95
      %p106 = scmp.eq.s32.totalorder %s86, 0
      %p107 = por %p105, %p106
      %p108 = scmp.ne.s32.totalorder %s94, %s95
      %p109 = scmp.eq.s32.totalorder %s87, 1
      %p110 = por %p108, %p109
      %p112 = scmp.ne.s32.totalorder %s95, %s111
      %p113 = scmp.eq.s32.totalorder %s87, 0
      %p114 = por %p112, %p113
      %s115 = ssub.s32 %s81, %s88
      %p116 = scmp.eq.s32.totalorder %s115, 0
      %s118 = sadd.s32 %s117, 1
      %s119 = scalar_select %p116, %s117, %s118
      %p122 = pneg %p116
      %p123 = scmp.eq.s32.totalorder %s81, 1
      %p124 = por %p122, %p123
      %p125 = scmp.ne.s32.totalorder %s117, %s120
      %p126 = scmp.eq.s32.totalorder %s81, 0
      %p127 = por %p125, %p126
      %p128 = scmp.ne.s32.totalorder %s117, %s120
      %p129 = scmp.eq.s32.totalorder %s86, 1
      %p130 = por %p128, %p129
      %p131 = scmp.ne.s32.totalorder %s120, %s121
      %p132 = scmp.eq.s32.totalorder %s86, 0
      %p133 = por %p131, %p132
      %p134 = scmp.ne.s32.totalorder %s120, %s121
      %p135 = scmp.eq.s32.totalorder %s87, 1
      %p136 = por %p134, %p135
      %p138 = scmp.ne.s32.totalorder %s121, %s137
      %p139 = scmp.eq.s32.totalorder %s87, 0
      %p140 = por %p138, %p139
      %s142 = sadd.s32 %s141, 1
      %p145 = scmp.eq.s32.totalorder %s81, 1
      %p146 = scmp.ne.s32.totalorder %s141, %s143
      %p147 = scmp.eq.s32.totalorder %s81, 0
      %p148 = por %p146, %p147
      %p149 = scmp.ne.s32.totalorder %s141, %s143
      %p150 = scmp.eq.s32.totalorder %s86, 1
      %p151 = por %p149, %p150
      %p152 = scmp.ne.s32.totalorder %s143, %s144
      %p153 = scmp.eq.s32.totalorder %s86, 0
      %p154 = por %p152, %p153
      %p155 = scmp.ne.s32.totalorder %s143, %s144
      %p156 = scmp.eq.s32.totalorder %s87, 1
      %p157 = por %p155, %p156
      %p159 = scmp.ne.s32.totalorder %s144, %s158
      %p160 = scmp.eq.s32.totalorder %s87, 0
      %p161 = por %p159, %p160
      %s163 = sadd.s32 %s162, 1
      %p166 = scmp.eq.s32.totalorder %s81, 1
      %p167 = scmp.ne.s32.totalorder %s162, %s164
      %p168 = scmp.eq.s32.totalorder %s81, 0
      %p169 = por %p167, %p168
      %p170 = scmp.ne.s32.totalorder %s162, %s164
      %p171 = scmp.eq.s32.totalorder %s86, 1
      %p172 = por %p170, %p171
      %p173 = scmp.ne.s32.totalorder %s164, %s165
      %p174 = scmp.eq.s32.totalorder %s86, 0
      %p175 = por %p173, %p174
      %p176 = scmp.ne.s32.totalorder %s164, %s165
      %p177 = scmp.eq.s32.totalorder %s87, 1
      %p178 = por %p176, %p177
      %p180 = scmp.ne.s32.totalorder %s165, %s179
      %p181 = scmp.eq.s32.totalorder %s87, 0
      %p182 = por %p180, %p181
      %s184 = sadd.s32 %s183, 1
      %p187 = scmp.eq.s32.totalorder %s81, 1
      %p188 = scmp.ne.s32.totalorder %s183, %s185
      %p189 = scmp.eq.s32.totalorder %s81, 0
      %p190 = por %p188, %p189
      %p191 = scmp.ne.s32.totalorder %s183, %s185
      %p192 = scmp.eq.s32.totalorder %s86, 1
      %p193 = por %p191, %p192
      %p194 = scmp.ne.s32.totalorder %s185, %s186
      %p195 = scmp.eq.s32.totalorder %s86, 0
      %p196 = por %p194, %p195
      %p197 = scmp.ne.s32.totalorder %s185, %s186
      %p198 = scmp.eq.s32.totalorder %s87, 1
      %p199 = por %p197, %p198
      %p201 = scmp.ne.s32.totalorder %s186, %s200
      %p202 = scmp.eq.s32.totalorder %s87, 0
      %p203 = por %p201, %p202
      %s205 = sadd.s32 %s204, 1
      %p208 = scmp.eq.s32.totalorder %s81, 1
      %p209 = scmp.ne.s32.totalorder %s204, %s206
      %p210 = scmp.eq.s32.totalorder %s81, 0
      %p211 = por %p209, %p210
      %p212 = scmp.ne.s32.totalorder %s204, %s206
      %p213 = scmp.eq.s32.totalorder %s86, 1
      %p214 = por %p212, %p213
      %p215 = scmp.ne.s32.totalorder %s206, %s207
      %p216 = scmp.eq.s32.totalorder %s86, 0
      %p217 = por %p215, %p216
      %p218 = scmp.ne.s32.totalorder %s206, %s207
      %p219 = scmp.eq.s32.totalorder %s87, 1
      %p220 = por %p218, %p219
      %p222 = scmp.ne.s32.totalorder %s207, %s221
      %p223 = scmp.eq.s32.totalorder %s87, 0
      %p224 = por %p222, %p223
      %s226 = sadd.s32 %s225, 1
      %p229 = scmp.eq.s32.totalorder %s81, 1
      %p230 = scmp.ne.s32.totalorder %s225, %s227
      %p231 = scmp.eq.s32.totalorder %s81, 0
      %p232 = por %p230, %p231
      %p233 = scmp.ne.s32.totalorder %s225, %s227
      %p234 = scmp.eq.s32.totalorder %s86, 1
      %p235 = por %p233, %p234
      %p236 = scmp.ne.s32.totalorder %s227, %s228
      %p237 = scmp.eq.s32.totalorder %s86, 0
      %p238 = por %p236, %p237
      %p239 = scmp.ne.s32.totalorder %s227, %s228
      %p240 = scmp.eq.s32.totalorder %s87, 1
      %p241 = por %p239, %p240
      %p243 = scmp.ne.s32.totalorder %s228, %s242
      %p244 = scmp.eq.s32.totalorder %s87, 0
      %p245 = por %p243, %p244
      %s247 = sadd.s32 %s246, 1
      %p250 = scmp.eq.s32.totalorder %s81, 1
      %p251 = scmp.ne.s32.totalorder %s246, %s248
      %p252 = scmp.eq.s32.totalorder %s81, 0
      %p253 = por %p251, %p252
      %p254 = scmp.ne.s32.totalorder %s246, %s248
      %p255 = scmp.eq.s32.totalorder %s86, 1
      %p256 = por %p254, %p255
      %p257 = scmp.ne.s32.totalorder %s248, %s249
      %p258 = scmp.eq.s32.totalorder %s86, 0
      %p259 = por %p257, %p258
      %p260 = scmp.ne.s32.totalorder %s248, %s249
      %p261 = scmp.eq.s32.totalorder %s87, 1
      %p262 = por %p260, %p261
      %p264 = scmp.ne.s32.totalorder %s249, %s263
      %p265 = scmp.eq.s32.totalorder %s87, 0
      %p266 = por %p264, %p265
      %s268 = sadd.s32 %s267, 1
      %p271 = scmp.eq.s32.totalorder %s81, 1
      %p272 = scmp.ne.s32.totalorder %s267, %s269
      %p273 = scmp.eq.s32.totalorder %s81, 0
      %p274 = por %p272, %p273
      %p275 = scmp.ne.s32.totalorder %s267, %s269
      %p276 = scmp.eq.s32.totalorder %s86, 1
      %p277 = por %p275, %p276
      %p278 = scmp.ne.s32.totalorder %s269, %s270
      %p279 = scmp.eq.s32.totalorder %s86, 0
      %p280 = por %p278, %p279
      %p281 = scmp.ne.s32.totalorder %s269, %s270
      %p282 = scmp.eq.s32.totalorder %s87, 1
      %p283 = por %p281, %p282
      %p285 = scmp.ne.s32.totalorder %s270, %s284
      %p286 = scmp.eq.s32.totalorder %s87, 0
      %p287 = por %p285, %p286
      %s289 = sadd.s32 %s288, 1
      %p292 = scmp.eq.s32.totalorder %s81, 1
      %p293 = scmp.ne.s32.totalorder %s288, %s290
      %p294 = scmp.eq.s32.totalorder %s81, 0
      %p295 = por %p293, %p294
      %p296 = scmp.ne.s32.totalorder %s288, %s290
      %p297 = scmp.eq.s32.totalorder %s86, 1
      %p298 = por %p296, %p297
      %p299 = scmp.ne.s32.totalorder %s290, %s291
      %p300 = scmp.eq.s32.totalorder %s86, 0
      %p301 = por %p299, %p300
      %p302 = scmp.ne.s32.totalorder %s290, %s291
      %p303 = scmp.eq.s32.totalorder %s87, 1
      %p304 = por %p302, %p303
      %p306 = scmp.ne.s32.totalorder %s291, %s305
      %p307 = scmp.eq.s32.totalorder %s87, 0
      %p308 = por %p306, %p307
      %s310 = sadd.s32 %s309, 1
      %p313 = scmp.eq.s32.totalorder %s81, 1
      %p314 = scmp.ne.s32.totalorder %s309, %s311
      %p315 = scmp.eq.s32.totalorder %s81, 0
      %p316 = por %p314, %p315
      %p317 = scmp.ne.s32.totalorder %s309, %s311
      %p318 = scmp.eq.s32.totalorder %s86, 1
      %p319 = por %p317, %p318
      %p320 = scmp.ne.s32.totalorder %s311, %s312
      %p321 = scmp.eq.s32.totalorder %s86, 0
      %p322 = por %p320, %p321
      %p323 = scmp.ne.s32.totalorder %s311, %s312
      %p324 = scmp.eq.s32.totalorder %s87, 1
      %p325 = por %p323, %p324
      %p327 = scmp.ne.s32.totalorder %s312, %s326
      %p328 = scmp.eq.s32.totalorder %s87, 0
      %p329 = por %p327, %p328
      %s331 = sadd.s32 %s330, 1
      %p334 = scmp.eq.s32.totalorder %s81, 1
      %p335 = scmp.ne.s32.totalorder %s330, %s332
      %p336 = scmp.eq.s32.totalorder %s81, 0
      %p337 = por %p335, %p336
      %p338 = scmp.ne.s32.totalorder %s330, %s332
      %p339 = scmp.eq.s32.totalorder %s86, 1
      %p340 = por %p338, %p339
      %p341 = scmp.ne.s32.totalorder %s332, %s333
      %p342 = scmp.eq.s32.totalorder %s86, 0
      %p343 = por %p341, %p342
      %p344 = scmp.ne.s32.totalorder %s332, %s333
      %p345 = scmp.eq.s32.totalorder %s87, 1
      %p346 = por %p344, %p345
      %p348 = scmp.ne.s32.totalorder %s333, %s347
      %p349 = scmp.eq.s32.totalorder %s87, 0
      %p350 = por %p348, %p349
      %s352 = sadd.s32 %s351, 1
      %p355 = scmp.eq.s32.totalorder %s81, 1
      %p356 = scmp.ne.s32.totalorder %s351, %s353
      %p357 = scmp.eq.s32.totalorder %s81, 0
      %p358 = por %p356, %p357
      %p359 = scmp.ne.s32.totalorder %s351, %s353
      %p360 = scmp.eq.s32.totalorder %s86, 1
      %p361 = por %p359, %p360
      %p362 = scmp.ne.s32.totalorder %s353, %s354
      %p363 = scmp.eq.s32.totalorder %s86, 0
      %p364 = por %p362, %p363
      %p365 = scmp.ne.s32.totalorder %s353, %s354
      %p366 = scmp.eq.s32.totalorder %s87, 1
      %p367 = por %p365, %p366
      %p369 = scmp.ne.s32.totalorder %s354, %s368
      %p370 = scmp.eq.s32.totalorder %s87, 0
      %p371 = por %p369, %p370
      %s373 = sadd.s32 %s372, 1
      %p376 = scmp.eq.s32.totalorder %s81, 1
      %p377 = scmp.ne.s32.totalorder %s372, %s374
      %p378 = scmp.eq.s32.totalorder %s81, 0
      %p379 = por %p377, %p378
      %p380 = scmp.ne.s32.totalorder %s372, %s374
      %p381 = scmp.eq.s32.totalorder %s86, 1
      %p382 = por %p380, %p381
      %p383 = scmp.ne.s32.totalorder %s374, %s375
      %p384 = scmp.eq.s32.totalorder %s86, 0
      %p385 = por %p383, %p384
      %p386 = scmp.ne.s32.totalorder %s374, %s375
      %p387 = scmp.eq.s32.totalorder %s87, 1
      %p388 = por %p386, %p387
      %p390 = scmp.ne.s32.totalorder %s375, %s389
      %p391 = scmp.eq.s32.totalorder %s87, 0
      %p392 = por %p390, %p391
      %s394 = sadd.s32 %s393, 1
      %p397 = scmp.eq.s32.totalorder %s81, 1
      %p398 = scmp.ne.s32.totalorder %s393, %s395
      %p399 = scmp.eq.s32.totalorder %s81, 0
      %p400 = por %p398, %p399
      %p401 = scmp.ne.s32.totalorder %s393, %s395
      %p402 = scmp.eq.s32.totalorder %s86, 1
      %p403 = por %p401, %p402
      %p404 = scmp.ne.s32.totalorder %s395, %s396
      %p405 = scmp.eq.s32.totalorder %s86, 0
      %p406 = por %p404, %p405
      %p407 = scmp.ne.s32.totalorder %s395, %s396
      %p408 = scmp.eq.s32.totalorder %s87, 1
      %p409 = por %p407, %p408
      %p411 = scmp.ne.s32.totalorder %s396, %s410
      %p412 = scmp.eq.s32.totalorder %s87, 0
      %p413 = por %p411, %p412
      %s415 = sadd.s32 %s414, 1
      %p418 = scmp.eq.s32.totalorder %s81, 1
      %p419 = scmp.ne.s32.totalorder %s414, %s416
      %p420 = scmp.eq.s32.totalorder %s81, 0
      %p421 = por %p419, %p420
      %p422 = scmp.ne.s32.totalorder %s414, %s416
      %p423 = scmp.eq.s32.totalorder %s86, 1
      %p424 = por %p422, %p423
      %p425 = scmp.ne.s32.totalorder %s416, %s417
      %p426 = scmp.eq.s32.totalorder %s86, 0
      %p427 = por %p425, %p426
      %p428 = scmp.ne.s32.totalorder %s416, %s417
      %p429 = scmp.eq.s32.totalorder %s87, 1
      %p430 = por %p428, %p429
      %p432 = scmp.ne.s32.totalorder %s417, %s431
      %p433 = scmp.eq.s32.totalorder %s87, 0
      %p434 = por %p432, %p433
      %s436 = sadd.s32 %s435, 1
      %p439 = scmp.eq.s32.totalorder %s81, 1
      %p440 = scmp.ne.s32.totalorder %s435, %s437
      %p441 = scmp.eq.s32.totalorder %s81, 0
      %p442 = por %p440, %p441
      %p443 = scmp.ne.s32.totalorder %s435, %s437
      %p444 = scmp.eq.s32.totalorder %s86, 1
      %p445 = por %p443, %p444
      %p446 = scmp.ne.s32.totalorder %s437, %s438
      %p447 = scmp.eq.s32.totalorder %s86, 0
      %p448 = por %p446, %p447
      %p449 = scmp.ne.s32.totalorder %s437, %s438
      %p450 = scmp.eq.s32.totalorder %s87, 1
      %p451 = por %p449, %p450
      %p453 = scmp.ne.s32.totalorder %s438, %s452
      %p454 = scmp.eq.s32.totalorder %s87, 0
      %p455 = por %p453, %p454
      %s457 = sadd.s32 %s456, 1
      %p460 = scmp.eq.s32.totalorder %s81, 1
      %p461 = scmp.ne.s32.totalorder %s456, %s458
      %p462 = scmp.eq.s32.totalorder %s81, 0
      %p463 = por %p461, %p462
      %p464 = scmp.ne.s32.totalorder %s456, %s458
      %p465 = scmp.eq.s32.totalorder %s86, 1
      %p466 = por %p464, %p465
      %p467 = scmp.ne.s32.totalorder %s458, %s459
      %p468 = scmp.eq.s32.totalorder %s86, 0
      %p469 = por %p467, %p468
      %p470 = scmp.ne.s32.totalorder %s458, %s459
      %p471 = scmp.eq.s32.totalorder %s87, 1
      %p472 = por %p470, %p471
      %p474 = scmp.ne.s32.totalorder %s459, %s473
      %p475 = scmp.eq.s32.totalorder %s87, 0
      %p476 = por %p474, %p475
      %s478 = sadd.s32 %s477, 1
      %p481 = scmp.eq.s32.totalorder %s81, 1
      %p482 = scmp.ne.s32.totalorder %s477, %s479
      %p483 = scmp.eq.s32.totalorder %s81, 0
      %p484 = por %p482, %p483
      %p485 = scmp.ne.s32.totalorder %s477, %s479
      %p486 = scmp.eq.s32.totalorder %s86, 1
      %p487 = por %p485, %p486
      %p488 = scmp.ne.s32.totalorder %s479, %s480
      %p489 = scmp.eq.s32.totalorder %s86, 0
      %p490 = por %p488, %p489
      %p491 = scmp.ne.s32.totalorder %s479, %s480
      %p492 = scmp.eq.s32.totalorder %s87, 1
      %p493 = por %p491, %p492
      %p495 = scmp.ne.s32.totalorder %s480, %s494
      %p496 = scmp.eq.s32.totalorder %s87, 0
      %p497 = por %p495, %p496
      %s499 = sadd.s32 %s498, 1
      %p502 = scmp.eq.s32.totalorder %s81, 1
      %p503 = scmp.ne.s32.totalorder %s498, %s500
      %p504 = scmp.eq.s32.totalorder %s81, 0
      %p505 = por %p503, %p504
      %p506 = scmp.ne.s32.totalorder %s498, %s500
      %p507 = scmp.eq.s32.totalorder %s86, 1
      %p508 = por %p506, %p507
      %p509 = scmp.ne.s32.totalorder %s500, %s501
      %p510 = scmp.eq.s32.totalorder %s86, 0
      %p511 = por %p509, %p510
      %p512 = scmp.ne.s32.totalorder %s500, %s501
      %p513 = scmp.eq.s32.totalorder %s87, 1
      %p514 = por %p512, %p513
      %p516 = scmp.ne.s32.totalorder %s501, %s515
      %p517 = scmp.eq.s32.totalorder %s87, 0
      %p518 = por %p516, %p517
      %s520 = sadd.s32 %s519, 1
      %p523 = scmp.eq.s32.totalorder %s81, 1
      %p524 = scmp.ne.s32.totalorder %s519, %s521
      %p525 = scmp.eq.s32.totalorder %s81, 0
      %p526 = por %p524, %p525
      %p527 = scmp.ne.s32.totalorder %s519, %s521
      %p528 = scmp.eq.s32.totalorder %s86, 1
      %p529 = por %p527, %p528
      %p530 = scmp.ne.s32.totalorder %s521, %s522
      %p531 = scmp.eq.s32.totalorder %s86, 0
      %p532 = por %p530, %p531
      %p533 = scmp.ne.s32.totalorder %s521, %s522
      %p534 = scmp.eq.s32.totalorder %s87, 1
      %p535 = por %p533, %p534
      %p537 = scmp.ne.s32.totalorder %s522, %s536
      %p538 = scmp.eq.s32.totalorder %s87, 0
      %p539 = por %p537, %p538
      %s541 = sadd.s32 %s540, 1
      %p544 = scmp.eq.s32.totalorder %s81, 1
      %p545 = scmp.ne.s32.totalorder %s540, %s542
      %p546 = scmp.eq.s32.totalorder %s81, 0
      %p547 = por %p545, %p546
      %p548 = scmp.ne.s32.totalorder %s540, %s542
      %p549 = scmp.eq.s32.totalorder %s86, 1
      %p550 = por %p548, %p549
      %p551 = scmp.ne.s32.totalorder %s542, %s543
      %p552 = scmp.eq.s32.totalorder %s86, 0
      %p553 = por %p551, %p552
      %p554 = scmp.ne.s32.totalorder %s542, %s543
      %p555 = scmp.eq.s32.totalorder %s87, 1
      %p556 = por %p554, %p555
      %p558 = scmp.ne.s32.totalorder %s543, %s557
      %p559 = scmp.eq.s32.totalorder %s87, 0
      %p560 = por %p558, %p559
      %s562 = sadd.s32 %s561, 1
      %p565 = scmp.eq.s32.totalorder %s81, 1
      %p566 = scmp.ne.s32.totalorder %s561, %s563
      %p567 = scmp.eq.s32.totalorder %s81, 0
      %p568 = por %p566, %p567
      %p569 = scmp.ne.s32.totalorder %s561, %s563
      %p570 = scmp.eq.s32.totalorder %s86, 1
      %p571 = por %p569, %p570
      %p572 = scmp.ne.s32.totalorder %s563, %s564
      %p573 = scmp.eq.s32.totalorder %s86, 0
      %p574 = por %p572, %p573
      %p575 = scmp.ne.s32.totalorder %s563, %s564
      %p576 = scmp.eq.s32.totalorder %s87, 1
      %p577 = por %p575, %p576
      %p579 = scmp.ne.s32.totalorder %s564, %s578
      %p580 = scmp.eq.s32.totalorder %s87, 0
      %p581 = por %p579, %p580
      %s583 = sadd.s32 %s582, 1
      %p586 = scmp.eq.s32.totalorder %s81, 1
      %p587 = scmp.ne.s32.totalorder %s582, %s584
      %p588 = scmp.eq.s32.totalorder %s81, 0
      %p589 = por %p587, %p588
      %p590 = scmp.ne.s32.totalorder %s582, %s584
      %p591 = scmp.eq.s32.totalorder %s86, 1
      %p592 = por %p590, %p591
      %p593 = scmp.ne.s32.totalorder %s584, %s585
      %p594 = scmp.eq.s32.totalorder %s86, 0
      %p595 = por %p593, %p594
      %p596 = scmp.ne.s32.totalorder %s584, %s585
      %p597 = scmp.eq.s32.totalorder %s87, 1
      %p598 = por %p596, %p597
      %p600 = scmp.ne.s32.totalorder %s585, %s599
      %p601 = scmp.eq.s32.totalorder %s87, 0
      %p602 = por %p600, %p601
      %s604 = sadd.s32 %s603, 1
      %p607 = scmp.eq.s32.totalorder %s81, 1
      %p608 = scmp.ne.s32.totalorder %s603, %s605
      %p609 = scmp.eq.s32.totalorder %s81, 0
      %p610 = por %p608, %p609
      %p611 = scmp.ne.s32.totalorder %s603, %s605
      %p612 = scmp.eq.s32.totalorder %s86, 1
      %p613 = por %p611, %p612
      %p614 = scmp.ne.s32.totalorder %s605, %s606
      %p615 = scmp.eq.s32.totalorder %s86, 0
      %p616 = por %p614, %p615
      %p617 = scmp.ne.s32.totalorder %s605, %s606
      %p618 = scmp.eq.s32.totalorder %s87, 1
      %p619 = por %p617, %p618
      %p621 = scmp.ne.s32.totalorder %s606, %s620
      %p622 = scmp.eq.s32.totalorder %s87, 0
      %p623 = por %p621, %p622
      %s625 = sadd.s32 %s624, 1
      %p628 = scmp.eq.s32.totalorder %s81, 1
      %p629 = scmp.ne.s32.totalorder %s624, %s626
      %p630 = scmp.eq.s32.totalorder %s81, 0
      %p631 = por %p629, %p630
      %p632 = scmp.ne.s32.totalorder %s624, %s626
      %p633 = scmp.eq.s32.totalorder %s86, 1
      %p634 = por %p632, %p633
      %p635 = scmp.ne.s32.totalorder %s626, %s627
      %p636 = scmp.eq.s32.totalorder %s86, 0
      %p637 = por %p635, %p636
      %p638 = scmp.ne.s32.totalorder %s626, %s627
      %p639 = scmp.eq.s32.totalorder %s87, 1
      %p640 = por %p638, %p639
      %p642 = scmp.ne.s32.totalorder %s627, %s641
      %p643 = scmp.eq.s32.totalorder %s87, 0
      %p644 = por %p642, %p643
      %s646 = sadd.s32 %s645, 1
      %p649 = scmp.eq.s32.totalorder %s81, 1
      %p650 = scmp.ne.s32.totalorder %s645, %s647
      %p651 = scmp.eq.s32.totalorder %s81, 0
      %p652 = por %p650, %p651
      %p653 = scmp.ne.s32.totalorder %s645, %s647
      %p654 = scmp.eq.s32.totalorder %s86, 1
      %p655 = por %p653, %p654
      %p656 = scmp.ne.s32.totalorder %s647, %s648
      %p657 = scmp.eq.s32.totalorder %s86, 0
      %p658 = por %p656, %p657
      %p659 = scmp.ne.s32.totalorder %s647, %s648
      %p660 = scmp.eq.s32.totalorder %s87, 1
      %p661 = por %p659, %p660
      %p663 = scmp.ne.s32.totalorder %s648, %s662
      %p664 = scmp.eq.s32.totalorder %s87, 0
      %p665 = por %p663, %p664
      %s667 = sadd.s32 %s666, 1
      %p670 = scmp.eq.s32.totalorder %s81, 1
      %p671 = scmp.ne.s32.totalorder %s666, %s668
      %p672 = scmp.eq.s32.totalorder %s81, 0
      %p673 = por %p671, %p672
      %p674 = scmp.ne.s32.totalorder %s666, %s668
      %p675 = scmp.eq.s32.totalorder %s86, 1
      %p676 = por %p674, %p675
      %p677 = scmp.ne.s32.totalorder %s668, %s669
      %p678 = scmp.eq.s32.totalorder %s86, 0
      %p679 = por %p677, %p678
      %p680 = scmp.ne.s32.totalorder %s668, %s669
      %p681 = scmp.eq.s32.totalorder %s87, 1
      %p682 = por %p680, %p681
      %p684 = scmp.ne.s32.totalorder %s669, %s683
      %p685 = scmp.eq.s32.totalorder %s87, 0
      %p686 = por %p684, %p685
      %s688 = sadd.s32 %s687, 1
      %p691 = scmp.eq.s32.totalorder %s81, 1
      %p692 = scmp.ne.s32.totalorder %s687, %s689
      %p693 = scmp.eq.s32.totalorder %s81, 0
      %p694 = por %p692, %p693
      %p695 = scmp.ne.s32.totalorder %s687, %s689
      %p696 = scmp.eq.s32.totalorder %s86, 1
      %p697 = por %p695, %p696
      %p698 = scmp.ne.s32.totalorder %s689, %s690
      %p699 = scmp.eq.s32.totalorder %s86, 0
      %p700 = por %p698, %p699
      %p701 = scmp.ne.s32.totalorder %s689, %s690
      %p702 = scmp.eq.s32.totalorder %s87, 1
      %p703 = por %p701, %p702
      %p705 = scmp.ne.s32.totalorder %s690, %s704
      %p706 = scmp.eq.s32.totalorder %s87, 0
      %p707 = por %p705, %p706
      %s709 = sadd.s32 %s708, 1
      %p712 = scmp.eq.s32.totalorder %s81, 1
      %p713 = scmp.ne.s32.totalorder %s708, %s710
      %p714 = scmp.eq.s32.totalorder %s81, 0
      %p715 = por %p713, %p714
      %p716 = scmp.ne.s32.totalorder %s708, %s710
      %p717 = scmp.eq.s32.totalorder %s86, 1
      %p718 = por %p716, %p717
      %p719 = scmp.ne.s32.totalorder %s710, %s711
      %p720 = scmp.eq.s32.totalorder %s86, 0
      %p721 = por %p719, %p720
      %p722 = scmp.ne.s32.totalorder %s710, %s711
      %p723 = scmp.eq.s32.totalorder %s87, 1
      %p724 = por %p722, %p723
      %p726 = scmp.ne.s32.totalorder %s711, %s725
      %p727 = scmp.eq.s32.totalorder %s87, 0
      %p728 = por %p726, %p727
      %s730 = sadd.s32 %s729, 1
      %p733 = scmp.eq.s32.totalorder %s81, 1
      %p734 = scmp.ne.s32.totalorder %s729, %s731
      %p735 = scmp.eq.s32.totalorder %s81, 0
      %p736 = por %p734, %p735
      %p737 = scmp.ne.s32.totalorder %s729, %s731
      %p738 = scmp.eq.s32.totalorder %s86, 1
      %p739 = por %p737, %p738
      %p740 = scmp.ne.s32.totalorder %s731, %s732
      %p741 = scmp.eq.s32.totalorder %s86, 0
      %p742 = por %p740, %p741
      %p743 = scmp.ne.s32.totalorder %s731, %s732
      %p744 = scmp.eq.s32.totalorder %s87, 1
      %p745 = por %p743, %p744
      %p747 = scmp.ne.s32.totalorder %s732, %s746
      %p748 = scmp.eq.s32.totalorder %s87, 0
      %p749 = por %p747, %p748
      %s751 = sadd.s32 %s750, 1
      %p754 = scmp.eq.s32.totalorder %s81, 1
      %p755 = scmp.ne.s32.totalorder %s750, %s752
      %p756 = scmp.eq.s32.totalorder %s81, 0
      %p757 = por %p755, %p756
      %p758 = scmp.ne.s32.totalorder %s750, %s752
      %p759 = scmp.eq.s32.totalorder %s86, 1
      %p760 = por %p758, %p759
      %p761 = scmp.ne.s32.totalorder %s752, %s753
      %p762 = scmp.eq.s32.totalorder %s86, 0
      %p763 = por %p761, %p762
      %p764 = scmp.ne.s32.totalorder %s752, %s753
      %p765 = scmp.eq.s32.totalorder %s87, 1
      %p766 = por %p764, %p765
      %p768 = scmp.ne.s32.totalorder %s753, %s767
      %p769 = scmp.eq.s32.totalorder %s87, 0
      %p770 = por %p768, %p769
      %s772 = sadd.s32 %s771, 1
      %p775 = scmp.eq.s32.totalorder %s81, 1
      %p776 = scmp.ne.s32.totalorder %s771, %s773
      %p777 = scmp.eq.s32.totalorder %s81, 0
      %p778 = por %p776, %p777
      %p779 = scmp.ne.s32.totalorder %s771, %s773
      %p780 = scmp.eq.s32.totalorder %s86, 1
      %p781 = por %p779, %p780
      %p782 = scmp.ne.s32.totalorder %s773, %s774
      %p783 = scmp.eq.s32.totalorder %s86, 0
      %p784 = por %p782, %p783
      %p785 = scmp.ne.s32.totalorder %s773, %s774
      %p786 = scmp.eq.s32.totalorder %s87, 1
      %p787 = por %p785, %p786
      %p789 = scmp.ne.s32.totalorder %s774, %s788
      %p790 = scmp.eq.s32.totalorder %s87, 0
      %p791 = por %p789, %p790
      %s793 = sadd.s32 %s792, 1
      %p796 = scmp.eq.s32.totalorder %s81, 1
      %p797 = scmp.ne.s32.totalorder %s792, %s794
      %p798 = scmp.eq.s32.totalorder %s81, 0
      %p799 = por %p797, %p798
      %p800 = scmp.ne.s32.totalorder %s792, %s794
      %p801 = scmp.eq.s32.totalorder %s86, 1
      %p802 = por %p800, %p801
      %p803 = scmp.ne.s32.totalorder %s794, %s795
      %p804 = scmp.eq.s32.totalorder %s86, 0
      %p805 = por %p803, %p804
      %p806 = scmp.ne.s32.totalorder %s794, %s795
      %p807 = scmp.eq.s32.totalorder %s87, 1
      %p808 = por %p806, %p807
      %p810 = scmp.ne.s32.totalorder %s795, %s809
      %p811 = scmp.eq.s32.totalorder %s87, 0
      %p812 = por %p810, %p811
      %s814 = sadd.s32 %s813, 1
      %p817 = scmp.eq.s32.totalorder %s81, 1
      %p818 = scmp.ne.s32.totalorder %s813, %s815
      %p819 = scmp.eq.s32.totalorder %s81, 0
      %p820 = por %p818, %p819
      %p821 = scmp.ne.s32.totalorder %s813, %s815
      %p822 = scmp.eq.s32.totalorder %s86, 1
      %p823 = por %p821, %p822
      %p824 = scmp.ne.s32.totalorder %s815, %s816
      %p825 = scmp.eq.s32.totalorder %s86, 0
      %p826 = por %p824, %p825
      %p827 = scmp.ne.s32.totalorder %s815, %s816
      %p828 = scmp.eq.s32.totalorder %s87, 1
      %p829 = por %p827, %p828
      %p831 = scmp.ne.s32.totalorder %s816, %s830
      %p832 = scmp.eq.s32.totalorder %s87, 0
      %p833 = por %p831, %p832
      %s834 = ssub.s32 %s81, %s88
      %p835 = scmp.eq.s32.totalorder %s834, 0
      %s837 = sadd.s32 %s836, 1
      %s838 = scalar_select %p835, %s836, %s837
      %p841 = pneg %p835
      %p842 = scmp.eq.s32.totalorder %s81, 1
      %p843 = por %p841, %p842
      %p844 = scmp.ne.s32.totalorder %s836, %s839
      %p845 = scmp.eq.s32.totalorder %s81, 0
      %p846 = por %p844, %p845
      %p847 = scmp.ne.s32.totalorder %s836, %s839
      %p848 = scmp.eq.s32.totalorder %s86, 1
      %p849 = por %p847, %p848
      %p850 = scmp.ne.s32.totalorder %s839, %s840
      %p851 = scmp.eq.s32.totalorder %s86, 0
      %p852 = por %p850, %p851
      %p853 = scmp.ne.s32.totalorder %s839, %s840
      %p854 = scmp.eq.s32.totalorder %s87, 1
      %p855 = por %p853, %p854
      %p857 = scmp.ne.s32.totalorder %s840, %s856
      %p858 = scmp.eq.s32.totalorder %s87, 0
      %p859 = por %p857, %p858
      %p860 = scmp.le.s32.totalorder 1, %s81
      %p861 = scmp.lt.s32.totalorder %s81, 3
      %p862 = pnand %p860, %p861
      %p863 = pneg %p862
      // Predicated region
      $region9: #{transformer_forward.2} parent=5 // pred_check
        _
      $region10: #{transformer_forward.2} parent=5 // pred_check_branch
        %865 = sbr.rel (%p862) target = $region12
      $region11: #{transformer_forward.2} parent=5 // pred_region
        %s866 = ssub.s32 %s81, 1
        // Predicated region
        $region13: #{transformer_forward.2} parent=11 // pred_check
          %p867 = pneg %p154
        $region14: #{transformer_forward.2} parent=11 // pred_check_branch
          %869 = sbr.rel (%p867) target = $region16
        $region15: #{transformer_forward.2} parent=11 // pred_region
          _
        $region16: #{transformer_forward.2} parent=11 // pred_fallthru
          _
        // Predicated region
        $region17: #{transformer_forward.2} parent=11 // pred_check
          %p870 = pneg %p175
        $region18: #{transformer_forward.2} parent=11 // pred_check_branch
          %872 = sbr.rel (%p870) target = $region20
        $region19: #{transformer_forward.2} parent=11 // pred_region
          _
        $region20: #{transformer_forward.2} parent=11 // pred_fallthru
          _
        // Predicated region
        $region21: #{transformer_forward.2} parent=11 // pred_check
          %p873 = pneg %p196
        $region22: #{transformer_forward.2} parent=11 // pred_check_branch
          %875 = sbr.rel (%p873) target = $region24
        $region23: #{transformer_forward.2} parent=11 // pred_region
          _
        $region24: #{transformer_forward.2} parent=11 // pred_fallthru
          _
        // Predicated region
        $region25: #{transformer_forward.2} parent=11 // pred_check
          %p876 = pneg %p217
        $region26: #{transformer_forward.2} parent=11 // pred_check_branch
          %878 = sbr.rel (%p876) target = $region28
        $region27: #{transformer_forward.2} parent=11 // pred_region
          %s880 = ssub.s32 1024, 1024
          %881 = vsyncadd [#allocation3], %s880
          %s882 = sshll.u32 [#allocation2], 4
          %s883 = int_to_ptr.vmem [resolvable:$true] %s882
          %888 = dma.hbm_to_vmem [thread:$0]  %s11, 1024, %s883, [#allocation3], 64, 64, 4
        $region28: #{transformer_forward.2} parent=11 // pred_fallthru
          _
        // Predicated region
        $region29: #{transformer_forward.2} parent=11 // pred_check
          %p889 = pneg %p238
        $region30: #{transformer_forward.2} parent=11 // pred_check_branch
          %891 = sbr.rel (%p889) target = $region32
        $region31: #{transformer_forward.2} parent=11 // pred_region
          _
        $region32: #{transformer_forward.2} parent=11 // pred_fallthru
          _
        // Predicated region
        $region33: #{transformer_forward.2} parent=11 // pred_check
          %p892 = pneg %p259
        $region34: #{transformer_forward.2} parent=11 // pred_check_branch
          %894 = sbr.rel (%p892) target = $region36
        $region35: #{transformer_forward.2} parent=11 // pred_region
          _
        $region36: #{transformer_forward.2} parent=11 // pred_fallthru
          _
        // Predicated region
        $region37: #{transformer_forward.2} parent=11 // pred_check
          %p895 = pneg %p280
        $region38: #{transformer_forward.2} parent=11 // pred_check_branch
          %897 = sbr.rel (%p895) target = $region40
        $region39: #{transformer_forward.2} parent=11 // pred_region
          _
        $region40: #{transformer_forward.2} parent=11 // pred_fallthru
          _
        // Predicated region
        $region41: #{transformer_forward.2} parent=11 // pred_check
          %p898 = pneg %p301
        $region42: #{transformer_forward.2} parent=11 // pred_check_branch
          %900 = sbr.rel (%p898) target = $region44
        $region43: #{transformer_forward.2} parent=11 // pred_region
          _
        $region44: #{transformer_forward.2} parent=11 // pred_fallthru
          _
        // Predicated region
        $region45: #{transformer_forward.2} parent=11 // pred_check
          %p901 = pneg %p322
        $region46: #{transformer_forward.2} parent=11 // pred_check_branch
          %903 = sbr.rel (%p901) target = $region48
        $region47: #{transformer_forward.2} parent=11 // pred_region
          _
        $region48: #{transformer_forward.2} parent=11 // pred_fallthru
          _
        // Predicated region
        $region49: #{transformer_forward.2} parent=11 // pred_check
          %p904 = pneg %p343
        $region50: #{transformer_forward.2} parent=11 // pred_check_branch
          %906 = sbr.rel (%p904) target = $region52
        $region51: #{transformer_forward.2} parent=11 // pred_region
          _
        $region52: #{transformer_forward.2} parent=11 // pred_fallthru
          _
        // Predicated region
        $region53: #{transformer_forward.2} parent=11 // pred_check
          %p907 = pneg %p364
        $region54: #{transformer_forward.2} parent=11 // pred_check_branch
          %909 = sbr.rel (%p907) target = $region56
        $region55: #{transformer_forward.2} parent=11 // pred_region
          _
        $region56: #{transformer_forward.2} parent=11 // pred_fallthru
          _
        // Predicated region
        $region57: #{transformer_forward.2} parent=11 // pred_check
          %p910 = pneg %p385
        $region58: #{transformer_forward.2} parent=11 // pred_check_branch
          %912 = sbr.rel (%p910) target = $region60
        $region59: #{transformer_forward.2} parent=11 // pred_region
          _
        $region60: #{transformer_forward.2} parent=11 // pred_fallthru
          _
        // Predicated region
        $region61: #{transformer_forward.2} parent=11 // pred_check
          %p913 = pneg %p406
        $region62: #{transformer_forward.2} parent=11 // pred_check_branch
          %915 = sbr.rel (%p913) target = $region64
        $region63: #{transformer_forward.2} parent=11 // pred_region
          _
        $region64: #{transformer_forward.2} parent=11 // pred_fallthru
          _
        // Predicated region
        $region65: #{transformer_forward.2} parent=11 // pred_check
          %p916 = pneg %p427
        $region66: #{transformer_forward.2} parent=11 // pred_check_branch
          %918 = sbr.rel (%p916) target = $region68
        $region67: #{transformer_forward.2} parent=11 // pred_region
          _
        $region68: #{transformer_forward.2} parent=11 // pred_fallthru
          _
        // Predicated region
        $region69: #{transformer_forward.2} parent=11 // pred_check
          %p919 = pneg %p448
        $region70: #{transformer_forward.2} parent=11 // pred_check_branch
          %921 = sbr.rel (%p919) target = $region72
        $region71: #{transformer_forward.2} parent=11 // pred_region
          _
        $region72: #{transformer_forward.2} parent=11 // pred_fallthru
          _
        // Predicated region
        $region73: #{transformer_forward.2} parent=11 // pred_check
          %p922 = pneg %p469
        $region74: #{transformer_forward.2} parent=11 // pred_check_branch
          %924 = sbr.rel (%p922) target = $region76
        $region75: #{transformer_forward.2} parent=11 // pred_region
          %s926 = ssub.s32 1024, 1024
          %927 = vsyncadd [#allocation5], %s926
          %s928 = sshll.u32 [#allocation4], 4
          %s929 = int_to_ptr.vmem [resolvable:$true] %s928
          %934 = dma.hbm_to_vmem [thread:$0]  %s35, 1024, %s929, [#allocation5], 64, 64, 4
        $region76: #{transformer_forward.2} parent=11 // pred_fallthru
          _
        // Predicated region
        $region77: #{transformer_forward.2} parent=11 // pred_check
          %p935 = pneg %p490
        $region78: #{transformer_forward.2} parent=11 // pred_check_branch
          %937 = sbr.rel (%p935) target = $region80
        $region79: #{transformer_forward.2} parent=11 // pred_region
          _
        $region80: #{transformer_forward.2} parent=11 // pred_fallthru
          _
        // Predicated region
        $region81: #{transformer_forward.2} parent=11 // pred_check
          %p938 = pneg %p511
        $region82: #{transformer_forward.2} parent=11 // pred_check_branch
          %940 = sbr.rel (%p938) target = $region84
        $region83: #{transformer_forward.2} parent=11 // pred_region
          _
        $region84: #{transformer_forward.2} parent=11 // pred_fallthru
          _
        // Predicated region
        $region85: #{transformer_forward.2} parent=11 // pred_check
          %p941 = pneg %p532
        $region86: #{transformer_forward.2} parent=11 // pred_check_branch
          %943 = sbr.rel (%p941) target = $region88
        $region87: #{transformer_forward.2} parent=11 // pred_region
          _
        $region88: #{transformer_forward.2} parent=11 // pred_fallthru
          _
        // Predicated region
        $region89: #{transformer_forward.2} parent=11 // pred_check
          %p944 = pneg %p553
        $region90: #{transformer_forward.2} parent=11 // pred_check_branch
          %946 = sbr.rel (%p944) target = $region92
        $region91: #{transformer_forward.2} parent=11 // pred_region
          %s948 = ssub.s32 1024, 1024
          %949 = vsyncadd [#allocation5], %s948
          %s950 = sshll.u32 [#allocation6], 4
          %s951 = int_to_ptr.vmem [resolvable:$true] %s950
          %956 = dma.hbm_to_vmem [thread:$0]  %s43, 1024, %s951, [#allocation5], 64, 64, 4
        $region92: #{transformer_forward.2} parent=11 // pred_fallthru
          _
        // Predicated region
        $region93: #{transformer_forward.2} parent=11 // pred_check
          %p957 = pneg %p574
        $region94: #{transformer_forward.2} parent=11 // pred_check_branch
          %959 = sbr.rel (%p957) target = $region96
        $region95: #{transformer_forward.2} parent=11 // pred_region
          _
        $region96: #{transformer_forward.2} parent=11 // pred_fallthru
          _
        // Predicated region
        $region97: #{transformer_forward.2} parent=11 // pred_check
          %p960 = pneg %p595
        $region98: #{transformer_forward.2} parent=11 // pred_check_branch
          %962 = sbr.rel (%p960) target = $region100
        $region99: #{transformer_forward.2} parent=11 // pred_region
          _
        $region100: #{transformer_forward.2} parent=11 // pred_fallthru
          _
        // Predicated region
        $region101: #{transformer_forward.2} parent=11 // pred_check
          %p963 = pneg %p616
        $region102: #{transformer_forward.2} parent=11 // pred_check_branch
          %965 = sbr.rel (%p963) target = $region104
        $region103: #{transformer_forward.2} parent=11 // pred_region
          _
        $region104: #{transformer_forward.2} parent=11 // pred_fallthru
          _
        // Predicated region
        $region105: #{transformer_forward.2} parent=11 // pred_check
          %p966 = pneg %p637
        $region106: #{transformer_forward.2} parent=11 // pred_check_branch
          %968 = sbr.rel (%p966) target = $region108
        $region107: #{transformer_forward.2} parent=11 // pred_region
          %s970 = ssub.s32 1024, 1024
          %971 = vsyncadd [#allocation8], %s970
          %s972 = sshll.u32 [#allocation7], 4
          %s973 = int_to_ptr.vmem [resolvable:$true] %s972
          %978 = dma.hbm_to_vmem [thread:$0]  %s51, 1024, %s973, [#allocation8], 64, 64, 4
        $region108: #{transformer_forward.2} parent=11 // pred_fallthru
          _
        // Predicated region
        $region109: #{transformer_forward.2} parent=11 // pred_check
          %p979 = pneg %p658
        $region110: #{transformer_forward.2} parent=11 // pred_check_branch
          %981 = sbr.rel (%p979) target = $region112
        $region111: #{transformer_forward.2} parent=11 // pred_region
          _
        $region112: #{transformer_forward.2} parent=11 // pred_fallthru
          _
        // Predicated region
        $region113: #{transformer_forward.2} parent=11 // pred_check
          %p982 = pneg %p679
        $region114: #{transformer_forward.2} parent=11 // pred_check_branch
          %984 = sbr.rel (%p982) target = $region116
        $region115: #{transformer_forward.2} parent=11 // pred_region
          _
        $region116: #{transformer_forward.2} parent=11 // pred_fallthru
          _
        // Predicated region
        $region117: #{transformer_forward.2} parent=11 // pred_check
          %p985 = pneg %p700
        $region118: #{transformer_forward.2} parent=11 // pred_check_branch
          %987 = sbr.rel (%p985) target = $region120
        $region119: #{transformer_forward.2} parent=11 // pred_region
          _
        $region120: #{transformer_forward.2} parent=11 // pred_fallthru
          _
        // Predicated region
        $region121: #{transformer_forward.2} parent=11 // pred_check
          %p988 = pneg %p721
        $region122: #{transformer_forward.2} parent=11 // pred_check_branch
          %990 = sbr.rel (%p988) target = $region124
        $region123: #{transformer_forward.2} parent=11 // pred_region
          %s992 = ssub.s32 2048, 2048
          %993 = vsyncadd [#allocation8], %s992
          %s994 = sshll.u32 [#allocation9], 4
          %s995 = int_to_ptr.vmem [resolvable:$true] %s994
          %1000 = dma.hbm_to_vmem [thread:$0]  %s59, 2048, %s995, [#allocation8], 128, 128, 8
        $region124: #{transformer_forward.2} parent=11 // pred_fallthru
          _
        // Predicated region
        $region125: #{transformer_forward.2} parent=11 // pred_check
          %p1001 = pneg %p742
        $region126: #{transformer_forward.2} parent=11 // pred_check_branch
          %1003 = sbr.rel (%p1001) target = $region128
        $region127: #{transformer_forward.2} parent=11 // pred_region
          _
        $region128: #{transformer_forward.2} parent=11 // pred_fallthru
          _
        // Predicated region
        $region129: #{transformer_forward.2} parent=11 // pred_check
          %p1004 = pneg %p763
        $region130: #{transformer_forward.2} parent=11 // pred_check_branch
          %1006 = sbr.rel (%p1004) target = $region132
        $region131: #{transformer_forward.2} parent=11 // pred_region
          %s1008 = ssub.s32 2048, 2048
          %1009 = vsyncadd [#allocation11], %s1008
          %s1010 = sshll.u32 [#allocation10], 4
          %s1011 = int_to_ptr.vmem [resolvable:$true] %s1010
          %1016 = dma.hbm_to_vmem [thread:$0]  %s63, 2048, %s1011, [#allocation11], 64, 64, 4
        $region132: #{transformer_forward.2} parent=11 // pred_fallthru
          _
        // Predicated region
        $region133: #{transformer_forward.2} parent=11 // pred_check
          %p1017 = pneg %p784
        $region134: #{transformer_forward.2} parent=11 // pred_check_branch
          %1019 = sbr.rel (%p1017) target = $region136
        $region135: #{transformer_forward.2} parent=11 // pred_region
          _
        $region136: #{transformer_forward.2} parent=11 // pred_fallthru
          _
        // Predicated region
        $region137: #{transformer_forward.2} parent=11 // pred_check
          %p1020 = pneg %p805
        $region138: #{transformer_forward.2} parent=11 // pred_check_branch
          %1022 = sbr.rel (%p1020) target = $region140
        $region139: #{transformer_forward.2} parent=11 // pred_region
          _
        $region140: #{transformer_forward.2} parent=11 // pred_fallthru
          _
        // Predicated region
        $region141: #{transformer_forward.2} parent=11 // pred_check
          %p1023 = pneg %p826
        $region142: #{transformer_forward.2} parent=11 // pred_check_branch
          %1025 = sbr.rel (%p1023) target = $region144
        $region143: #{transformer_forward.2} parent=11 // pred_region
          _
        $region144: #{transformer_forward.2} parent=11 // pred_fallthru
          _
      $region12: #{transformer_forward.2} parent=5 // pred_fallthru
        _
      %p1026 = scmp.lt.s32.totalorder %s81, 2
      // Predicated region
      $region145: #{transformer_forward.2} parent=5 // pred_check
        %p1027 = pneg %p1026
      $region146: #{transformer_forward.2} parent=5 // pred_check_branch
        %1029 = sbr.rel (%p1027) target = $region148
      $region147: #{transformer_forward.2} parent=5 // pred_region
        // Predicated region
        $region149: #{transformer_forward.2} parent=147 // pred_check
          %p1030 = pneg %p101
        $region150: #{transformer_forward.2} parent=147 // pred_check_branch
          %1032 = sbr.rel (%p1030) target = $region152
        $region151: #{transformer_forward.2} parent=147 // pred_region
          %s1033 = smul.u32 2, %s81
          %p1034 = scmp.lt.s32.totalorder %s1033, 3
          %s1035 = scalar_select %p1034, %s1033, 3
          %s1036 = smul.addr %s1035, 2
          %s1037 = smul.addr %s1036, 4
          %s1038 = scalar_lea.vmem %s1, %s1037
          %s1039 = smul.u32 2, %s81
        $region152: #{transformer_forward.2} parent=147 // pred_fallthru
          _
        // Predicated region
        $region153: #{transformer_forward.2} parent=147 // pred_check
          %p1040 = pneg %p127
        $region154: #{transformer_forward.2} parent=147 // pred_check_branch
          %1042 = sbr.rel (%p1040) target = $region156
        $region155: #{transformer_forward.2} parent=147 // pred_region
          %s1043 = smul.u32 2, %s81
          %p1044 = scmp.lt.s32.totalorder %s1043, 3
          %s1045 = scalar_select %p1044, %s1043, 3
          %s1046 = smul.addr %s1045, 2
          %s1047 = smul.addr %s1046, 4
          %s1048 = scalar_lea.vmem %s3, %s1047
          %s1049 = smul.u32 2, %s81
        $region156: #{transformer_forward.2} parent=147 // pred_fallthru
          _
      $region148: #{transformer_forward.2} parent=5 // pred_fallthru
        _
      %p1050 = scmp.le.s32.totalorder 1, %s81
      %p1051 = scmp.lt.s32.totalorder %s81, 3
      %p1052 = pnand %p1050, %p1051
      %p1053 = pneg %p1052
      // Predicated region
      $region157: #{transformer_forward.2} parent=5 // pred_check
        _
      $region158: #{transformer_forward.2} parent=5 // pred_check_branch
        %1055 = sbr.rel (%p1052) target = $region160
      $region159: #{transformer_forward.2} parent=5 // pred_region
        %s1056 = ssub.s32 %s81, 1
        // Predicated region
        $region161: #{transformer_forward.2} parent=159 // pred_check
          %p1057 = pneg %p217
        $region162: #{transformer_forward.2} parent=159 // pred_check_branch
          %1059 = sbr.rel (%p1057) target = $region164
        $region163: #{transformer_forward.2} parent=159 // pred_region
          %1060 = dma.done [#allocation3], 1024
        $region164: #{transformer_forward.2} parent=159 // pred_fallthru
          _
        // Predicated region
        $region165: #{transformer_forward.2} parent=159 // pred_check
          %p1061 = pneg %p469
        $region166: #{transformer_forward.2} parent=159 // pred_check_branch
          %1063 = sbr.rel (%p1061) target = $region168
        $region167: #{transformer_forward.2} parent=159 // pred_region
          %1064 = dma.done [#allocation5], 1024
        $region168: #{transformer_forward.2} parent=159 // pred_fallthru
          _
        // Predicated region
        $region169: #{transformer_forward.2} parent=159 // pred_check
          %p1065 = pneg %p553
        $region170: #{transformer_forward.2} parent=159 // pred_check_branch
          %1067 = sbr.rel (%p1065) target = $region172
        $region171: #{transformer_forward.2} parent=159 // pred_region
          %1068 = dma.done [#allocation5], 1024
        $region172: #{transformer_forward.2} parent=159 // pred_fallthru
          _
        // Predicated region
        $region173: #{transformer_forward.2} parent=159 // pred_check
          %p1069 = pneg %p637
        $region174: #{transformer_forward.2} parent=159 // pred_check_branch
          %1071 = sbr.rel (%p1069) target = $region176
        $region175: #{transformer_forward.2} parent=159 // pred_region
          %1072 = dma.done [#allocation8], 1024
        $region176: #{transformer_forward.2} parent=159 // pred_fallthru
          _
        // Predicated region
        $region177: #{transformer_forward.2} parent=159 // pred_check
          %p1073 = pneg %p721
        $region178: #{transformer_forward.2} parent=159 // pred_check_branch
          %1075 = sbr.rel (%p1073) target = $region180
        $region179: #{transformer_forward.2} parent=159 // pred_region
          %1076 = dma.done [#allocation8], 2048
        $region180: #{transformer_forward.2} parent=159 // pred_fallthru
          _
        // Predicated region
        $region181: #{transformer_forward.2} parent=159 // pred_check
          %p1077 = pneg %p763
        $region182: #{transformer_forward.2} parent=159 // pred_check_branch
          %1079 = sbr.rel (%p1077) target = $region184
        $region183: #{transformer_forward.2} parent=159 // pred_region
          %1080 = dma.done [#allocation11], 2048
        $region184: #{transformer_forward.2} parent=159 // pred_fallthru
          _
        %s1081 = smul.u32 2, %s86
        %p1082 = scmp.lt.s32.totalorder %s1081, 3
        %s1083 = scalar_select %p1082, %s1081, 3
        %s1084 = smul.addr %s1083, 2
        %s1085 = smul.addr %s1084, 4
        %s1086 = scalar_lea.vmem %s1, %s1085
        %p1087 = pneg %p107
        %p1088 = pneg %p104
        %s1089 = smul.u32 2, %s86
        %p1090 = scmp.lt.s32.totalorder %s1089, 3
        %s1091 = scalar_select %p1090, %s1089, 3
        %s1092 = smul.addr %s1091, 2
        %s1093 = smul.addr %s1092, 4
        %s1094 = scalar_lea.vmem %s3, %s1093
        %p1095 = pneg %p133
        %p1096 = pneg %p130
        %p1097 = pneg %p154
        %p1098 = pneg %p151
        %p1099 = pneg %p175
        %p1100 = pneg %p172
        %p1101 = pneg %p196
        %p1102 = pneg %p193
        %p1103 = pneg %p217
        %p1104 = pneg %p214
        %p1105 = pneg %p238
        %p1106 = pneg %p235
        %p1107 = pneg %p259
        %p1108 = pneg %p256
        %p1109 = pneg %p280
        %p1110 = pneg %p277
        %p1111 = pneg %p301
        %p1112 = pneg %p298
        %p1113 = pneg %p322
        %p1114 = pneg %p319
        %p1115 = pneg %p343
        %p1116 = pneg %p340
        %p1117 = pneg %p364
        %p1118 = pneg %p361
        %p1119 = pneg %p385
        %p1120 = pneg %p382
        %p1121 = pneg %p406
        %p1122 = pneg %p403
        %p1123 = pneg %p427
        %p1124 = pneg %p424
        %p1125 = pneg %p448
        %p1126 = pneg %p445
        %p1127 = pneg %p469
        %p1128 = pneg %p466
        %p1129 = pneg %p490
        %p1130 = pneg %p487
        %p1131 = pneg %p511
        %p1132 = pneg %p508
        %p1133 = pneg %p532
        %p1134 = pneg %p529
        %p1135 = pneg %p553
        %p1136 = pneg %p550
        %p1137 = pneg %p574
        %p1138 = pneg %p571
        %p1139 = pneg %p595
        %p1140 = pneg %p592
        %p1141 = pneg %p616
        %p1142 = pneg %p613
        %p1143 = pneg %p637
        %p1144 = pneg %p634
        %p1145 = pneg %p658
        %p1146 = pneg %p655
        %p1147 = pneg %p679
        %p1148 = pneg %p676
        %p1149 = pneg %p700
        %p1150 = pneg %p697
        %p1151 = pneg %p721
        %p1152 = pneg %p718
        %p1153 = pneg %p742
        %p1154 = pneg %p739
        %p1155 = pneg %p763
        %p1156 = pneg %p760
        %p1157 = pneg %p784
        %p1158 = pneg %p781
        %p1159 = pneg %p805
        %p1160 = pneg %p802
        %p1161 = pneg %p826
        %p1162 = pneg %p823
        %p1163 = pneg %p852
        %p1164 = pneg %p849
        %s1165 = smul.u32 4, %s86
        %p1166 = scmp.lt.s32.totalorder %s1165, 7
        %s1167 = scalar_select %p1166, %s1165, 7
        %s1168 = smul.addr %s1167, 4
        %s1169 = scalar_lea.vmem %s71, %s1168
        %s1170 = smul.u32 2, %s86
        %p1171 = scmp.lt.s32.totalorder %s1170, 3
        %s1172 = scalar_select %p1171, %s1170, 3
        %s1173 = smul.addr %s1172, 2
        %s1174 = smul.addr %s1173, 4
        %s1175 = scalar_lea.vmem %s1, %s1174
        %s1176 = smul.u32 2, %s86
        %s1177 = smul.u32 2, %s86
        %p1178 = scmp.lt.s32.totalorder %s1177, 3
        %s1179 = scalar_select %p1178, %s1177, 3
        %s1180 = smul.addr %s1179, 2
        %s1181 = smul.addr %s1180, 4
        %s1182 = scalar_lea.vmem %s3, %s1181
        %s1183 = smul.u32 2, %s86
        %s1184 = smul.u32 4, %s86
        %p1185 = scmp.lt.s32.totalorder %s1184, 7
        %s1186 = scalar_select %p1185, %s1184, 7
        %s1187 = smul.addr %s1186, 4
        %s1188 = scalar_lea.vmem %s71, %s1187
        %s1189 = smul.u32 4, %s86
        %v1191 = vld [vmem:[%s5] sm:$0xff]
        %v1192 = vld [vmem:[%s5 + $0x8] sm:$0xff]
        %v1193 = vld [vmem:[%s1175] sm:$0xf]
        %v1194 = vld [vmem:[%s1175 + $0x4] sm:$0xf]
        %v1195 = vld [vmem:[%s1175 + $0x8] sm:$0xf]
        %v1196 = vld [vmem:[%s1175 + $0xc] sm:$0xf]
        %v1197 = vunpack.c.l.bf16 %v1193
        %v1198 = vunpack.c.l.bf16 %v1194
        %v1199 = vunpack.c.l.bf16 %v1195
        %v1200 = vunpack.c.l.bf16 %v1196
        %v1201 = vadd.f32 %v1197, %v1191
        %v1202 = vadd.f32 %v1198, %v1192
        %v1203 = vadd.f32 %v1199, %v1191
        %v1204 = vadd.f32 %v1200, %v1192
        %v1205 = vpack.c.bf16 %v1202, %v1201
        %v1206 = vpack.c.bf16 %v1204, %v1203
        %v1207 = vld [vmem:[%s7] sm:$0xff]
        %v1208 = vld [vmem:[%s7 + $0x8] sm:$0xf]
        %v1209 = vld [vmem:[%s7 + $0xc] sm:$0xff]
        %v1210 = vld [vmem:[%s7 + $0x14] sm:$0xf]
        %v1211 = vld [vmem:[%s7 + $0x18] sm:$0xff]
        %v1212 = vld [vmem:[%s7 + $0x20] sm:$0xf]
        %v1213 = vld [vmem:[%s7 + $0x24] sm:$0xff]
        %v1214 = vld [vmem:[%s7 + $0x2c] sm:$0xf]
        %v1215 = vld [vmem:[%s7 + $0x30] sm:$0xff]
        %v1216 = vld [vmem:[%s7 + $0x38] sm:$0xf]
        %v1217 = vld [vmem:[%s7 + $0x3c] sm:$0xff]
        %v1218 = vld [vmem:[%s7 + $0x44] sm:$0xf]
        %v1219 = vld [vmem:[%s7 + $0x48] sm:$0xff]
        %v1220 = vld [vmem:[%s7 + $0x50] sm:$0xf]
        %v1221 = vld [vmem:[%s7 + $0x54] sm:$0xff]
        %v1222 = vld [vmem:[%s7 + $0x5c] sm:$0xf]
        %v1223 = vld [vmem:[%s7 + $0x60] sm:$0xff]
        %v1224 = vld [vmem:[%s7 + $0x68] sm:$0xf]
        %v1225 = vld [vmem:[%s7 + $0x6c] sm:$0xff]
        %v1226 = vld [vmem:[%s7 + $0x74] sm:$0xf]
        %v1227 = vld [vmem:[%s7 + $0x78] sm:$0xff]
        %v1228 = vld [vmem:[%s7 + $0x80] sm:$0xf]
        %v1229 = vld [vmem:[%s7 + $0x84] sm:$0xff]
        %v1230 = vld [vmem:[%s7 + $0x8c] sm:$0xf]
        %v1231 = vld [vmem:[%s7 + $0x90] sm:$0xff]
        %v1232 = vld [vmem:[%s7 + $0x98] sm:$0xf]
        %v1233 = vld [vmem:[%s7 + $0x9c] sm:$0xff]
        %v1234 = vld [vmem:[%s7 + $0xa4] sm:$0xf]
        %v1235 = vld [vmem:[%s7 + $0xa8] sm:$0xff]
        %v1236 = vld [vmem:[%s7 + $0xb0] sm:$0xf]
        %v1237 = vld [vmem:[%s7 + $0xb4] sm:$0xff]
        %v1238 = vld [vmem:[%s7 + $0xbc] sm:$0xf]
        %v1239 = vld [vmem:[%s9] sm:$0x7]
        %v1241 = vlaneseq
        %v1242 = vshrl.u32 %v1241, 7
        %v1243 = vsub.s32 0, %v1242
        %v1244 = vrot.slane %v1239, %v1243
        %v1245 = vlaneseq
        %v1246 = vshrl.u32 %v1245, 7
        %v1247 = vsub.s32 1, %v1246
        %v1248 = vrot.slane %v1239, %v1247
        %v1249 = vlaneseq
        %v1250 = vshrl.u32 %v1249, 7
        %v1251 = vsub.s32 2, %v1250
        %v1252 = vrot.slane %v1239, %v1251
        %v1288 = vunpack.c.l.b16 %v1207
        %v1289 = vunpack.c.h.b16 %v1207
        %v1290 = vunpack.c.l.b16 %v1208
        %v1291 = vunpack.c.l.b16 %v1209
        %v1292 = vunpack.c.h.b16 %v1209
        %v1293 = vunpack.c.l.b16 %v1210
        %v1294 = vunpack.c.l.b16 %v1211
        %v1295 = vunpack.c.h.b16 %v1211
        %v1296 = vunpack.c.l.b16 %v1212
        %v1297 = vunpack.c.l.b16 %v1213
        %v1298 = vunpack.c.h.b16 %v1213
        %v1299 = vunpack.c.l.b16 %v1214
        %v1300 = vunpack.c.l.b16 %v1215
        %v1301 = vunpack.c.h.b16 %v1215
        %v1302 = vunpack.c.l.b16 %v1216
        %v1303 = vunpack.c.l.b16 %v1217
        %v1304 = vunpack.c.h.b16 %v1217
        %v1305 = vunpack.c.l.b16 %v1218
        %v1306 = vunpack.c.l.b16 %v1219
        %v1307 = vunpack.c.h.b16 %v1219
        %v1308 = vunpack.c.l.b16 %v1220
        %v1309 = vunpack.c.l.b16 %v1221
        %v1310 = vunpack.c.h.b16 %v1221
        %v1311 = vunpack.c.l.b16 %v1222
        %v1312 = vunpack.c.l.b16 %v1223
        %v1313 = vunpack.c.h.b16 %v1223
        %v1314 = vunpack.c.l.b16 %v1224
        %v1315 = vunpack.c.l.b16 %v1225
        %v1316 = vunpack.c.h.b16 %v1225
        %v1317 = vunpack.c.l.b16 %v1226
        %v1318 = vunpack.c.l.b16 %v1227
        %v1319 = vunpack.c.h.b16 %v1227
        %v1320 = vunpack.c.l.b16 %v1228
        %v1321 = vunpack.c.l.b16 %v1229
        %v1322 = vunpack.c.h.b16 %v1229
        %v1323 = vunpack.c.l.b16 %v1230
        %v1324 = vunpack.c.l.b16 %v1231
        %v1325 = vunpack.c.h.b16 %v1231
        %v1326 = vunpack.c.l.b16 %v1232
        %v1327 = vunpack.c.l.b16 %v1233
        %v1328 = vunpack.c.h.b16 %v1233
        %v1329 = vunpack.c.l.b16 %v1234
        %v1330 = vunpack.c.l.b16 %v1235
        %v1331 = vunpack.c.h.b16 %v1235
        %v1332 = vunpack.c.l.b16 %v1236
        %v1333 = vunpack.c.l.b16 %v1237
        %v1334 = vunpack.c.h.b16 %v1237
        %v1335 = vunpack.c.l.b16 %v1238
        %v1336 = vpack.c.b16 %v1291, %v1288
        %v1337 = vpack.c.b16 %v1292, %v1289
        %v1338 = vpack.c.b16 %v1293, %v1290
        %v1339 = vpack.c.b16 %v1297, %v1294
        %v1340 = vpack.c.b16 %v1298, %v1295
        %v1341 = vpack.c.b16 %v1299, %v1296
        %v1342 = vpack.c.b16 %v1303, %v1300
        %v1343 = vpack.c.b16 %v1304, %v1301
        %v1344 = vpack.c.b16 %v1305, %v1302
        %v1345 = vpack.c.b16 %v1309, %v1306
        %v1346 = vpack.c.b16 %v1310, %v1307
        %v1347 = vpack.c.b16 %v1311, %v1308
        %v1348 = vpack.c.b16 %v1315, %v1312
        %v1349 = vpack.c.b16 %v1316, %v1313
        %v1350 = vpack.c.b16 %v1317, %v1314
        %v1351 = vpack.c.b16 %v1321, %v1318
        %v1352 = vpack.c.b16 %v1322, %v1319
        %v1353 = vpack.c.b16 %v1323, %v1320
        %v1354 = vpack.c.b16 %v1327, %v1324
        %v1355 = vpack.c.b16 %v1328, %v1325
        %v1356 = vpack.c.b16 %v1329, %v1326
        %v1357 = vpack.c.b16 %v1333, %v1330
        %v1358 = vpack.c.b16 %v1334, %v1331
        %v1359 = vpack.c.b16 %v1335, %v1332
        %1384 = vmatprep.subr.bf16.mxu0 %v1337
        %1385 = vmatpush1.bf16.msra.mxu0 %v1336
        %1386 = vmatprep.subr.bf16.mxu0 %v1340
        %1387 = vmatpush1.bf16.msra.mxu0 %v1339
        %1388 = vmatprep.subr.bf16.mxu0 %v1343
        %1389 = vmatpush1.bf16.msra.mxu0 %v1342
        %1390 = vmatprep.subr.bf16.mxu0 %v1346
        %1391 = vmatpush1.bf16.msra.mxu0 %v1345
        %1392 = vmatprep.subr.bf16.mxu0 %v1349
        %1393 = vmatpush1.bf16.msra.mxu0 %v1348
        %1394 = vmatprep.subr.bf16.mxu0 %v1352
        %1395 = vmatpush1.bf16.msra.mxu0 %v1351
        %1396 = vmatprep.subr.bf16.mxu0 %v1355
        %1397 = vmatpush1.bf16.msra.mxu0 %v1354
        %1398 = vmatprep.subr.bf16.mxu0 %v1358
        %1399 = vmatpush1.bf16.msra.mxu0 %v1357
        %1400 = vmatprep.subr.bf16.mxu0 0
        %1401 = vmatpush1.bf16.msra.mxu0 0
        %1402 = vmatprep.subr.bf16.mxu0 0
        %1403 = vmatpush1.bf16.msra.mxu0 0
        %1404 = vmatprep.subr.bf16.mxu0 0
        %1405 = vmatpush1.bf16.msra.mxu0 0
        %1406 = vmatprep.subr.bf16.mxu0 0
        %1407 = vmatpush1.bf16.msra.mxu0 0
        %1408 = vmatprep.subr.bf16.mxu0 0
        %1409 = vmatpush1.bf16.msra.mxu0 0
        %1410 = vmatprep.subr.bf16.mxu0 0
        %1411 = vmatpush1.bf16.msra.mxu0 0
        %1412 = vmatprep.subr.bf16.mxu0 0
        %1413 = vmatpush1.bf16.msra.mxu0 0
        %1414 = vmatprep.subr.bf16.mxu0 0
        %1415 = vmatpush1.bf16.msra.mxu0 0
        %1416 = vmatprep.mubr.bf16.mxu0 0
        %1417 = vmatmul.mubr.bf16.gmra.mrb[0].mxu0 %v1205
        %v1418 = vpop.f32.mrb[0].mxu0
        %v1419 = vadd.f32 %v1244, %v1418
        %v1420 = vpop.f32.mrb[0].mxu0
        %v1421 = vadd.f32 %v1248, %v1420
        %v1422 = vpop.f32.mrb[0].mxu0
        %v1423 = vadd.f32 %v1244, %v1422
        %v1424 = vpop.f32.mrb[0].mxu0
        %v1425 = vadd.f32 %v1248, %v1424
        %1426 = vmatprep.mubr.bf16.mxu0 0
        %1427 = vmatmul.mubr.bf16.gmra.mrb[0].mxu0 %v1206
        %v1428 = vpop.f32.mrb[0].mxu0
        %v1429 = vadd.f32 %v1244, %v1428
        %v1430 = vpop.f32.mrb[0].mxu0
        %v1431 = vadd.f32 %v1248, %v1430
        %v1432 = vpop.f32.mrb[0].mxu0
        %v1433 = vadd.f32 %v1244, %v1432
        %v1434 = vpop.f32.mrb[0].mxu0
        %v1435 = vadd.f32 %v1248, %v1434
        %1436 = vdwg.mxu0
        %1437 = vmatprep.subr.bf16.mxu0 0
        %1438 = vmatpush1.bf16.msra.mxu0 %v1338
        %1439 = vmatprep.subr.bf16.mxu0 0
        %1440 = vmatpush1.bf16.msra.mxu0 %v1341
        %1441 = vmatprep.subr.bf16.mxu0 0
        %1442 = vmatpush1.bf16.msra.mxu0 %v1344
        %1443 = vmatprep.subr.bf16.mxu0 0
        %1444 = vmatpush1.bf16.msra.mxu0 %v1347
        %1445 = vmatprep.subr.bf16.mxu0 0
        %1446 = vmatpush1.bf16.msra.mxu0 %v1350
        %1447 = vmatprep.subr.bf16.mxu0 0
        %1448 = vmatpush1.bf16.msra.mxu0 %v1353
        %1449 = vmatprep.subr.bf16.mxu0 0
        %1450 = vmatpush1.bf16.msra.mxu0 %v1356
        %1451 = vmatprep.subr.bf16.mxu0 0
        %1452 = vmatpush1.bf16.msra.mxu0 %v1359
        %1453 = vmatprep.subr.bf16.mxu0 0
        %1454 = vmatpush1.bf16.msra.mxu0 0
        %1455 = vmatprep.subr.bf16.mxu0 0
        %1456 = vmatpush1.bf16.msra.mxu0 0
        %1457 = vmatprep.subr.bf16.mxu0 0
        %1458 = vmatpush1.bf16.msra.mxu0 0
        %1459 = vmatprep.subr.bf16.mxu0 0
        %1460 = vmatpush1.bf16.msra.mxu0 0
        %1461 = vmatprep.subr.bf16.mxu0 0
        %1462 = vmatpush1.bf16.msra.mxu0 0
        %1463 = vmatprep.subr.bf16.mxu0 0
        %1464 = vmatpush1.bf16.msra.mxu0 0
        %1465 = vmatprep.subr.bf16.mxu0 0
        %1466 = vmatpush1.bf16.msra.mxu0 0
        %1467 = vmatprep.subr.bf16.mxu0 0
        %1468 = vmatpush1.bf16.msra.mxu0 0
        %1469 = vmatprep.mubr.bf16.mxu0 0
        %1470 = vmatmul.mubr.bf16.gmra.mrb[0].mxu0 %v1205
        %v1471 = vpop.f32.mrb[0].mxu0
        %v1472 = vadd.f32 %v1252, %v1471
        %v1473 = vpop.f32.mrb[0].mxu0
        %v1474 = vpop.f32.mrb[0].mxu0
        %v1475 = vadd.f32 %v1252, %v1474
        %v1476 = vpop.f32.mrb[0].mxu0
        %1477 = vmatprep.mubr.bf16.mxu0 0
        %1478 = vmatmul.mubr.bf16.gmra.mrb[0].mxu0 %v1206
        %v1479 = vpop.f32.mrb[0].mxu0
        %v1480 = vadd.f32 %v1252, %v1479
        %v1481 = vpop.f32.mrb[0].mxu0
        %v1482 = vpop.f32.mrb[0].mxu0
        %v1483 = vadd.f32 %v1252, %v1482
        %v1484 = vpop.f32.mrb[0].mxu0
        %1485 = vdwg.mxu0
        %v1486 = vpack.c.bf16 %v1423, %v1419
        %v1487 = vpack.c.bf16 %v1433, %v1429
        %v1488 = vpack.c.bf16 %v1425, %v1421
        %v1489 = vpack.c.bf16 %v1435, %v1431
        %1490 = vmatprep.subr.bf16.mxu0 0
        %1491 = vmatpush1.bf16.xpose.msra.mxu0 %v1488
        %1492 = vmatprep.subr.bf16.mxu0 0
        %1493 = vmatpush1.bf16.xpose.msra.mxu0 0
        %1494 = vmatprep.subr.bf16.mxu0 0
        %1495 = vmatpush1.bf16.xpose.msra.mxu0 0
        %1496 = vmatprep.subr.bf16.mxu0 0
        %1497 = vmatpush1.bf16.xpose.msra.mxu0 0
        %1498 = vmatprep.subr.bf16.mxu0 0
        %1499 = vmatpush1.bf16.xpose.msra.mxu0 0
        %1500 = vmatprep.subr.bf16.mxu0 0
        %1501 = vmatpush1.bf16.xpose.msra.mxu0 0
        %1502 = vmatprep.subr.bf16.mxu0 0
        %1503 = vmatpush1.bf16.xpose.msra.mxu0 0
        %1504 = vmatprep.subr.bf16.mxu0 0
        %1505 = vmatpush1.bf16.xpose.msra.mxu0 0
        %1506 = vmatprep.subr.bf16.mxu0 0
        %1507 = vmatpush1.bf16.xpose.msra.mxu0 0
        %1508 = vmatprep.subr.bf16.mxu0 0
        %1509 = vmatpush1.bf16.xpose.msra.mxu0 0
        %1510 = vmatprep.subr.bf16.mxu0 0
        %1511 = vmatpush1.bf16.xpose.msra.mxu0 0
        %1512 = vmatprep.subr.bf16.mxu0 0
        %1513 = vmatpush1.bf16.xpose.msra.mxu0 0
        %1514 = vmatprep.subr.bf16.mxu0 0
        %1515 = vmatpush1.bf16.xpose.msra.mxu0 0
        %1516 = vmatprep.subr.bf16.mxu0 0
        %1517 = vmatpush1.bf16.xpose.msra.mxu0 0
        %1518 = vmatprep.subr.bf16.mxu0 0
        %1519 = vmatpush1.bf16.xpose.msra.mxu0 0
        %1520 = vmatprep.subr.bf16.mxu0 0
        %1521 = vmatpush1.bf16.xpose.msra.mxu0 0
        %1522 = vmatprep.mubr.bf16.mxu0 0
        %1523 = vmatmul.mubr.bf16.gmra.mrb[0].mxu0 %v1486
        %v1524 = vpop.f32.mrb[0].mxu0
        %v1525 = vadd.f32 0.0, %v1524
        %v1526 = vpop.f32.mrb[0].mxu0
        %v1527 = vpop.f32.mrb[0].mxu0
        %v1528 = vadd.f32 0.0, %v1527
        %v1529 = vpop.f32.mrb[0].mxu0
        %1530 = vdwg.mxu0
        %1531 = vmatprep.subr.bf16.mxu0 0
        %1532 = vmatpush1.bf16.xpose.msra.mxu0 %v1489
        %1533 = vmatprep.subr.bf16.mxu0 0
        %1534 = vmatpush1.bf16.xpose.msra.mxu0 0
        %1535 = vmatprep.subr.bf16.mxu0 0
        %1536 = vmatpush1.bf16.xpose.msra.mxu0 0
        %1537 = vmatprep.subr.bf16.mxu0 0
        %1538 = vmatpush1.bf16.xpose.msra.mxu0 0
        %1539 = vmatprep.subr.bf16.mxu0 0
        %1540 = vmatpush1.bf16.xpose.msra.mxu0 0
        %1541 = vmatprep.subr.bf16.mxu0 0
        %1542 = vmatpush1.bf16.xpose.msra.mxu0 0
        %1543 = vmatprep.subr.bf16.mxu0 0
        %1544 = vmatpush1.bf16.xpose.msra.mxu0 0
        %1545 = vmatprep.subr.bf16.mxu0 0
        %1546 = vmatpush1.bf16.xpose.msra.mxu0 0
        %1547 = vmatprep.subr.bf16.mxu0 0
        %1548 = vmatpush1.bf16.xpose.msra.mxu0 0
        %1549 = vmatprep.subr.bf16.mxu0 0
        %1550 = vmatpush1.bf16.xpose.msra.mxu0 0
        %1551 = vmatprep.subr.bf16.mxu0 0
        %1552 = vmatpush1.bf16.xpose.msra.mxu0 0
        %1553 = vmatprep.subr.bf16.mxu0 0
        %1554 = vmatpush1.bf16.xpose.msra.mxu0 0
        %1555 = vmatprep.subr.bf16.mxu0 0
        %1556 = vmatpush1.bf16.xpose.msra.mxu0 0
        %1557 = vmatprep.subr.bf16.mxu0 0
        %1558 = vmatpush1.bf16.xpose.msra.mxu0 0
        %1559 = vmatprep.subr.bf16.mxu0 0
        %1560 = vmatpush1.bf16.xpose.msra.mxu0 0
        %1561 = vmatprep.subr.bf16.mxu0 0
        %1562 = vmatpush1.bf16.xpose.msra.mxu0 0
        %1563 = vmatprep.mubr.bf16.mxu0 0
        %1564 = vmatmul.mubr.bf16.gmra.mrb[0].mxu0 %v1487
        %v1565 = vpop.f32.mrb[0].mxu0
        %v1566 = vadd.f32 0.0, %v1565
        %v1567 = vpop.f32.mrb[0].mxu0
        %v1568 = vpop.f32.mrb[0].mxu0
        %v1569 = vadd.f32 0.0, %v1568
        %v1570 = vpop.f32.mrb[0].mxu0
        %1571 = vdwg.mxu0
        %v1572 = vmul.f32 %v1525, 0.125
        %v1573 = vmul.f32 %v1528, 0.125
        %v1574 = vmul.f32 %v1566, 0.125
        %v1575 = vmul.f32 %v1569, 0.125
        %vm1576 = vcmask 130048
        %v1577 = vsel %vm1576, %v1572, -inf
        %1578 = vmax.xlane.f32.xlu0 %v1577
        %v1579 = vpop.xlane.xlu0 %1578
        %v1580 = vsel %vm1576, %v1573, -inf
        %1581 = vmax.xlane.f32.xlu0 %v1580
        %v1582 = vpop.xlane.xlu0 %1581
        %v1583 = vsel %vm1576, %v1574, -inf
        %1584 = vmax.xlane.f32.xlu0 %v1583
        %v1585 = vpop.xlane.xlu0 %1584
        %v1586 = vsel %vm1576, %v1575, -inf
        %1587 = vmax.xlane.f32.xlu0 %v1586
        %v1588 = vpop.xlane.xlu0 %1587
        %v1589 = vsub.f32 %v1572, %v1579
        %v1590 = vsub.f32 %v1573, %v1582
        %v1591 = vsub.f32 %v1574, %v1585
        %v1592 = vsub.f32 %v1575, %v1588
        %v1593 = vmul.f32 %v1589, 1.442695
        %v1594 = vpow.pop %v1593
        %v1595 = vmul.f32 %v1590, 1.442695
        %v1596 = vpow.pop %v1595
        %v1597 = vmul.f32 %v1591, 1.442695
        %v1598 = vpow.pop %v1597
        %v1599 = vmul.f32 %v1592, 1.442695
        %v1600 = vpow.pop %v1599
        %v1601 = vsel %vm1576, %v1594, 0.0
        %1602 = vadd.xlane.f32.xlu0 %v1601
        %v1603 = vpop.xlane.xlu0 %1602
        %v1604 = vsel %vm1576, %v1596, 0.0
        %1605 = vadd.xlane.f32.xlu0 %v1604
        %v1606 = vpop.xlane.xlu0 %1605
        %v1607 = vsel %vm1576, %v1598, 0.0
        %1608 = vadd.xlane.f32.xlu0 %v1607
        %v1609 = vpop.xlane.xlu0 %1608
        %v1610 = vsel %vm1576, %v1600, 0.0
        %1611 = vadd.xlane.f32.xlu0 %v1610
        %v1612 = vpop.xlane.xlu0 %1611
        %v1613 = vrcp.pop %v1603
        %v1614 = vrcp.pop %v1606
        %v1615 = vrcp.pop %v1609
        %v1616 = vrcp.pop %v1612
        %v1617 = vmul.f32 %v1594, %v1613
        %v1618 = vmul.f32 %v1596, %v1614
        %v1619 = vmul.f32 %v1598, %v1615
        %v1620 = vmul.f32 %v1600, %v1616
        %v1621 = vpack.c.bf16 %v1618, %v1617
        %v1622 = vpack.c.bf16 %v1620, %v1619
        %v1623 = vpack.c.bf16 %v1475, %v1472
        %v1624 = vpack.c.bf16 %v1483, %v1480
        %v1626 = vsel %vm1576, %v1621, 0
        %1628 = vmatprep.subr.bf16.mxu0 0
        %1629 = vmatpush1.bf16.msra.mxu0 %v1623
        %1630 = vmatprep.subr.bf16.mxu0 0
        %1631 = vmatpush1.bf16.msra.mxu0 0
        %1632 = vmatprep.subr.bf16.mxu0 0
        %1633 = vmatpush1.bf16.msra.mxu0 0
        %1634 = vmatprep.subr.bf16.mxu0 0
        %1635 = vmatpush1.bf16.msra.mxu0 0
        %1636 = vmatprep.subr.bf16.mxu0 0
        %1637 = vmatpush1.bf16.msra.mxu0 0
        %1638 = vmatprep.subr.bf16.mxu0 0
        %1639 = vmatpush1.bf16.msra.mxu0 0
        %1640 = vmatprep.subr.bf16.mxu0 0
        %1641 = vmatpush1.bf16.msra.mxu0 0
        %1642 = vmatprep.subr.bf16.mxu0 0
        %1643 = vmatpush1.bf16.msra.mxu0 0
        %1644 = vmatprep.subr.bf16.mxu0 0
        %1645 = vmatpush1.bf16.msra.mxu0 0
        %1646 = vmatprep.subr.bf16.mxu0 0
        %1647 = vmatpush1.bf16.msra.mxu0 0
        %1648 = vmatprep.subr.bf16.mxu0 0
        %1649 = vmatpush1.bf16.msra.mxu0 0
        %1650 = vmatprep.subr.bf16.mxu0 0
        %1651 = vmatpush1.bf16.msra.mxu0 0
        %1652 = vmatprep.subr.bf16.mxu0 0
        %1653 = vmatpush1.bf16.msra.mxu0 0
        %1654 = vmatprep.subr.bf16.mxu0 0
        %1655 = vmatpush1.bf16.msra.mxu0 0
        %1656 = vmatprep.subr.bf16.mxu0 0
        %1657 = vmatpush1.bf16.msra.mxu0 0
        %1658 = vmatprep.subr.bf16.mxu0 0
        %1659 = vmatpush1.bf16.msra.mxu0 0
        %1660 = vmatprep.mubr.bf16.mxu0 0
        %1661 = vmatmul.mubr.bf16.gmra.mrb[0].mxu0 %v1626
        %v1662 = vpop.f32.mrb[0].mxu0
        %v1663 = vadd.f32 0.0, %v1662
        %v1664 = vpop.f32.mrb[0].mxu0
        %v1665 = vpop.f32.mrb[0].mxu0
        %v1666 = vadd.f32 0.0, %v1665
        %v1667 = vpop.f32.mrb[0].mxu0
        %1668 = vdwg.mxu0
        %v1670 = vsel %vm1576, %v1622, 0
        %1672 = vmatprep.subr.bf16.mxu0 0
        %1673 = vmatpush1.bf16.msra.mxu0 %v1624
        %1674 = vmatprep.subr.bf16.mxu0 0
        %1675 = vmatpush1.bf16.msra.mxu0 0
        %1676 = vmatprep.subr.bf16.mxu0 0
        %1677 = vmatpush1.bf16.msra.mxu0 0
        %1678 = vmatprep.subr.bf16.mxu0 0
        %1679 = vmatpush1.bf16.msra.mxu0 0
        %1680 = vmatprep.subr.bf16.mxu0 0
        %1681 = vmatpush1.bf16.msra.mxu0 0
        %1682 = vmatprep.subr.bf16.mxu0 0
        %1683 = vmatpush1.bf16.msra.mxu0 0
        %1684 = vmatprep.subr.bf16.mxu0 0
        %1685 = vmatpush1.bf16.msra.mxu0 0
        %1686 = vmatprep.subr.bf16.mxu0 0
        %1687 = vmatpush1.bf16.msra.mxu0 0
        %1688 = vmatprep.subr.bf16.mxu0 0
        %1689 = vmatpush1.bf16.msra.mxu0 0
        %1690 = vmatprep.subr.bf16.mxu0 0
        %1691 = vmatpush1.bf16.msra.mxu0 0
        %1692 = vmatprep.subr.bf16.mxu0 0
        %1693 = vmatpush1.bf16.msra.mxu0 0
        %1694 = vmatprep.subr.bf16.mxu0 0
        %1695 = vmatpush1.bf16.msra.mxu0 0
        %1696 = vmatprep.subr.bf16.mxu0 0
        %1697 = vmatpush1.bf16.msra.mxu0 0
        %1698 = vmatprep.subr.bf16.mxu0 0
        %1699 = vmatpush1.bf16.msra.mxu0 0
        %1700 = vmatprep.subr.bf16.mxu0 0
        %1701 = vmatpush1.bf16.msra.mxu0 0
        %1702 = vmatprep.subr.bf16.mxu0 0
        %1703 = vmatpush1.bf16.msra.mxu0 0
        %1704 = vmatprep.mubr.bf16.mxu0 0
        %1705 = vmatmul.mubr.bf16.gmra.mrb[0].mxu0 %v1670
        %v1706 = vpop.f32.mrb[0].mxu0
        %v1707 = vadd.f32 0.0, %v1706
        %v1708 = vpop.f32.mrb[0].mxu0
        %v1709 = vpop.f32.mrb[0].mxu0
        %v1710 = vadd.f32 0.0, %v1709
        %v1711 = vpop.f32.mrb[0].mxu0
        %1712 = vdwg.mxu0
        %v1713 = vpack.c.bf16 %v1666, %v1663
        %v1714 = vpack.c.bf16 %v1710, %v1707
        %v1715 = vld [vmem:[#allocation2] sm:$0xf]
        %v1716 = vld [vmem:[#allocation2 + $0x4] sm:$0xf]
        %v1717 = vld [vmem:[#allocation2 + $0x8] sm:$0xf]
        %v1718 = vld [vmem:[#allocation2 + $0xc] sm:$0xf]
        %v1719 = vld [vmem:[#allocation2 + $0x10] sm:$0xf]
        %v1720 = vld [vmem:[#allocation2 + $0x14] sm:$0xf]
        %v1721 = vld [vmem:[#allocation2 + $0x18] sm:$0xf]
        %v1722 = vld [vmem:[#allocation2 + $0x1c] sm:$0xf]
        %v1723 = vld [vmem:[#allocation2 + $0x20] sm:$0xf]
        %v1724 = vld [vmem:[#allocation2 + $0x24] sm:$0xf]
        %v1725 = vld [vmem:[#allocation2 + $0x28] sm:$0xf]
        %v1726 = vld [vmem:[#allocation2 + $0x2c] sm:$0xf]
        %v1727 = vld [vmem:[#allocation2 + $0x30] sm:$0xf]
        %v1728 = vld [vmem:[#allocation2 + $0x34] sm:$0xf]
        %v1729 = vld [vmem:[#allocation2 + $0x38] sm:$0xf]
        %v1730 = vld [vmem:[#allocation2 + $0x3c] sm:$0xf]
        %v1731 = vld [vmem:[%s13] sm:$0x1]
        %v1733 = vlaneseq
        %v1734 = vshrl.u32 %v1733, 7
        %v1735 = vsub.s32 0, %v1734
        %v1736 = vrot.slane %v1731, %v1735
        %v1754 = vunpack.c.l.b16 %v1715
        %v1755 = vunpack.c.l.b16 %v1716
        %v1756 = vunpack.c.l.b16 %v1717
        %v1757 = vunpack.c.l.b16 %v1718
        %v1758 = vunpack.c.l.b16 %v1719
        %v1759 = vunpack.c.l.b16 %v1720
        %v1760 = vunpack.c.l.b16 %v1721
        %v1761 = vunpack.c.l.b16 %v1722
        %v1762 = vunpack.c.l.b16 %v1723
        %v1763 = vunpack.c.l.b16 %v1724
        %v1764 = vunpack.c.l.b16 %v1725
        %v1765 = vunpack.c.l.b16 %v1726
        %v1766 = vunpack.c.l.b16 %v1727
        %v1767 = vunpack.c.l.b16 %v1728
        %v1768 = vunpack.c.l.b16 %v1729
        %v1769 = vunpack.c.l.b16 %v1730
        %v1770 = vpack.c.b16 %v1755, %v1754
        %v1771 = vpack.c.b16 %v1757, %v1756
        %v1772 = vpack.c.b16 %v1759, %v1758
        %v1773 = vpack.c.b16 %v1761, %v1760
        %v1774 = vpack.c.b16 %v1763, %v1762
        %v1775 = vpack.c.b16 %v1765, %v1764
        %v1776 = vpack.c.b16 %v1767, %v1766
        %v1777 = vpack.c.b16 %v1769, %v1768
        %1786 = vmatprep.subr.bf16.mxu0 0
        %1787 = vmatpush1.bf16.msra.mxu0 %v1770
        %1788 = vmatprep.subr.bf16.mxu0 0
        %1789 = vmatpush1.bf16.msra.mxu0 %v1771
        %1790 = vmatprep.subr.bf16.mxu0 0
        %1791 = vmatpush1.bf16.msra.mxu0 %v1772
        %1792 = vmatprep.subr.bf16.mxu0 0
        %1793 = vmatpush1.bf16.msra.mxu0 %v1773
        %1794 = vmatprep.subr.bf16.mxu0 0
        %1795 = vmatpush1.bf16.msra.mxu0 %v1774
        %1796 = vmatprep.subr.bf16.mxu0 0
        %1797 = vmatpush1.bf16.msra.mxu0 %v1775
        %1798 = vmatprep.subr.bf16.mxu0 0
        %1799 = vmatpush1.bf16.msra.mxu0 %v1776
        %1800 = vmatprep.subr.bf16.mxu0 0
        %1801 = vmatpush1.bf16.msra.mxu0 %v1777
        %1802 = vmatprep.subr.bf16.mxu0 0
        %1803 = vmatpush1.bf16.msra.mxu0 0
        %1804 = vmatprep.subr.bf16.mxu0 0
        %1805 = vmatpush1.bf16.msra.mxu0 0
        %1806 = vmatprep.subr.bf16.mxu0 0
        %1807 = vmatpush1.bf16.msra.mxu0 0
        %1808 = vmatprep.subr.bf16.mxu0 0
        %1809 = vmatpush1.bf16.msra.mxu0 0
        %1810 = vmatprep.subr.bf16.mxu0 0
        %1811 = vmatpush1.bf16.msra.mxu0 0
        %1812 = vmatprep.subr.bf16.mxu0 0
        %1813 = vmatpush1.bf16.msra.mxu0 0
        %1814 = vmatprep.subr.bf16.mxu0 0
        %1815 = vmatpush1.bf16.msra.mxu0 0
        %1816 = vmatprep.subr.bf16.mxu0 0
        %1817 = vmatpush1.bf16.msra.mxu0 0
        %1818 = vmatprep.mubr.bf16.mxu0 0
        %1819 = vmatmul.mubr.bf16.gmra.mrb[0].mxu0 %v1713
        %v1820 = vpop.f32.mrb[0].mxu0
        %v1821 = vadd.f32 %v1736, %v1820
        %v1822 = vpop.f32.mrb[0].mxu0
        %v1823 = vpop.f32.mrb[0].mxu0
        %v1824 = vadd.f32 %v1736, %v1823
        %v1825 = vpop.f32.mrb[0].mxu0
        %1826 = vmatprep.mubr.bf16.mxu0 0
        %1827 = vmatmul.mubr.bf16.gmra.mrb[0].mxu0 %v1714
        %v1828 = vpop.f32.mrb[0].mxu0
        %v1829 = vadd.f32 %v1736, %v1828
        %v1830 = vpop.f32.mrb[0].mxu0
        %v1831 = vpop.f32.mrb[0].mxu0
        %v1832 = vadd.f32 %v1736, %v1831
        %v1833 = vpop.f32.mrb[0].mxu0
        %1834 = vdwg.mxu0
        %v1835 = vadd.f32 %v1201, %v1821
        %v1836 = vadd.f32 %v1202, %v1824
        %v1837 = vadd.f32 %v1203, %v1829
        %v1838 = vadd.f32 %v1204, %v1832
        %1839 = vadd.xlane.f32.xlu0 %v1835
        %v1840 = vpop.xlane.xlu0 %1839
        %1841 = vadd.xlane.f32.xlu0 %v1836
        %v1842 = vpop.xlane.xlu0 %1841
        %1843 = vadd.xlane.f32.xlu0 %v1837
        %v1844 = vpop.xlane.xlu0 %1843
        %1845 = vadd.xlane.f32.xlu0 %v1838
        %v1846 = vpop.xlane.xlu0 %1845
        %v1847 = vrcp.pop 128.0
        %v1848 = vmul.f32 %v1840, %v1847
        %v1849 = vmul.f32 %v1842, %v1847
        %v1850 = vmul.f32 %v1844, %v1847
        %v1851 = vmul.f32 %v1846, %v1847
        %v1852 = vsub.f32 %v1835, %v1848
        %v1853 = vsub.f32 %v1836, %v1849
        %v1854 = vsub.f32 %v1837, %v1850
        %v1855 = vsub.f32 %v1838, %v1851
        %v1856 = vmul.f32 %v1852, %v1852
        %v1857 = vmul.f32 %v1853, %v1853
        %v1858 = vmul.f32 %v1854, %v1854
        %v1859 = vmul.f32 %v1855, %v1855
        %1860 = vadd.xlane.f32.xlu0 %v1856
        %v1861 = vpop.xlane.xlu0 %1860
        %1862 = vadd.xlane.f32.xlu0 %v1857
        %v1863 = vpop.xlane.xlu0 %1862
        %1864 = vadd.xlane.f32.xlu0 %v1858
        %v1865 = vpop.xlane.xlu0 %1864
        %1866 = vadd.xlane.f32.xlu0 %v1859
        %v1867 = vpop.xlane.xlu0 %1866
        %v1868 = vmul.f32 %v1861, %v1847
        %v1869 = vmul.f32 %v1863, %v1847
        %v1870 = vmul.f32 %v1865, %v1847
        %v1871 = vmul.f32 %v1867, %v1847
        %v1872 = vadd.f32 %v1868, 1e-05
        %v1873 = vadd.f32 %v1869, 1e-05
        %v1874 = vadd.f32 %v1870, 1e-05
        %v1875 = vadd.f32 %v1871, 1e-05
        %v1876 = vrsqrt.pop %v1872
        %v1877 = vrsqrt.pop %v1873
        %v1878 = vrsqrt.pop %v1874
        %v1879 = vrsqrt.pop %v1875
        %v1880 = vmul.f32 %v1852, %v1876
        %v1881 = vmul.f32 %v1853, %v1877
        %v1882 = vmul.f32 %v1854, %v1878
        %v1883 = vmul.f32 %v1855, %v1879
        %v1884 = vld [vmem:[%s15] sm:$0x1]
        %v1886 = vlaneseq
        %v1887 = vshrl.u32 %v1886, 7
        %v1888 = vsub.s32 0, %v1887
        %v1889 = vrot.slane %v1884, %v1888
        %v1891 = vmul.f32 %v1880, %v1889
        %v1892 = vmul.f32 %v1881, %v1889
        %v1893 = vmul.f32 %v1882, %v1889
        %v1894 = vmul.f32 %v1883, %v1889
        %v1895 = vld [vmem:[%s17] sm:$0x1]
        %v1897 = vlaneseq
        %v1898 = vshrl.u32 %v1897, 7
        %v1899 = vsub.s32 0, %v1898
        %v1900 = vrot.slane %v1895, %v1899
        %v1902 = vadd.f32 %v1891, %v1900
        %v1903 = vadd.f32 %v1892, %v1900
        %v1904 = vadd.f32 %v1893, %v1900
        %v1905 = vadd.f32 %v1894, %v1900
        %v1906 = vpack.c.bf16 %v1903, %v1902
        %v1907 = vpack.c.bf16 %v1905, %v1904
        %v1908 = vld [vmem:[%s19] sm:$0xff]
        %v1909 = vld [vmem:[%s19 + $0x8] sm:$0xff]
        %v1910 = vld [vmem:[%s19 + $0x10] sm:$0xff]
        %v1911 = vld [vmem:[%s19 + $0x18] sm:$0xff]
        %v1912 = vld [vmem:[%s19 + $0x20] sm:$0xff]
        %v1913 = vld [vmem:[%s19 + $0x28] sm:$0xff]
        %v1914 = vld [vmem:[%s19 + $0x30] sm:$0xff]
        %v1915 = vld [vmem:[%s19 + $0x38] sm:$0xff]
        %v1916 = vld [vmem:[%s19 + $0x40] sm:$0xff]
        %v1917 = vld [vmem:[%s19 + $0x48] sm:$0xff]
        %v1918 = vld [vmem:[%s19 + $0x50] sm:$0xff]
        %v1919 = vld [vmem:[%s19 + $0x58] sm:$0xff]
        %v1920 = vld [vmem:[%s19 + $0x60] sm:$0xff]
        %v1921 = vld [vmem:[%s19 + $0x68] sm:$0xff]
        %v1922 = vld [vmem:[%s19 + $0x70] sm:$0xff]
        %v1923 = vld [vmem:[%s19 + $0x78] sm:$0xff]
        %v1924 = vld [vmem:[%s21] sm:$0x3]
        %v1926 = vlaneseq
        %v1927 = vshrl.u32 %v1926, 7
        %v1928 = vsub.s32 0, %v1927
        %v1929 = vrot.slane %v1924, %v1928
        %v1930 = vlaneseq
        %v1931 = vshrl.u32 %v1930, 7
        %v1932 = vsub.s32 1, %v1931
        %v1933 = vrot.slane %v1924, %v1932
        %v1952 = vunpack.c.l.b16 %v1908
        %v1953 = vunpack.c.h.b16 %v1908
        %v1954 = vunpack.c.l.b16 %v1909
        %v1955 = vunpack.c.h.b16 %v1909
        %v1956 = vunpack.c.l.b16 %v1910
        %v1957 = vunpack.c.h.b16 %v1910
        %v1958 = vunpack.c.l.b16 %v1911
        %v1959 = vunpack.c.h.b16 %v1911
        %v1960 = vunpack.c.l.b16 %v1912
        %v1961 = vunpack.c.h.b16 %v1912
        %v1962 = vunpack.c.l.b16 %v1913
        %v1963 = vunpack.c.h.b16 %v1913
        %v1964 = vunpack.c.l.b16 %v1914
        %v1965 = vunpack.c.h.b16 %v1914
        %v1966 = vunpack.c.l.b16 %v1915
        %v1967 = vunpack.c.h.b16 %v1915
        %v1968 = vunpack.c.l.b16 %v1916
        %v1969 = vunpack.c.h.b16 %v1916
        %v1970 = vunpack.c.l.b16 %v1917
        %v1971 = vunpack.c.h.b16 %v1917
        %v1972 = vunpack.c.l.b16 %v1918
        %v1973 = vunpack.c.h.b16 %v1918
        %v1974 = vunpack.c.l.b16 %v1919
        %v1975 = vunpack.c.h.b16 %v1919
        %v1976 = vunpack.c.l.b16 %v1920
        %v1977 = vunpack.c.h.b16 %v1920
        %v1978 = vunpack.c.l.b16 %v1921
        %v1979 = vunpack.c.h.b16 %v1921
        %v1980 = vunpack.c.l.b16 %v1922
        %v1981 = vunpack.c.h.b16 %v1922
        %v1982 = vunpack.c.l.b16 %v1923
        %v1983 = vunpack.c.h.b16 %v1923
        %v1984 = vpack.c.b16 %v1954, %v1952
        %v1985 = vpack.c.b16 %v1955, %v1953
        %v1986 = vpack.c.b16 %v1958, %v1956
        %v1987 = vpack.c.b16 %v1959, %v1957
        %v1988 = vpack.c.b16 %v1962, %v1960
        %v1989 = vpack.c.b16 %v1963, %v1961
        %v1990 = vpack.c.b16 %v1966, %v1964
        %v1991 = vpack.c.b16 %v1967, %v1965
        %v1992 = vpack.c.b16 %v1970, %v1968
        %v1993 = vpack.c.b16 %v1971, %v1969
        %v1994 = vpack.c.b16 %v1974, %v1972
        %v1995 = vpack.c.b16 %v1975, %v1973
        %v1996 = vpack.c.b16 %v1978, %v1976
        %v1997 = vpack.c.b16 %v1979, %v1977
        %v1998 = vpack.c.b16 %v1982, %v1980
        %v1999 = vpack.c.b16 %v1983, %v1981
        %2016 = vmatprep.subr.bf16.mxu0 %v1985
        %2017 = vmatpush1.bf16.msra.mxu0 %v1984
        %2018 = vmatprep.subr.bf16.mxu0 %v1987
        %2019 = vmatpush1.bf16.msra.mxu0 %v1986
        %2020 = vmatprep.subr.bf16.mxu0 %v1989
        %2021 = vmatpush1.bf16.msra.mxu0 %v1988
        %2022 = vmatprep.subr.bf16.mxu0 %v1991
        %2023 = vmatpush1.bf16.msra.mxu0 %v1990
        %2024 = vmatprep.subr.bf16.mxu0 %v1993
        %2025 = vmatpush1.bf16.msra.mxu0 %v1992
        %2026 = vmatprep.subr.bf16.mxu0 %v1995
        %2027 = vmatpush1.bf16.msra.mxu0 %v1994
        %2028 = vmatprep.subr.bf16.mxu0 %v1997
        %2029 = vmatpush1.bf16.msra.mxu0 %v1996
        %2030 = vmatprep.subr.bf16.mxu0 %v1999
        %2031 = vmatpush1.bf16.msra.mxu0 %v1998
        %2032 = vmatprep.subr.bf16.mxu0 0
        %2033 = vmatpush1.bf16.msra.mxu0 0
        %2034 = vmatprep.subr.bf16.mxu0 0
        %2035 = vmatpush1.bf16.msra.mxu0 0
        %2036 = vmatprep.subr.bf16.mxu0 0
        %2037 = vmatpush1.bf16.msra.mxu0 0
        %2038 = vmatprep.subr.bf16.mxu0 0
        %2039 = vmatpush1.bf16.msra.mxu0 0
        %2040 = vmatprep.subr.bf16.mxu0 0
        %2041 = vmatpush1.bf16.msra.mxu0 0
        %2042 = vmatprep.subr.bf16.mxu0 0
        %2043 = vmatpush1.bf16.msra.mxu0 0
        %2044 = vmatprep.subr.bf16.mxu0 0
        %2045 = vmatpush1.bf16.msra.mxu0 0
        %2046 = vmatprep.subr.bf16.mxu0 0
        %2047 = vmatpush1.bf16.msra.mxu0 0
        %2048 = vmatprep.mubr.bf16.mxu0 0
        %2049 = vmatmul.mubr.bf16.gmra.mrb[0].mxu0 %v1906
        %v2050 = vpop.f32.mrb[0].mxu0
        %v2051 = vadd.f32 %v1929, %v2050
        %v2052 = vpop.f32.mrb[0].mxu0
        %v2053 = vadd.f32 %v1933, %v2052
        %v2054 = vpop.f32.mrb[0].mxu0
        %v2055 = vadd.f32 %v1929, %v2054
        %v2056 = vpop.f32.mrb[0].mxu0
        %v2057 = vadd.f32 %v1933, %v2056
        %2058 = vmatprep.mubr.bf16.mxu0 0
        %2059 = vmatmul.mubr.bf16.gmra.mrb[0].mxu0 %v1907
        %v2060 = vpop.f32.mrb[0].mxu0
        %v2061 = vadd.f32 %v1929, %v2060
        %v2062 = vpop.f32.mrb[0].mxu0
        %v2063 = vadd.f32 %v1933, %v2062
        %v2064 = vpop.f32.mrb[0].mxu0
        %v2065 = vadd.f32 %v1929, %v2064
        %v2066 = vpop.f32.mrb[0].mxu0
        %v2067 = vadd.f32 %v1933, %v2066
        %2068 = vdwg.mxu0
        %v2069 = vmax.f32 %v2051, 0.0
        %v2070 = vmax.f32 %v2053, 0.0
        %v2071 = vmax.f32 %v2055, 0.0
        %v2072 = vmax.f32 %v2057, 0.0
        %v2073 = vmax.f32 %v2061, 0.0
        %v2074 = vmax.f32 %v2063, 0.0
        %v2075 = vmax.f32 %v2065, 0.0
        %v2076 = vmax.f32 %v2067, 0.0
        %v2077 = vpack.c.bf16 %v2071, %v2069
        %v2078 = vpack.c.bf16 %v2072, %v2070
        %v2079 = vpack.c.bf16 %v2075, %v2073
        %v2080 = vpack.c.bf16 %v2076, %v2074
        %v2081 = vld [vmem:[%s23] sm:$0xf]
        %v2082 = vld [vmem:[%s23 + $0x4] sm:$0xf]
        %v2083 = vld [vmem:[%s23 + $0x8] sm:$0xf]
        %v2084 = vld [vmem:[%s23 + $0xc] sm:$0xf]
        %v2085 = vld [vmem:[%s23 + $0x10] sm:$0xf]
        %v2086 = vld [vmem:[%s23 + $0x14] sm:$0xf]
        %v2087 = vld [vmem:[%s23 + $0x18] sm:$0xf]
        %v2088 = vld [vmem:[%s23 + $0x1c] sm:$0xf]
        %v2089 = vld [vmem:[%s23 + $0x20] sm:$0xf]
        %v2090 = vld [vmem:[%s23 + $0x24] sm:$0xf]
        %v2091 = vld [vmem:[%s23 + $0x28] sm:$0xf]
        %v2092 = vld [vmem:[%s23 + $0x2c] sm:$0xf]
        %v2093 = vld [vmem:[%s23 + $0x30] sm:$0xf]
        %v2094 = vld [vmem:[%s23 + $0x34] sm:$0xf]
        %v2095 = vld [vmem:[%s23 + $0x38] sm:$0xf]
        %v2096 = vld [vmem:[%s23 + $0x3c] sm:$0xf]
        %v2097 = vld [vmem:[%s23 + $0x40] sm:$0xf]
        %v2098 = vld [vmem:[%s23 + $0x44] sm:$0xf]
        %v2099 = vld [vmem:[%s23 + $0x48] sm:$0xf]
        %v2100 = vld [vmem:[%s23 + $0x4c] sm:$0xf]
        %v2101 = vld [vmem:[%s23 + $0x50] sm:$0xf]
        %v2102 = vld [vmem:[%s23 + $0x54] sm:$0xf]
        %v2103 = vld [vmem:[%s23 + $0x58] sm:$0xf]
        %v2104 = vld [vmem:[%s23 + $0x5c] sm:$0xf]
        %v2105 = vld [vmem:[%s23 + $0x60] sm:$0xf]
        %v2106 = vld [vmem:[%s23 + $0x64] sm:$0xf]
        %v2107 = vld [vmem:[%s23 + $0x68] sm:$0xf]
        %v2108 = vld [vmem:[%s23 + $0x6c] sm:$0xf]
        %v2109 = vld [vmem:[%s23 + $0x70] sm:$0xf]
        %v2110 = vld [vmem:[%s23 + $0x74] sm:$0xf]
        %v2111 = vld [vmem:[%s23 + $0x78] sm:$0xf]
        %v2112 = vld [vmem:[%s23 + $0x7c] sm:$0xf]
        %v2113 = vld [vmem:[%s25] sm:$0x1]
        %v2115 = vlaneseq
        %v2116 = vshrl.u32 %v2115, 7
        %v2117 = vsub.s32 0, %v2116
        %v2118 = vrot.slane %v2113, %v2117
        %v2152 = vunpack.c.l.b16 %v2081
        %v2153 = vunpack.c.l.b16 %v2082
        %v2154 = vunpack.c.l.b16 %v2083
        %v2155 = vunpack.c.l.b16 %v2084
        %v2156 = vunpack.c.l.b16 %v2085
        %v2157 = vunpack.c.l.b16 %v2086
        %v2158 = vunpack.c.l.b16 %v2087
        %v2159 = vunpack.c.l.b16 %v2088
        %v2160 = vunpack.c.l.b16 %v2089
        %v2161 = vunpack.c.l.b16 %v2090
        %v2162 = vunpack.c.l.b16 %v2091
        %v2163 = vunpack.c.l.b16 %v2092
        %v2164 = vunpack.c.l.b16 %v2093
        %v2165 = vunpack.c.l.b16 %v2094
        %v2166 = vunpack.c.l.b16 %v2095
        %v2167 = vunpack.c.l.b16 %v2096
        %v2168 = vunpack.c.l.b16 %v2097
        %v2169 = vunpack.c.l.b16 %v2098
        %v2170 = vunpack.c.l.b16 %v2099
        %v2171 = vunpack.c.l.b16 %v2100
        %v2172 = vunpack.c.l.b16 %v2101
        %v2173 = vunpack.c.l.b16 %v2102
        %v2174 = vunpack.c.l.b16 %v2103
        %v2175 = vunpack.c.l.b16 %v2104
        %v2176 = vunpack.c.l.b16 %v2105
        %v2177 = vunpack.c.l.b16 %v2106
        %v2178 = vunpack.c.l.b16 %v2107
        %v2179 = vunpack.c.l.b16 %v2108
        %v2180 = vunpack.c.l.b16 %v2109
        %v2181 = vunpack.c.l.b16 %v2110
        %v2182 = vunpack.c.l.b16 %v2111
        %v2183 = vunpack.c.l.b16 %v2112
        %v2184 = vpack.c.b16 %v2153, %v2152
        %v2185 = vpack.c.b16 %v2155, %v2154
        %v2186 = vpack.c.b16 %v2157, %v2156
        %v2187 = vpack.c.b16 %v2159, %v2158
        %v2188 = vpack.c.b16 %v2161, %v2160
        %v2189 = vpack.c.b16 %v2163, %v2162
        %v2190 = vpack.c.b16 %v2165, %v2164
        %v2191 = vpack.c.b16 %v2167, %v2166
        %v2192 = vpack.c.b16 %v2169, %v2168
        %v2193 = vpack.c.b16 %v2171, %v2170
        %v2194 = vpack.c.b16 %v2173, %v2172
        %v2195 = vpack.c.b16 %v2175, %v2174
        %v2196 = vpack.c.b16 %v2177, %v2176
        %v2197 = vpack.c.b16 %v2179, %v2178
        %v2198 = vpack.c.b16 %v2181, %v2180
        %v2199 = vpack.c.b16 %v2183, %v2182
        %2216 = vmatprep.subr.bf16.mxu0 0
        %2217 = vmatpush1.bf16.msra.mxu0 %v2184
        %2218 = vmatprep.subr.bf16.mxu0 0
        %2219 = vmatpush1.bf16.msra.mxu0 %v2185
        %2220 = vmatprep.subr.bf16.mxu0 0
        %2221 = vmatpush1.bf16.msra.mxu0 %v2186
        %2222 = vmatprep.subr.bf16.mxu0 0
        %2223 = vmatpush1.bf16.msra.mxu0 %v2187
        %2224 = vmatprep.subr.bf16.mxu0 0
        %2225 = vmatpush1.bf16.msra.mxu0 %v2188
        %2226 = vmatprep.subr.bf16.mxu0 0
        %2227 = vmatpush1.bf16.msra.mxu0 %v2189
        %2228 = vmatprep.subr.bf16.mxu0 0
        %2229 = vmatpush1.bf16.msra.mxu0 %v2190
        %2230 = vmatprep.subr.bf16.mxu0 0
        %2231 = vmatpush1.bf16.msra.mxu0 %v2191
        %2232 = vmatprep.subr.bf16.mxu0 0
        %2233 = vmatpush1.bf16.msra.mxu0 %v2192
        %2234 = vmatprep.subr.bf16.mxu0 0
        %2235 = vmatpush1.bf16.msra.mxu0 %v2193
        %2236 = vmatprep.subr.bf16.mxu0 0
        %2237 = vmatpush1.bf16.msra.mxu0 %v2194
        %2238 = vmatprep.subr.bf16.mxu0 0
        %2239 = vmatpush1.bf16.msra.mxu0 %v2195
        %2240 = vmatprep.subr.bf16.mxu0 0
        %2241 = vmatpush1.bf16.msra.mxu0 %v2196
        %2242 = vmatprep.subr.bf16.mxu0 0
        %2243 = vmatpush1.bf16.msra.mxu0 %v2197
        %2244 = vmatprep.subr.bf16.mxu0 0
        %2245 = vmatpush1.bf16.msra.mxu0 %v2198
        %2246 = vmatprep.subr.bf16.mxu0 0
        %2247 = vmatpush1.bf16.msra.mxu0 %v2199
        %2248 = vmatprep.mubr.bf16.mxu0 %v2078
        %2249 = vmatmul.mubr.bf16.gmra.mrb[0].mxu0 %v2077
        %v2250 = vpop.f32.mrb[0].mxu0
        %v2251 = vadd.f32 %v2118, %v2250
        %v2252 = vpop.f32.mrb[0].mxu0
        %v2253 = vpop.f32.mrb[0].mxu0
        %v2254 = vadd.f32 %v2118, %v2253
        %v2255 = vpop.f32.mrb[0].mxu0
        %2256 = vmatprep.mubr.bf16.mxu0 %v2080
        %2257 = vmatmul.mubr.bf16.gmra.mrb[0].mxu0 %v2079
        %v2258 = vpop.f32.mrb[0].mxu0
        %v2259 = vadd.f32 %v2118, %v2258
        %v2260 = vpop.f32.mrb[0].mxu0
        %v2261 = vpop.f32.mrb[0].mxu0
        %v2262 = vadd.f32 %v2118, %v2261
        %v2263 = vpop.f32.mrb[0].mxu0
        %2264 = vdwg.mxu0
        %v2265 = vadd.f32 %v1902, %v2251
        %v2266 = vadd.f32 %v1903, %v2254
        %v2267 = vadd.f32 %v1904, %v2259
        %v2268 = vadd.f32 %v1905, %v2262
        %2269 = vadd.xlane.f32.xlu0 %v2265
        %v2270 = vpop.xlane.xlu0 %2269
        %2271 = vadd.xlane.f32.xlu0 %v2266
        %v2272 = vpop.xlane.xlu0 %2271
        %2273 = vadd.xlane.f32.xlu0 %v2267
        %v2274 = vpop.xlane.xlu0 %2273
        %2275 = vadd.xlane.f32.xlu0 %v2268
        %v2276 = vpop.xlane.xlu0 %2275
        %v2277 = vmul.f32 %v2270, %v1847
        %v2278 = vmul.f32 %v2272, %v1847
        %v2279 = vmul.f32 %v2274, %v1847
        %v2280 = vmul.f32 %v2276, %v1847
        %v2281 = vsub.f32 %v2265, %v2277
        %v2282 = vsub.f32 %v2266, %v2278
        %v2283 = vsub.f32 %v2267, %v2279
        %v2284 = vsub.f32 %v2268, %v2280
        %v2285 = vmul.f32 %v2281, %v2281
        %v2286 = vmul.f32 %v2282, %v2282
        %v2287 = vmul.f32 %v2283, %v2283
        %v2288 = vmul.f32 %v2284, %v2284
        %2289 = vadd.xlane.f32.xlu0 %v2285
        %v2290 = vpop.xlane.xlu0 %2289
        %2291 = vadd.xlane.f32.xlu0 %v2286
        %v2292 = vpop.xlane.xlu0 %2291
        %2293 = vadd.xlane.f32.xlu0 %v2287
        %v2294 = vpop.xlane.xlu0 %2293
        %2295 = vadd.xlane.f32.xlu0 %v2288
        %v2296 = vpop.xlane.xlu0 %2295
        %v2297 = vmul.f32 %v2290, %v1847
        %v2298 = vmul.f32 %v2292, %v1847
        %v2299 = vmul.f32 %v2294, %v1847
        %v2300 = vmul.f32 %v2296, %v1847
        %v2301 = vadd.f32 %v2297, 1e-05
        %v2302 = vadd.f32 %v2298, 1e-05
        %v2303 = vadd.f32 %v2299, 1e-05
        %v2304 = vadd.f32 %v2300, 1e-05
        %v2305 = vrsqrt.pop %v2301
        %v2306 = vrsqrt.pop %v2302
        %v2307 = vrsqrt.pop %v2303
        %v2308 = vrsqrt.pop %v2304
        %v2309 = vmul.f32 %v2281, %v2305
        %v2310 = vmul.f32 %v2282, %v2306
        %v2311 = vmul.f32 %v2283, %v2307
        %v2312 = vmul.f32 %v2284, %v2308
        %v2313 = vld [vmem:[%s27] sm:$0x1]
        %v2315 = vlaneseq
        %v2316 = vshrl.u32 %v2315, 7
        %v2317 = vsub.s32 0, %v2316
        %v2318 = vrot.slane %v2313, %v2317
        %v2320 = vmul.f32 %v2309, %v2318
        %v2321 = vmul.f32 %v2310, %v2318
        %v2322 = vmul.f32 %v2311, %v2318
        %v2323 = vmul.f32 %v2312, %v2318
        %v2324 = vld [vmem:[%s29] sm:$0x1]
        %v2326 = vlaneseq
        %v2327 = vshrl.u32 %v2326, 7
        %v2328 = vsub.s32 0, %v2327
        %v2329 = vrot.slane %v2324, %v2328
        %v2331 = vadd.f32 %v2320, %v2329
        %v2332 = vadd.f32 %v2321, %v2329
        %v2333 = vadd.f32 %v2322, %v2329
        %v2334 = vadd.f32 %v2323, %v2329
        %v2335 = vld [vmem:[%s1182] sm:$0xf]
        %v2336 = vld [vmem:[%s1182 + $0x4] sm:$0xf]
        %v2337 = vld [vmem:[%s1182 + $0x8] sm:$0xf]
        %v2338 = vld [vmem:[%s1182 + $0xc] sm:$0xf]
        %v2339 = vunpack.c.l.bf16 %v2335
        %v2340 = vunpack.c.l.bf16 %v2336
        %v2341 = vunpack.c.l.bf16 %v2337
        %v2342 = vunpack.c.l.bf16 %v2338
        %v2343 = vadd.f32 %v2339, %v1191
        %v2344 = vadd.f32 %v2340, %v1192
        %v2345 = vadd.f32 %v2341, %v1191
        %v2346 = vadd.f32 %v2342, %v1192
        %v2347 = vpack.c.bf16 %v2344, %v2343
        %v2348 = vpack.c.bf16 %v2346, %v2345
        %v2349 = vld [vmem:[%s31] sm:$0xff]
        %v2350 = vld [vmem:[%s31 + $0x8] sm:$0xf]
        %v2351 = vld [vmem:[%s31 + $0xc] sm:$0xff]
        %v2352 = vld [vmem:[%s31 + $0x14] sm:$0xf]
        %v2353 = vld [vmem:[%s31 + $0x18] sm:$0xff]
        %v2354 = vld [vmem:[%s31 + $0x20] sm:$0xf]
        %v2355 = vld [vmem:[%s31 + $0x24] sm:$0xff]
        %v2356 = vld [vmem:[%s31 + $0x2c] sm:$0xf]
        %v2357 = vld [vmem:[%s31 + $0x30] sm:$0xff]
        %v2358 = vld [vmem:[%s31 + $0x38] sm:$0xf]
        %v2359 = vld [vmem:[%s31 + $0x3c] sm:$0xff]
        %v2360 = vld [vmem:[%s31 + $0x44] sm:$0xf]
        %v2361 = vld [vmem:[%s31 + $0x48] sm:$0xff]
        %v2362 = vld [vmem:[%s31 + $0x50] sm:$0xf]
        %v2363 = vld [vmem:[%s31 + $0x54] sm:$0xff]
        %v2364 = vld [vmem:[%s31 + $0x5c] sm:$0xf]
        %v2365 = vld [vmem:[%s31 + $0x60] sm:$0xff]
        %v2366 = vld [vmem:[%s31 + $0x68] sm:$0xf]
        %v2367 = vld [vmem:[%s31 + $0x6c] sm:$0xff]
        %v2368 = vld [vmem:[%s31 + $0x74] sm:$0xf]
        %v2369 = vld [vmem:[%s31 + $0x78] sm:$0xff]
        %v2370 = vld [vmem:[%s31 + $0x80] sm:$0xf]
        %v2371 = vld [vmem:[%s31 + $0x84] sm:$0xff]
        %v2372 = vld [vmem:[%s31 + $0x8c] sm:$0xf]
        %v2373 = vld [vmem:[%s31 + $0x90] sm:$0xff]
        %v2374 = vld [vmem:[%s31 + $0x98] sm:$0xf]
        %v2375 = vld [vmem:[%s31 + $0x9c] sm:$0xff]
        %v2376 = vld [vmem:[%s31 + $0xa4] sm:$0xf]
        %v2377 = vld [vmem:[%s31 + $0xa8] sm:$0xff]
        %v2378 = vld [vmem:[%s31 + $0xb0] sm:$0xf]
        %v2379 = vld [vmem:[%s31 + $0xb4] sm:$0xff]
        %v2380 = vld [vmem:[%s31 + $0xbc] sm:$0xf]
        %v2381 = vld [vmem:[%s33] sm:$0x7]
        %v2383 = vlaneseq
        %v2384 = vshrl.u32 %v2383, 7
        %v2385 = vsub.s32 0, %v2384
        %v2386 = vrot.slane %v2381, %v2385
        %v2387 = vlaneseq
        %v2388 = vshrl.u32 %v2387, 7
        %v2389 = vsub.s32 1, %v2388
        %v2390 = vrot.slane %v2381, %v2389
        %v2391 = vlaneseq
        %v2392 = vshrl.u32 %v2391, 7
        %v2393 = vsub.s32 2, %v2392
        %v2394 = vrot.slane %v2381, %v2393
        %v2430 = vunpack.c.l.b16 %v2349
        %v2431 = vunpack.c.h.b16 %v2349
        %v2432 = vunpack.c.l.b16 %v2350
        %v2433 = vunpack.c.l.b16 %v2351
        %v2434 = vunpack.c.h.b16 %v2351
        %v2435 = vunpack.c.l.b16 %v2352
        %v2436 = vunpack.c.l.b16 %v2353
        %v2437 = vunpack.c.h.b16 %v2353
        %v2438 = vunpack.c.l.b16 %v2354
        %v2439 = vunpack.c.l.b16 %v2355
        %v2440 = vunpack.c.h.b16 %v2355
        %v2441 = vunpack.c.l.b16 %v2356
        %v2442 = vunpack.c.l.b16 %v2357
        %v2443 = vunpack.c.h.b16 %v2357
        %v2444 = vunpack.c.l.b16 %v2358
        %v2445 = vunpack.c.l.b16 %v2359
        %v2446 = vunpack.c.h.b16 %v2359
        %v2447 = vunpack.c.l.b16 %v2360
        %v2448 = vunpack.c.l.b16 %v2361
        %v2449 = vunpack.c.h.b16 %v2361
        %v2450 = vunpack.c.l.b16 %v2362
        %v2451 = vunpack.c.l.b16 %v2363
        %v2452 = vunpack.c.h.b16 %v2363
        %v2453 = vunpack.c.l.b16 %v2364
        %v2454 = vunpack.c.l.b16 %v2365
        %v2455 = vunpack.c.h.b16 %v2365
        %v2456 = vunpack.c.l.b16 %v2366
        %v2457 = vunpack.c.l.b16 %v2367
        %v2458 = vunpack.c.h.b16 %v2367
        %v2459 = vunpack.c.l.b16 %v2368
        %v2460 = vunpack.c.l.b16 %v2369
        %v2461 = vunpack.c.h.b16 %v2369
        %v2462 = vunpack.c.l.b16 %v2370
        %v2463 = vunpack.c.l.b16 %v2371
        %v2464 = vunpack.c.h.b16 %v2371
        %v2465 = vunpack.c.l.b16 %v2372
        %v2466 = vunpack.c.l.b16 %v2373
        %v2467 = vunpack.c.h.b16 %v2373
        %v2468 = vunpack.c.l.b16 %v2374
        %v2469 = vunpack.c.l.b16 %v2375
        %v2470 = vunpack.c.h.b16 %v2375
        %v2471 = vunpack.c.l.b16 %v2376
        %v2472 = vunpack.c.l.b16 %v2377
        %v2473 = vunpack.c.h.b16 %v2377
        %v2474 = vunpack.c.l.b16 %v2378
        %v2475 = vunpack.c.l.b16 %v2379
        %v2476 = vunpack.c.h.b16 %v2379
        %v2477 = vunpack.c.l.b16 %v2380
        %v2478 = vpack.c.b16 %v2433, %v2430
        %v2479 = vpack.c.b16 %v2434, %v2431
        %v2480 = vpack.c.b16 %v2435, %v2432
        %v2481 = vpack.c.b16 %v2439, %v2436
        %v2482 = vpack.c.b16 %v2440, %v2437
        %v2483 = vpack.c.b16 %v2441, %v2438
        %v2484 = vpack.c.b16 %v2445, %v2442
        %v2485 = vpack.c.b16 %v2446, %v2443
        %v2486 = vpack.c.b16 %v2447, %v2444
        %v2487 = vpack.c.b16 %v2451, %v2448
        %v2488 = vpack.c.b16 %v2452, %v2449
        %v2489 = vpack.c.b16 %v2453, %v2450
        %v2490 = vpack.c.b16 %v2457, %v2454
        %v2491 = vpack.c.b16 %v2458, %v2455
        %v2492 = vpack.c.b16 %v2459, %v2456
        %v2493 = vpack.c.b16 %v2463, %v2460
        %v2494 = vpack.c.b16 %v2464, %v2461
        %v2495 = vpack.c.b16 %v2465, %v2462
        %v2496 = vpack.c.b16 %v2469, %v2466
        %v2497 = vpack.c.b16 %v2470, %v2467
        %v2498 = vpack.c.b16 %v2471, %v2468
        %v2499 = vpack.c.b16 %v2475, %v2472
        %v2500 = vpack.c.b16 %v2476, %v2473
        %v2501 = vpack.c.b16 %v2477, %v2474
        %2526 = vmatprep.subr.bf16.mxu0 %v2479
        %2527 = vmatpush1.bf16.msra.mxu0 %v2478
        %2528 = vmatprep.subr.bf16.mxu0 %v2482
        %2529 = vmatpush1.bf16.msra.mxu0 %v2481
        %2530 = vmatprep.subr.bf16.mxu0 %v2485
        %2531 = vmatpush1.bf16.msra.mxu0 %v2484
        %2532 = vmatprep.subr.bf16.mxu0 %v2488
        %2533 = vmatpush1.bf16.msra.mxu0 %v2487
        %2534 = vmatprep.subr.bf16.mxu0 %v2491
        %2535 = vmatpush1.bf16.msra.mxu0 %v2490
        %2536 = vmatprep.subr.bf16.mxu0 %v2494
        %2537 = vmatpush1.bf16.msra.mxu0 %v2493
        %2538 = vmatprep.subr.bf16.mxu0 %v2497
        %2539 = vmatpush1.bf16.msra.mxu0 %v2496
        %2540 = vmatprep.subr.bf16.mxu0 %v2500
        %2541 = vmatpush1.bf16.msra.mxu0 %v2499
        %2542 = vmatprep.subr.bf16.mxu0 0
        %2543 = vmatpush1.bf16.msra.mxu0 0
        %2544 = vmatprep.subr.bf16.mxu0 0
        %2545 = vmatpush1.bf16.msra.mxu0 0
        %2546 = vmatprep.subr.bf16.mxu0 0
        %2547 = vmatpush1.bf16.msra.mxu0 0
        %2548 = vmatprep.subr.bf16.mxu0 0
        %2549 = vmatpush1.bf16.msra.mxu0 0
        %2550 = vmatprep.subr.bf16.mxu0 0
        %2551 = vmatpush1.bf16.msra.mxu0 0
        %2552 = vmatprep.subr.bf16.mxu0 0
        %2553 = vmatpush1.bf16.msra.mxu0 0
        %2554 = vmatprep.subr.bf16.mxu0 0
        %2555 = vmatpush1.bf16.msra.mxu0 0
        %2556 = vmatprep.subr.bf16.mxu0 0
        %2557 = vmatpush1.bf16.msra.mxu0 0
        %2558 = vmatprep.mubr.bf16.mxu0 0
        %2559 = vmatmul.mubr.bf16.gmra.mrb[0].mxu0 %v2347
        %v2560 = vpop.f32.mrb[0].mxu0
        %v2561 = vadd.f32 %v2386, %v2560
        %v2562 = vpop.f32.mrb[0].mxu0
        %v2563 = vadd.f32 %v2390, %v2562
        %v2564 = vpop.f32.mrb[0].mxu0
        %v2565 = vadd.f32 %v2386, %v2564
        %v2566 = vpop.f32.mrb[0].mxu0
        %v2567 = vadd.f32 %v2390, %v2566
        %2568 = vmatprep.mubr.bf16.mxu0 0
        %2569 = vmatmul.mubr.bf16.gmra.mrb[0].mxu0 %v2348
        %v2570 = vpop.f32.mrb[0].mxu0
        %v2571 = vadd.f32 %v2386, %v2570
        %v2572 = vpop.f32.mrb[0].mxu0
        %v2573 = vadd.f32 %v2390, %v2572
        %v2574 = vpop.f32.mrb[0].mxu0
        %v2575 = vadd.f32 %v2386, %v2574
        %v2576 = vpop.f32.mrb[0].mxu0
        %v2577 = vadd.f32 %v2390, %v2576
        %2578 = vdwg.mxu0
        %2579 = vmatprep.subr.bf16.mxu0 0
        %2580 = vmatpush1.bf16.msra.mxu0 %v2480
        %2581 = vmatprep.subr.bf16.mxu0 0
        %2582 = vmatpush1.bf16.msra.mxu0 %v2483
        %2583 = vmatprep.subr.bf16.mxu0 0
        %2584 = vmatpush1.bf16.msra.mxu0 %v2486
        %2585 = vmatprep.subr.bf16.mxu0 0
        %2586 = vmatpush1.bf16.msra.mxu0 %v2489
        %2587 = vmatprep.subr.bf16.mxu0 0
        %2588 = vmatpush1.bf16.msra.mxu0 %v2492
        %2589 = vmatprep.subr.bf16.mxu0 0
        %2590 = vmatpush1.bf16.msra.mxu0 %v2495
        %2591 = vmatprep.subr.bf16.mxu0 0
        %2592 = vmatpush1.bf16.msra.mxu0 %v2498
        %2593 = vmatprep.subr.bf16.mxu0 0
        %2594 = vmatpush1.bf16.msra.mxu0 %v2501
        %2595 = vmatprep.subr.bf16.mxu0 0
        %2596 = vmatpush1.bf16.msra.mxu0 0
        %2597 = vmatprep.subr.bf16.mxu0 0
        %2598 = vmatpush1.bf16.msra.mxu0 0
        %2599 = vmatprep.subr.bf16.mxu0 0
        %2600 = vmatpush1.bf16.msra.mxu0 0
        %2601 = vmatprep.subr.bf16.mxu0 0
        %2602 = vmatpush1.bf16.msra.mxu0 0
        %2603 = vmatprep.subr.bf16.mxu0 0
        %2604 = vmatpush1.bf16.msra.mxu0 0
        %2605 = vmatprep.subr.bf16.mxu0 0
        %2606 = vmatpush1.bf16.msra.mxu0 0
        %2607 = vmatprep.subr.bf16.mxu0 0
        %2608 = vmatpush1.bf16.msra.mxu0 0
        %2609 = vmatprep.subr.bf16.mxu0 0
        %2610 = vmatpush1.bf16.msra.mxu0 0
        %2611 = vmatprep.mubr.bf16.mxu0 0
        %2612 = vmatmul.mubr.bf16.gmra.mrb[0].mxu0 %v2347
        %v2613 = vpop.f32.mrb[0].mxu0
        %v2614 = vadd.f32 %v2394, %v2613
        %v2615 = vpop.f32.mrb[0].mxu0
        %v2616 = vpop.f32.mrb[0].mxu0
        %v2617 = vadd.f32 %v2394, %v2616
        %v2618 = vpop.f32.mrb[0].mxu0
        %2619 = vmatprep.mubr.bf16.mxu0 0
        %2620 = vmatmul.mubr.bf16.gmra.mrb[0].mxu0 %v2348
        %v2621 = vpop.f32.mrb[0].mxu0
        %v2622 = vadd.f32 %v2394, %v2621
        %v2623 = vpop.f32.mrb[0].mxu0
        %v2624 = vpop.f32.mrb[0].mxu0
        %v2625 = vadd.f32 %v2394, %v2624
        %v2626 = vpop.f32.mrb[0].mxu0
        %2627 = vdwg.mxu0
        %v2628 = vpack.c.bf16 %v2565, %v2561
        %v2629 = vpack.c.bf16 %v2575, %v2571
        %v2630 = vpack.c.bf16 %v2567, %v2563
        %v2631 = vpack.c.bf16 %v2577, %v2573
        %2632 = vmatprep.subr.bf16.mxu0 0
        %2633 = vmatpush1.bf16.xpose.msra.mxu0 %v2630
        %2634 = vmatprep.subr.bf16.mxu0 0
        %2635 = vmatpush1.bf16.xpose.msra.mxu0 0
        %2636 = vmatprep.subr.bf16.mxu0 0
        %2637 = vmatpush1.bf16.xpose.msra.mxu0 0
        %2638 = vmatprep.subr.bf16.mxu0 0
        %2639 = vmatpush1.bf16.xpose.msra.mxu0 0
        %2640 = vmatprep.subr.bf16.mxu0 0
        %2641 = vmatpush1.bf16.xpose.msra.mxu0 0
        %2642 = vmatprep.subr.bf16.mxu0 0
        %2643 = vmatpush1.bf16.xpose.msra.mxu0 0
        %2644 = vmatprep.subr.bf16.mxu0 0
        %2645 = vmatpush1.bf16.xpose.msra.mxu0 0
        %2646 = vmatprep.subr.bf16.mxu0 0
        %2647 = vmatpush1.bf16.xpose.msra.mxu0 0
        %2648 = vmatprep.subr.bf16.mxu0 0
        %2649 = vmatpush1.bf16.xpose.msra.mxu0 0
        %2650 = vmatprep.subr.bf16.mxu0 0
        %2651 = vmatpush1.bf16.xpose.msra.mxu0 0
        %2652 = vmatprep.subr.bf16.mxu0 0
        %2653 = vmatpush1.bf16.xpose.msra.mxu0 0
        %2654 = vmatprep.subr.bf16.mxu0 0
        %2655 = vmatpush1.bf16.xpose.msra.mxu0 0
        %2656 = vmatprep.subr.bf16.mxu0 0
        %2657 = vmatpush1.bf16.xpose.msra.mxu0 0
        %2658 = vmatprep.subr.bf16.mxu0 0
        %2659 = vmatpush1.bf16.xpose.msra.mxu0 0
        %2660 = vmatprep.subr.bf16.mxu0 0
        %2661 = vmatpush1.bf16.xpose.msra.mxu0 0
        %2662 = vmatprep.subr.bf16.mxu0 0
        %2663 = vmatpush1.bf16.xpose.msra.mxu0 0
        %2664 = vmatprep.mubr.bf16.mxu0 0
        %2665 = vmatmul.mubr.bf16.gmra.mrb[0].mxu0 %v2628
        %v2666 = vpop.f32.mrb[0].mxu0
        %v2667 = vadd.f32 0.0, %v2666
        %v2668 = vpop.f32.mrb[0].mxu0
        %v2669 = vpop.f32.mrb[0].mxu0
        %v2670 = vadd.f32 0.0, %v2669
        %v2671 = vpop.f32.mrb[0].mxu0
        %2672 = vdwg.mxu0
        %2673 = vmatprep.subr.bf16.mxu0 0
        %2674 = vmatpush1.bf16.xpose.msra.mxu0 %v2631
        %2675 = vmatprep.subr.bf16.mxu0 0
        %2676 = vmatpush1.bf16.xpose.msra.mxu0 0
        %2677 = vmatprep.subr.bf16.mxu0 0
        %2678 = vmatpush1.bf16.xpose.msra.mxu0 0
        %2679 = vmatprep.subr.bf16.mxu0 0
        %2680 = vmatpush1.bf16.xpose.msra.mxu0 0
        %2681 = vmatprep.subr.bf16.mxu0 0
        %2682 = vmatpush1.bf16.xpose.msra.mxu0 0
        %2683 = vmatprep.subr.bf16.mxu0 0
        %2684 = vmatpush1.bf16.xpose.msra.mxu0 0
        %2685 = vmatprep.subr.bf16.mxu0 0
        %2686 = vmatpush1.bf16.xpose.msra.mxu0 0
        %2687 = vmatprep.subr.bf16.mxu0 0
        %2688 = vmatpush1.bf16.xpose.msra.mxu0 0
        %2689 = vmatprep.subr.bf16.mxu0 0
        %2690 = vmatpush1.bf16.xpose.msra.mxu0 0
        %2691 = vmatprep.subr.bf16.mxu0 0
        %2692 = vmatpush1.bf16.xpose.msra.mxu0 0
        %2693 = vmatprep.subr.bf16.mxu0 0
        %2694 = vmatpush1.bf16.xpose.msra.mxu0 0
        %2695 = vmatprep.subr.bf16.mxu0 0
        %2696 = vmatpush1.bf16.xpose.msra.mxu0 0
        %2697 = vmatprep.subr.bf16.mxu0 0
        %2698 = vmatpush1.bf16.xpose.msra.mxu0 0
        %2699 = vmatprep.subr.bf16.mxu0 0
        %2700 = vmatpush1.bf16.xpose.msra.mxu0 0
        %2701 = vmatprep.subr.bf16.mxu0 0
        %2702 = vmatpush1.bf16.xpose.msra.mxu0 0
        %2703 = vmatprep.subr.bf16.mxu0 0
        %2704 = vmatpush1.bf16.xpose.msra.mxu0 0
        %2705 = vmatprep.mubr.bf16.mxu0 0
        %2706 = vmatmul.mubr.bf16.gmra.mrb[0].mxu0 %v2629
        %v2707 = vpop.f32.mrb[0].mxu0
        %v2708 = vadd.f32 0.0, %v2707
        %v2709 = vpop.f32.mrb[0].mxu0
        %v2710 = vpop.f32.mrb[0].mxu0
        %v2711 = vadd.f32 0.0, %v2710
        %v2712 = vpop.f32.mrb[0].mxu0
        %2713 = vdwg.mxu0
        %v2714 = vmul.f32 %v2667, 0.125
        %v2715 = vmul.f32 %v2670, 0.125
        %v2716 = vmul.f32 %v2708, 0.125
        %v2717 = vmul.f32 %v2711, 0.125
        %v2718 = vlaneseq
        %v2719 = vshrl.u32 %v2718, 7
        %v2720 = vadd.s32 %v2719, 8
        %v2721 = vlaneseq
        %v2722 = vand.u32 %v2721, 127
        %vm2723 = vcmp.gt.s32.totalorder %v2722, %v2719
        %vm2724 = vcmp.gt.s32.totalorder %v2722, %v2720
        %v2725 = vsel %vm2723, -1e+09, %v2714
        %v2726 = vsel %vm2724, -1e+09, %v2715
        %v2727 = vsel %vm2723, -1e+09, %v2716
        %v2728 = vsel %vm2724, -1e+09, %v2717
        %v2729 = vsel %vm1576, %v2725, -inf
        %2730 = vmax.xlane.f32.xlu0 %v2729
        %v2731 = vpop.xlane.xlu0 %2730
        %v2732 = vsel %vm1576, %v2726, -inf
        %2733 = vmax.xlane.f32.xlu0 %v2732
        %v2734 = vpop.xlane.xlu0 %2733
        %v2735 = vsel %vm1576, %v2727, -inf
        %2736 = vmax.xlane.f32.xlu0 %v2735
        %v2737 = vpop.xlane.xlu0 %2736
        %v2738 = vsel %vm1576, %v2728, -inf
        %2739 = vmax.xlane.f32.xlu0 %v2738
        %v2740 = vpop.xlane.xlu0 %2739
        %v2741 = vsub.f32 %v2725, %v2731
        %v2742 = vsub.f32 %v2726, %v2734
        %v2743 = vsub.f32 %v2727, %v2737
        %v2744 = vsub.f32 %v2728, %v2740
        %v2745 = vmul.f32 %v2741, 1.442695
        %v2746 = vpow.pop %v2745
        %v2747 = vmul.f32 %v2742, 1.442695
        %v2748 = vpow.pop %v2747
        %v2749 = vmul.f32 %v2743, 1.442695
        %v2750 = vpow.pop %v2749
        %v2751 = vmul.f32 %v2744, 1.442695
        %v2752 = vpow.pop %v2751
        %v2753 = vsel %vm1576, %v2746, 0.0
        %2754 = vadd.xlane.f32.xlu0 %v2753
        %v2755 = vpop.xlane.xlu0 %2754
        %v2756 = vsel %vm1576, %v2748, 0.0
        %2757 = vadd.xlane.f32.xlu0 %v2756
        %v2758 = vpop.xlane.xlu0 %2757
        %v2759 = vsel %vm1576, %v2750, 0.0
        %2760 = vadd.xlane.f32.xlu0 %v2759
        %v2761 = vpop.xlane.xlu0 %2760
        %v2762 = vsel %vm1576, %v2752, 0.0
        %2763 = vadd.xlane.f32.xlu0 %v2762
        %v2764 = vpop.xlane.xlu0 %2763
        %v2765 = vrcp.pop %v2755
        %v2766 = vrcp.pop %v2758
        %v2767 = vrcp.pop %v2761
        %v2768 = vrcp.pop %v2764
        %v2769 = vmul.f32 %v2746, %v2765
        %v2770 = vmul.f32 %v2748, %v2766
        %v2771 = vmul.f32 %v2750, %v2767
        %v2772 = vmul.f32 %v2752, %v2768
        %v2773 = vpack.c.bf16 %v2770, %v2769
        %v2774 = vpack.c.bf16 %v2772, %v2771
        %v2775 = vpack.c.bf16 %v2617, %v2614
        %v2776 = vpack.c.bf16 %v2625, %v2622
        %v2778 = vsel %vm1576, %v2773, 0
        %2780 = vmatprep.subr.bf16.mxu0 0
        %2781 = vmatpush1.bf16.msra.mxu0 %v2775
        %2782 = vmatprep.subr.bf16.mxu0 0
        %2783 = vmatpush1.bf16.msra.mxu0 0
        %2784 = vmatprep.subr.bf16.mxu0 0
        %2785 = vmatpush1.bf16.msra.mxu0 0
        %2786 = vmatprep.subr.bf16.mxu0 0
        %2787 = vmatpush1.bf16.msra.mxu0 0
        %2788 = vmatprep.subr.bf16.mxu0 0
        %2789 = vmatpush1.bf16.msra.mxu0 0
        %2790 = vmatprep.subr.bf16.mxu0 0
        %2791 = vmatpush1.bf16.msra.mxu0 0
        %2792 = vmatprep.subr.bf16.mxu0 0
        %2793 = vmatpush1.bf16.msra.mxu0 0
        %2794 = vmatprep.subr.bf16.mxu0 0
        %2795 = vmatpush1.bf16.msra.mxu0 0
        %2796 = vmatprep.subr.bf16.mxu0 0
        %2797 = vmatpush1.bf16.msra.mxu0 0
        %2798 = vmatprep.subr.bf16.mxu0 0
        %2799 = vmatpush1.bf16.msra.mxu0 0
        %2800 = vmatprep.subr.bf16.mxu0 0
        %2801 = vmatpush1.bf16.msra.mxu0 0
        %2802 = vmatprep.subr.bf16.mxu0 0
        %2803 = vmatpush1.bf16.msra.mxu0 0
        %2804 = vmatprep.subr.bf16.mxu0 0
        %2805 = vmatpush1.bf16.msra.mxu0 0
        %2806 = vmatprep.subr.bf16.mxu0 0
        %2807 = vmatpush1.bf16.msra.mxu0 0
        %2808 = vmatprep.subr.bf16.mxu0 0
        %2809 = vmatpush1.bf16.msra.mxu0 0
        %2810 = vmatprep.subr.bf16.mxu0 0
        %2811 = vmatpush1.bf16.msra.mxu0 0
        %2812 = vmatprep.mubr.bf16.mxu0 0
        %2813 = vmatmul.mubr.bf16.gmra.mrb[0].mxu0 %v2778
        %v2814 = vpop.f32.mrb[0].mxu0
        %v2815 = vadd.f32 0.0, %v2814
        %v2816 = vpop.f32.mrb[0].mxu0
        %v2817 = vpop.f32.mrb[0].mxu0
        %v2818 = vadd.f32 0.0, %v2817
        %v2819 = vpop.f32.mrb[0].mxu0
        %2820 = vdwg.mxu0
        %v2822 = vsel %vm1576, %v2774, 0
        %2824 = vmatprep.subr.bf16.mxu0 0
        %2825 = vmatpush1.bf16.msra.mxu0 %v2776
        %2826 = vmatprep.subr.bf16.mxu0 0
        %2827 = vmatpush1.bf16.msra.mxu0 0
        %2828 = vmatprep.subr.bf16.mxu0 0
        %2829 = vmatpush1.bf16.msra.mxu0 0
        %2830 = vmatprep.subr.bf16.mxu0 0
        %2831 = vmatpush1.bf16.msra.mxu0 0
        %2832 = vmatprep.subr.bf16.mxu0 0
        %2833 = vmatpush1.bf16.msra.mxu0 0
        %2834 = vmatprep.subr.bf16.mxu0 0
        %2835 = vmatpush1.bf16.msra.mxu0 0
        %2836 = vmatprep.subr.bf16.mxu0 0
        %2837 = vmatpush1.bf16.msra.mxu0 0
        %2838 = vmatprep.subr.bf16.mxu0 0
        %2839 = vmatpush1.bf16.msra.mxu0 0
        %2840 = vmatprep.subr.bf16.mxu0 0
        %2841 = vmatpush1.bf16.msra.mxu0 0
        %2842 = vmatprep.subr.bf16.mxu0 0
        %2843 = vmatpush1.bf16.msra.mxu0 0
        %2844 = vmatprep.subr.bf16.mxu0 0
        %2845 = vmatpush1.bf16.msra.mxu0 0
        %2846 = vmatprep.subr.bf16.mxu0 0
        %2847 = vmatpush1.bf16.msra.mxu0 0
        %2848 = vmatprep.subr.bf16.mxu0 0
        %2849 = vmatpush1.bf16.msra.mxu0 0
        %2850 = vmatprep.subr.bf16.mxu0 0
        %2851 = vmatpush1.bf16.msra.mxu0 0
        %2852 = vmatprep.subr.bf16.mxu0 0
        %2853 = vmatpush1.bf16.msra.mxu0 0
        %2854 = vmatprep.subr.bf16.mxu0 0
        %2855 = vmatpush1.bf16.msra.mxu0 0
        %2856 = vmatprep.mubr.bf16.mxu0 0
        %2857 = vmatmul.mubr.bf16.gmra.mrb[0].mxu0 %v2822
        %v2858 = vpop.f32.mrb[0].mxu0
        %v2859 = vadd.f32 0.0, %v2858
        %v2860 = vpop.f32.mrb[0].mxu0
        %v2861 = vpop.f32.mrb[0].mxu0
        %v2862 = vadd.f32 0.0, %v2861
        %v2863 = vpop.f32.mrb[0].mxu0
        %2864 = vdwg.mxu0
        %v2865 = vpack.c.bf16 %v2818, %v2815
        %v2866 = vpack.c.bf16 %v2862, %v2859
        %v2867 = vld [vmem:[#allocation4] sm:$0xf]
        %v2868 = vld [vmem:[#allocation4 + $0x4] sm:$0xf]
        %v2869 = vld [vmem:[#allocation4 + $0x8] sm:$0xf]
        %v2870 = vld [vmem:[#allocation4 + $0xc] sm:$0xf]
        %v2871 = vld [vmem:[#allocation4 + $0x10] sm:$0xf]
        %v2872 = vld [vmem:[#allocation4 + $0x14] sm:$0xf]
        %v2873 = vld [vmem:[#allocation4 + $0x18] sm:$0xf]
        %v2874 = vld [vmem:[#allocation4 + $0x1c] sm:$0xf]
        %v2875 = vld [vmem:[#allocation4 + $0x20] sm:$0xf]
        %v2876 = vld [vmem:[#allocation4 + $0x24] sm:$0xf]
        %v2877 = vld [vmem:[#allocation4 + $0x28] sm:$0xf]
        %v2878 = vld [vmem:[#allocation4 + $0x2c] sm:$0xf]
        %v2879 = vld [vmem:[#allocation4 + $0x30] sm:$0xf]
        %v2880 = vld [vmem:[#allocation4 + $0x34] sm:$0xf]
        %v2881 = vld [vmem:[#allocation4 + $0x38] sm:$0xf]
        %v2882 = vld [vmem:[#allocation4 + $0x3c] sm:$0xf]
        %v2883 = vld [vmem:[%s37] sm:$0x1]
        %v2885 = vlaneseq
        %v2886 = vshrl.u32 %v2885, 7
        %v2887 = vsub.s32 0, %v2886
        %v2888 = vrot.slane %v2883, %v2887
        %v2906 = vunpack.c.l.b16 %v2867
        %v2907 = vunpack.c.l.b16 %v2868
        %v2908 = vunpack.c.l.b16 %v2869
        %v2909 = vunpack.c.l.b16 %v2870
        %v2910 = vunpack.c.l.b16 %v2871
        %v2911 = vunpack.c.l.b16 %v2872
        %v2912 = vunpack.c.l.b16 %v2873
        %v2913 = vunpack.c.l.b16 %v2874
        %v2914 = vunpack.c.l.b16 %v2875
        %v2915 = vunpack.c.l.b16 %v2876
        %v2916 = vunpack.c.l.b16 %v2877
        %v2917 = vunpack.c.l.b16 %v2878
        %v2918 = vunpack.c.l.b16 %v2879
        %v2919 = vunpack.c.l.b16 %v2880
        %v2920 = vunpack.c.l.b16 %v2881
        %v2921 = vunpack.c.l.b16 %v2882
        %v2922 = vpack.c.b16 %v2907, %v2906
        %v2923 = vpack.c.b16 %v2909, %v2908
        %v2924 = vpack.c.b16 %v2911, %v2910
        %v2925 = vpack.c.b16 %v2913, %v2912
        %v2926 = vpack.c.b16 %v2915, %v2914
        %v2927 = vpack.c.b16 %v2917, %v2916
        %v2928 = vpack.c.b16 %v2919, %v2918
        %v2929 = vpack.c.b16 %v2921, %v2920
        %2938 = vmatprep.subr.bf16.mxu0 0
        %2939 = vmatpush1.bf16.msra.mxu0 %v2922
        %2940 = vmatprep.subr.bf16.mxu0 0
        %2941 = vmatpush1.bf16.msra.mxu0 %v2923
        %2942 = vmatprep.subr.bf16.mxu0 0
        %2943 = vmatpush1.bf16.msra.mxu0 %v2924
        %2944 = vmatprep.subr.bf16.mxu0 0
        %2945 = vmatpush1.bf16.msra.mxu0 %v2925
        %2946 = vmatprep.subr.bf16.mxu0 0
        %2947 = vmatpush1.bf16.msra.mxu0 %v2926
        %2948 = vmatprep.subr.bf16.mxu0 0
        %2949 = vmatpush1.bf16.msra.mxu0 %v2927
        %2950 = vmatprep.subr.bf16.mxu0 0
        %2951 = vmatpush1.bf16.msra.mxu0 %v2928
        %2952 = vmatprep.subr.bf16.mxu0 0
        %2953 = vmatpush1.bf16.msra.mxu0 %v2929
        %2954 = vmatprep.subr.bf16.mxu0 0
        %2955 = vmatpush1.bf16.msra.mxu0 0
        %2956 = vmatprep.subr.bf16.mxu0 0
        %2957 = vmatpush1.bf16.msra.mxu0 0
        %2958 = vmatprep.subr.bf16.mxu0 0
        %2959 = vmatpush1.bf16.msra.mxu0 0
        %2960 = vmatprep.subr.bf16.mxu0 0
        %2961 = vmatpush1.bf16.msra.mxu0 0
        %2962 = vmatprep.subr.bf16.mxu0 0
        %2963 = vmatpush1.bf16.msra.mxu0 0
        %2964 = vmatprep.subr.bf16.mxu0 0
        %2965 = vmatpush1.bf16.msra.mxu0 0
        %2966 = vmatprep.subr.bf16.mxu0 0
        %2967 = vmatpush1.bf16.msra.mxu0 0
        %2968 = vmatprep.subr.bf16.mxu0 0
        %2969 = vmatpush1.bf16.msra.mxu0 0
        %2970 = vmatprep.mubr.bf16.mxu0 0
        %2971 = vmatmul.mubr.bf16.gmra.mrb[0].mxu0 %v2865
        %v2972 = vpop.f32.mrb[0].mxu0
        %v2973 = vadd.f32 %v2888, %v2972
        %v2974 = vpop.f32.mrb[0].mxu0
        %v2975 = vpop.f32.mrb[0].mxu0
        %v2976 = vadd.f32 %v2888, %v2975
        %v2977 = vpop.f32.mrb[0].mxu0
        %2978 = vmatprep.mubr.bf16.mxu0 0
        %2979 = vmatmul.mubr.bf16.gmra.mrb[0].mxu0 %v2866
        %v2980 = vpop.f32.mrb[0].mxu0
        %v2981 = vadd.f32 %v2888, %v2980
        %v2982 = vpop.f32.mrb[0].mxu0
        %v2983 = vpop.f32.mrb[0].mxu0
        %v2984 = vadd.f32 %v2888, %v2983
        %v2985 = vpop.f32.mrb[0].mxu0
        %2986 = vdwg.mxu0
        %v2987 = vadd.f32 %v2343, %v2973
        %v2988 = vadd.f32 %v2344, %v2976
        %v2989 = vadd.f32 %v2345, %v2981
        %v2990 = vadd.f32 %v2346, %v2984
        %2991 = vadd.xlane.f32.xlu0 %v2987
        %v2992 = vpop.xlane.xlu0 %2991
        %2993 = vadd.xlane.f32.xlu0 %v2988
        %v2994 = vpop.xlane.xlu0 %2993
        %2995 = vadd.xlane.f32.xlu0 %v2989
        %v2996 = vpop.xlane.xlu0 %2995
        %2997 = vadd.xlane.f32.xlu0 %v2990
        %v2998 = vpop.xlane.xlu0 %2997
        %v2999 = vmul.f32 %v2992, %v1847
        %v3000 = vmul.f32 %v2994, %v1847
        %v3001 = vmul.f32 %v2996, %v1847
        %v3002 = vmul.f32 %v2998, %v1847
        %v3003 = vsub.f32 %v2987, %v2999
        %v3004 = vsub.f32 %v2988, %v3000
        %v3005 = vsub.f32 %v2989, %v3001
        %v3006 = vsub.f32 %v2990, %v3002
        %v3007 = vmul.f32 %v3003, %v3003
        %v3008 = vmul.f32 %v3004, %v3004
        %v3009 = vmul.f32 %v3005, %v3005
        %v3010 = vmul.f32 %v3006, %v3006
        %3011 = vadd.xlane.f32.xlu0 %v3007
        %v3012 = vpop.xlane.xlu0 %3011
        %3013 = vadd.xlane.f32.xlu0 %v3008
        %v3014 = vpop.xlane.xlu0 %3013
        %3015 = vadd.xlane.f32.xlu0 %v3009
        %v3016 = vpop.xlane.xlu0 %3015
        %3017 = vadd.xlane.f32.xlu0 %v3010
        %v3018 = vpop.xlane.xlu0 %3017
        %v3019 = vmul.f32 %v3012, %v1847
        %v3020 = vmul.f32 %v3014, %v1847
        %v3021 = vmul.f32 %v3016, %v1847
        %v3022 = vmul.f32 %v3018, %v1847
        %v3023 = vadd.f32 %v3019, 1e-05
        %v3024 = vadd.f32 %v3020, 1e-05
        %v3025 = vadd.f32 %v3021, 1e-05
        %v3026 = vadd.f32 %v3022, 1e-05
        %v3027 = vrsqrt.pop %v3023
        %v3028 = vrsqrt.pop %v3024
        %v3029 = vrsqrt.pop %v3025
        %v3030 = vrsqrt.pop %v3026
        %v3031 = vmul.f32 %v3003, %v3027
        %v3032 = vmul.f32 %v3004, %v3028
        %v3033 = vmul.f32 %v3005, %v3029
        %v3034 = vmul.f32 %v3006, %v3030
        %v3035 = vld [vmem:[%s39] sm:$0x1]
        %v3037 = vlaneseq
        %v3038 = vshrl.u32 %v3037, 7
        %v3039 = vsub.s32 0, %v3038
        %v3040 = vrot.slane %v3035, %v3039
        %v3042 = vmul.f32 %v3031, %v3040
        %v3043 = vmul.f32 %v3032, %v3040
        %v3044 = vmul.f32 %v3033, %v3040
        %v3045 = vmul.f32 %v3034, %v3040
        %v3046 = vld [vmem:[%s41] sm:$0x1]
        %v3048 = vlaneseq
        %v3049 = vshrl.u32 %v3048, 7
        %v3050 = vsub.s32 0, %v3049
        %v3051 = vrot.slane %v3046, %v3050
        %v3053 = vadd.f32 %v3042, %v3051
        %v3054 = vadd.f32 %v3043, %v3051
        %v3055 = vadd.f32 %v3044, %v3051
        %v3056 = vadd.f32 %v3045, %v3051
        %v3057 = vpack.c.bf16 %v3054, %v3053
        %v3058 = vpack.c.bf16 %v3056, %v3055
        %v3059 = vld [vmem:[#allocation6] sm:$0xf]
        %v3060 = vld [vmem:[#allocation6 + $0x4] sm:$0xf]
        %v3061 = vld [vmem:[#allocation6 + $0x8] sm:$0xf]
        %v3062 = vld [vmem:[#allocation6 + $0xc] sm:$0xf]
        %v3063 = vld [vmem:[#allocation6 + $0x10] sm:$0xf]
        %v3064 = vld [vmem:[#allocation6 + $0x14] sm:$0xf]
        %v3065 = vld [vmem:[#allocation6 + $0x18] sm:$0xf]
        %v3066 = vld [vmem:[#allocation6 + $0x1c] sm:$0xf]
        %v3067 = vld [vmem:[#allocation6 + $0x20] sm:$0xf]
        %v3068 = vld [vmem:[#allocation6 + $0x24] sm:$0xf]
        %v3069 = vld [vmem:[#allocation6 + $0x28] sm:$0xf]
        %v3070 = vld [vmem:[#allocation6 + $0x2c] sm:$0xf]
        %v3071 = vld [vmem:[#allocation6 + $0x30] sm:$0xf]
        %v3072 = vld [vmem:[#allocation6 + $0x34] sm:$0xf]
        %v3073 = vld [vmem:[#allocation6 + $0x38] sm:$0xf]
        %v3074 = vld [vmem:[#allocation6 + $0x3c] sm:$0xf]
        %v3075 = vld [vmem:[%s45] sm:$0x1]
        %v3077 = vlaneseq
        %v3078 = vshrl.u32 %v3077, 7
        %v3079 = vsub.s32 0, %v3078
        %v3080 = vrot.slane %v3075, %v3079
        %v3098 = vunpack.c.l.b16 %v3059
        %v3099 = vunpack.c.l.b16 %v3060
        %v3100 = vunpack.c.l.b16 %v3061
        %v3101 = vunpack.c.l.b16 %v3062
        %v3102 = vunpack.c.l.b16 %v3063
        %v3103 = vunpack.c.l.b16 %v3064
        %v3104 = vunpack.c.l.b16 %v3065
        %v3105 = vunpack.c.l.b16 %v3066
        %v3106 = vunpack.c.l.b16 %v3067
        %v3107 = vunpack.c.l.b16 %v3068
        %v3108 = vunpack.c.l.b16 %v3069
        %v3109 = vunpack.c.l.b16 %v3070
        %v3110 = vunpack.c.l.b16 %v3071
        %v3111 = vunpack.c.l.b16 %v3072
        %v3112 = vunpack.c.l.b16 %v3073
        %v3113 = vunpack.c.l.b16 %v3074
        %v3114 = vpack.c.b16 %v3099, %v3098
        %v3115 = vpack.c.b16 %v3101, %v3100
        %v3116 = vpack.c.b16 %v3103, %v3102
        %v3117 = vpack.c.b16 %v3105, %v3104
        %v3118 = vpack.c.b16 %v3107, %v3106
        %v3119 = vpack.c.b16 %v3109, %v3108
        %v3120 = vpack.c.b16 %v3111, %v3110
        %v3121 = vpack.c.b16 %v3113, %v3112
        %3130 = vmatprep.subr.bf16.mxu0 0
        %3131 = vmatpush1.bf16.msra.mxu0 %v3114
        %3132 = vmatprep.subr.bf16.mxu0 0
        %3133 = vmatpush1.bf16.msra.mxu0 %v3115
        %3134 = vmatprep.subr.bf16.mxu0 0
        %3135 = vmatpush1.bf16.msra.mxu0 %v3116
        %3136 = vmatprep.subr.bf16.mxu0 0
        %3137 = vmatpush1.bf16.msra.mxu0 %v3117
        %3138 = vmatprep.subr.bf16.mxu0 0
        %3139 = vmatpush1.bf16.msra.mxu0 %v3118
        %3140 = vmatprep.subr.bf16.mxu0 0
        %3141 = vmatpush1.bf16.msra.mxu0 %v3119
        %3142 = vmatprep.subr.bf16.mxu0 0
        %3143 = vmatpush1.bf16.msra.mxu0 %v3120
        %3144 = vmatprep.subr.bf16.mxu0 0
        %3145 = vmatpush1.bf16.msra.mxu0 %v3121
        %3146 = vmatprep.subr.bf16.mxu0 0
        %3147 = vmatpush1.bf16.msra.mxu0 0
        %3148 = vmatprep.subr.bf16.mxu0 0
        %3149 = vmatpush1.bf16.msra.mxu0 0
        %3150 = vmatprep.subr.bf16.mxu0 0
        %3151 = vmatpush1.bf16.msra.mxu0 0
        %3152 = vmatprep.subr.bf16.mxu0 0
        %3153 = vmatpush1.bf16.msra.mxu0 0
        %3154 = vmatprep.subr.bf16.mxu0 0
        %3155 = vmatpush1.bf16.msra.mxu0 0
        %3156 = vmatprep.subr.bf16.mxu0 0
        %3157 = vmatpush1.bf16.msra.mxu0 0
        %3158 = vmatprep.subr.bf16.mxu0 0
        %3159 = vmatpush1.bf16.msra.mxu0 0
        %3160 = vmatprep.subr.bf16.mxu0 0
        %3161 = vmatpush1.bf16.msra.mxu0 0
        %3162 = vmatprep.mubr.bf16.mxu0 0
        %3163 = vmatmul.mubr.bf16.gmra.mrb[0].mxu0 %v3057
        %v3164 = vpop.f32.mrb[0].mxu0
        %v3165 = vadd.f32 %v3080, %v3164
        %v3166 = vpop.f32.mrb[0].mxu0
        %v3167 = vpop.f32.mrb[0].mxu0
        %v3168 = vadd.f32 %v3080, %v3167
        %v3169 = vpop.f32.mrb[0].mxu0
        %3170 = vmatprep.mubr.bf16.mxu0 0
        %3171 = vmatmul.mubr.bf16.gmra.mrb[0].mxu0 %v3058
        %v3172 = vpop.f32.mrb[0].mxu0
        %v3173 = vadd.f32 %v3080, %v3172
        %v3174 = vpop.f32.mrb[0].mxu0
        %v3175 = vpop.f32.mrb[0].mxu0
        %v3176 = vadd.f32 %v3080, %v3175
        %v3177 = vpop.f32.mrb[0].mxu0
        %3178 = vdwg.mxu0
        %v3179 = vpack.c.bf16 %v2332, %v2331
        %v3180 = vpack.c.bf16 %v2334, %v2333
        %v3181 = vld [vmem:[%s47] sm:$0xff]
        %v3182 = vld [vmem:[%s47 + $0x8] sm:$0xff]
        %v3183 = vld [vmem:[%s47 + $0x10] sm:$0xff]
        %v3184 = vld [vmem:[%s47 + $0x18] sm:$0xff]
        %v3185 = vld [vmem:[%s47 + $0x20] sm:$0xff]
        %v3186 = vld [vmem:[%s47 + $0x28] sm:$0xff]
        %v3187 = vld [vmem:[%s47 + $0x30] sm:$0xff]
        %v3188 = vld [vmem:[%s47 + $0x38] sm:$0xff]
        %v3189 = vld [vmem:[%s47 + $0x40] sm:$0xff]
        %v3190 = vld [vmem:[%s47 + $0x48] sm:$0xff]
        %v3191 = vld [vmem:[%s47 + $0x50] sm:$0xff]
        %v3192 = vld [vmem:[%s47 + $0x58] sm:$0xff]
        %v3193 = vld [vmem:[%s47 + $0x60] sm:$0xff]
        %v3194 = vld [vmem:[%s47 + $0x68] sm:$0xff]
        %v3195 = vld [vmem:[%s47 + $0x70] sm:$0xff]
        %v3196 = vld [vmem:[%s47 + $0x78] sm:$0xff]
        %v3197 = vld [vmem:[%s49] sm:$0x3]
        %v3199 = vlaneseq
        %v3200 = vshrl.u32 %v3199, 7
        %v3201 = vsub.s32 0, %v3200
        %v3202 = vrot.slane %v3197, %v3201
        %v3203 = vlaneseq
        %v3204 = vshrl.u32 %v3203, 7
        %v3205 = vsub.s32 1, %v3204
        %v3206 = vrot.slane %v3197, %v3205
        %v3225 = vunpack.c.l.b16 %v3181
        %v3226 = vunpack.c.h.b16 %v3181
        %v3227 = vunpack.c.l.b16 %v3182
        %v3228 = vunpack.c.h.b16 %v3182
        %v3229 = vunpack.c.l.b16 %v3183
        %v3230 = vunpack.c.h.b16 %v3183
        %v3231 = vunpack.c.l.b16 %v3184
        %v3232 = vunpack.c.h.b16 %v3184
        %v3233 = vunpack.c.l.b16 %v3185
        %v3234 = vunpack.c.h.b16 %v3185
        %v3235 = vunpack.c.l.b16 %v3186
        %v3236 = vunpack.c.h.b16 %v3186
        %v3237 = vunpack.c.l.b16 %v3187
        %v3238 = vunpack.c.h.b16 %v3187
        %v3239 = vunpack.c.l.b16 %v3188
        %v3240 = vunpack.c.h.b16 %v3188
        %v3241 = vunpack.c.l.b16 %v3189
        %v3242 = vunpack.c.h.b16 %v3189
        %v3243 = vunpack.c.l.b16 %v3190
        %v3244 = vunpack.c.h.b16 %v3190
        %v3245 = vunpack.c.l.b16 %v3191
        %v3246 = vunpack.c.h.b16 %v3191
        %v3247 = vunpack.c.l.b16 %v3192
        %v3248 = vunpack.c.h.b16 %v3192
        %v3249 = vunpack.c.l.b16 %v3193
        %v3250 = vunpack.c.h.b16 %v3193
        %v3251 = vunpack.c.l.b16 %v3194
        %v3252 = vunpack.c.h.b16 %v3194
        %v3253 = vunpack.c.l.b16 %v3195
        %v3254 = vunpack.c.h.b16 %v3195
        %v3255 = vunpack.c.l.b16 %v3196
        %v3256 = vunpack.c.h.b16 %v3196
        %v3257 = vpack.c.b16 %v3227, %v3225
        %v3258 = vpack.c.b16 %v3228, %v3226
        %v3259 = vpack.c.b16 %v3231, %v3229
        %v3260 = vpack.c.b16 %v3232, %v3230
        %v3261 = vpack.c.b16 %v3235, %v3233
        %v3262 = vpack.c.b16 %v3236, %v3234
        %v3263 = vpack.c.b16 %v3239, %v3237
        %v3264 = vpack.c.b16 %v3240, %v3238
        %v3265 = vpack.c.b16 %v3243, %v3241
        %v3266 = vpack.c.b16 %v3244, %v3242
        %v3267 = vpack.c.b16 %v3247, %v3245
        %v3268 = vpack.c.b16 %v3248, %v3246
        %v3269 = vpack.c.b16 %v3251, %v3249
        %v3270 = vpack.c.b16 %v3252, %v3250
        %v3271 = vpack.c.b16 %v3255, %v3253
        %v3272 = vpack.c.b16 %v3256, %v3254
        %3289 = vmatprep.subr.bf16.mxu0 %v3258
        %3290 = vmatpush1.bf16.msra.mxu0 %v3257
        %3291 = vmatprep.subr.bf16.mxu0 %v3260
        %3292 = vmatpush1.bf16.msra.mxu0 %v3259
        %3293 = vmatprep.subr.bf16.mxu0 %v3262
        %3294 = vmatpush1.bf16.msra.mxu0 %v3261
        %3295 = vmatprep.subr.bf16.mxu0 %v3264
        %3296 = vmatpush1.bf16.msra.mxu0 %v3263
        %3297 = vmatprep.subr.bf16.mxu0 %v3266
        %3298 = vmatpush1.bf16.msra.mxu0 %v3265
        %3299 = vmatprep.subr.bf16.mxu0 %v3268
        %3300 = vmatpush1.bf16.msra.mxu0 %v3267
        %3301 = vmatprep.subr.bf16.mxu0 %v3270
        %3302 = vmatpush1.bf16.msra.mxu0 %v3269
        %3303 = vmatprep.subr.bf16.mxu0 %v3272
        %3304 = vmatpush1.bf16.msra.mxu0 %v3271
        %3305 = vmatprep.subr.bf16.mxu0 0
        %3306 = vmatpush1.bf16.msra.mxu0 0
        %3307 = vmatprep.subr.bf16.mxu0 0
        %3308 = vmatpush1.bf16.msra.mxu0 0
        %3309 = vmatprep.subr.bf16.mxu0 0
        %3310 = vmatpush1.bf16.msra.mxu0 0
        %3311 = vmatprep.subr.bf16.mxu0 0
        %3312 = vmatpush1.bf16.msra.mxu0 0
        %3313 = vmatprep.subr.bf16.mxu0 0
        %3314 = vmatpush1.bf16.msra.mxu0 0
        %3315 = vmatprep.subr.bf16.mxu0 0
        %3316 = vmatpush1.bf16.msra.mxu0 0
        %3317 = vmatprep.subr.bf16.mxu0 0
        %3318 = vmatpush1.bf16.msra.mxu0 0
        %3319 = vmatprep.subr.bf16.mxu0 0
        %3320 = vmatpush1.bf16.msra.mxu0 0
        %3321 = vmatprep.mubr.bf16.mxu0 0
        %3322 = vmatmul.mubr.bf16.gmra.mrb[0].mxu0 %v3179
        %v3323 = vpop.f32.mrb[0].mxu0
        %v3324 = vadd.f32 %v3202, %v3323
        %v3325 = vpop.f32.mrb[0].mxu0
        %v3326 = vadd.f32 %v3206, %v3325
        %v3327 = vpop.f32.mrb[0].mxu0
        %v3328 = vadd.f32 %v3202, %v3327
        %v3329 = vpop.f32.mrb[0].mxu0
        %v3330 = vadd.f32 %v3206, %v3329
        %3331 = vmatprep.mubr.bf16.mxu0 0
        %3332 = vmatmul.mubr.bf16.gmra.mrb[0].mxu0 %v3180
        %v3333 = vpop.f32.mrb[0].mxu0
        %v3334 = vadd.f32 %v3202, %v3333
        %v3335 = vpop.f32.mrb[0].mxu0
        %v3336 = vadd.f32 %v3206, %v3335
        %v3337 = vpop.f32.mrb[0].mxu0
        %v3338 = vadd.f32 %v3202, %v3337
        %v3339 = vpop.f32.mrb[0].mxu0
        %v3340 = vadd.f32 %v3206, %v3339
        %3341 = vdwg.mxu0
        %v3342 = vpack.c.bf16 %v3168, %v3165
        %v3343 = vpack.c.bf16 %v3176, %v3173
        %v3344 = vpack.c.bf16 %v3328, %v3324
        %v3345 = vpack.c.bf16 %v3338, %v3334
        %3346 = vmatprep.subr.bf16.mxu0 0
        %3347 = vmatpush1.bf16.xpose.msra.mxu0 %v3344
        %3348 = vmatprep.subr.bf16.mxu0 0
        %3349 = vmatpush1.bf16.xpose.msra.mxu0 0
        %3350 = vmatprep.subr.bf16.mxu0 0
        %3351 = vmatpush1.bf16.xpose.msra.mxu0 0
        %3352 = vmatprep.subr.bf16.mxu0 0
        %3353 = vmatpush1.bf16.xpose.msra.mxu0 0
        %3354 = vmatprep.subr.bf16.mxu0 0
        %3355 = vmatpush1.bf16.xpose.msra.mxu0 0
        %3356 = vmatprep.subr.bf16.mxu0 0
        %3357 = vmatpush1.bf16.xpose.msra.mxu0 0
        %3358 = vmatprep.subr.bf16.mxu0 0
        %3359 = vmatpush1.bf16.xpose.msra.mxu0 0
        %3360 = vmatprep.subr.bf16.mxu0 0
        %3361 = vmatpush1.bf16.xpose.msra.mxu0 0
        %3362 = vmatprep.subr.bf16.mxu0 0
        %3363 = vmatpush1.bf16.xpose.msra.mxu0 0
        %3364 = vmatprep.subr.bf16.mxu0 0
        %3365 = vmatpush1.bf16.xpose.msra.mxu0 0
        %3366 = vmatprep.subr.bf16.mxu0 0
        %3367 = vmatpush1.bf16.xpose.msra.mxu0 0
        %3368 = vmatprep.subr.bf16.mxu0 0
        %3369 = vmatpush1.bf16.xpose.msra.mxu0 0
        %3370 = vmatprep.subr.bf16.mxu0 0
        %3371 = vmatpush1.bf16.xpose.msra.mxu0 0
        %3372 = vmatprep.subr.bf16.mxu0 0
        %3373 = vmatpush1.bf16.xpose.msra.mxu0 0
        %3374 = vmatprep.subr.bf16.mxu0 0
        %3375 = vmatpush1.bf16.xpose.msra.mxu0 0
        %3376 = vmatprep.subr.bf16.mxu0 0
        %3377 = vmatpush1.bf16.xpose.msra.mxu0 0
        %3378 = vmatprep.mubr.bf16.mxu0 0
        %3379 = vmatmul.mubr.bf16.gmra.mrb[0].mxu0 %v3342
        %v3380 = vpop.f32.mrb[0].mxu0
        %v3381 = vadd.f32 0.0, %v3380
        %v3382 = vpop.f32.mrb[0].mxu0
        %v3383 = vpop.f32.mrb[0].mxu0
        %v3384 = vadd.f32 0.0, %v3383
        %v3385 = vpop.f32.mrb[0].mxu0
        %3386 = vdwg.mxu0
        %3387 = vmatprep.subr.bf16.mxu0 0
        %3388 = vmatpush1.bf16.xpose.msra.mxu0 %v3345
        %3389 = vmatprep.subr.bf16.mxu0 0
        %3390 = vmatpush1.bf16.xpose.msra.mxu0 0
        %3391 = vmatprep.subr.bf16.mxu0 0
        %3392 = vmatpush1.bf16.xpose.msra.mxu0 0
        %3393 = vmatprep.subr.bf16.mxu0 0
        %3394 = vmatpush1.bf16.xpose.msra.mxu0 0
        %3395 = vmatprep.subr.bf16.mxu0 0
        %3396 = vmatpush1.bf16.xpose.msra.mxu0 0
        %3397 = vmatprep.subr.bf16.mxu0 0
        %3398 = vmatpush1.bf16.xpose.msra.mxu0 0
        %3399 = vmatprep.subr.bf16.mxu0 0
        %3400 = vmatpush1.bf16.xpose.msra.mxu0 0
        %3401 = vmatprep.subr.bf16.mxu0 0
        %3402 = vmatpush1.bf16.xpose.msra.mxu0 0
        %3403 = vmatprep.subr.bf16.mxu0 0
        %3404 = vmatpush1.bf16.xpose.msra.mxu0 0
        %3405 = vmatprep.subr.bf16.mxu0 0
        %3406 = vmatpush1.bf16.xpose.msra.mxu0 0
        %3407 = vmatprep.subr.bf16.mxu0 0
        %3408 = vmatpush1.bf16.xpose.msra.mxu0 0
        %3409 = vmatprep.subr.bf16.mxu0 0
        %3410 = vmatpush1.bf16.xpose.msra.mxu0 0
        %3411 = vmatprep.subr.bf16.mxu0 0
        %3412 = vmatpush1.bf16.xpose.msra.mxu0 0
        %3413 = vmatprep.subr.bf16.mxu0 0
        %3414 = vmatpush1.bf16.xpose.msra.mxu0 0
        %3415 = vmatprep.subr.bf16.mxu0 0
        %3416 = vmatpush1.bf16.xpose.msra.mxu0 0
        %3417 = vmatprep.subr.bf16.mxu0 0
        %3418 = vmatpush1.bf16.xpose.msra.mxu0 0
        %3419 = vmatprep.mubr.bf16.mxu0 0
        %3420 = vmatmul.mubr.bf16.gmra.mrb[0].mxu0 %v3343
        %v3421 = vpop.f32.mrb[0].mxu0
        %v3422 = vadd.f32 0.0, %v3421
        %v3423 = vpop.f32.mrb[0].mxu0
        %v3424 = vpop.f32.mrb[0].mxu0
        %v3425 = vadd.f32 0.0, %v3424
        %v3426 = vpop.f32.mrb[0].mxu0
        %3427 = vdwg.mxu0
        %v3428 = vmul.f32 %v3381, 0.125
        %v3429 = vmul.f32 %v3384, 0.125
        %v3430 = vmul.f32 %v3422, 0.125
        %v3431 = vmul.f32 %v3425, 0.125
        %v3432 = vsel %vm1576, %v3428, -inf
        %3433 = vmax.xlane.f32.xlu0 %v3432
        %v3434 = vpop.xlane.xlu0 %3433
        %v3435 = vsel %vm1576, %v3429, -inf
        %3436 = vmax.xlane.f32.xlu0 %v3435
        %v3437 = vpop.xlane.xlu0 %3436
        %v3438 = vsel %vm1576, %v3430, -inf
        %3439 = vmax.xlane.f32.xlu0 %v3438
        %v3440 = vpop.xlane.xlu0 %3439
        %v3441 = vsel %vm1576, %v3431, -inf
        %3442 = vmax.xlane.f32.xlu0 %v3441
        %v3443 = vpop.xlane.xlu0 %3442
        %v3444 = vsub.f32 %v3428, %v3434
        %v3445 = vsub.f32 %v3429, %v3437
        %v3446 = vsub.f32 %v3430, %v3440
        %v3447 = vsub.f32 %v3431, %v3443
        %v3448 = vmul.f32 %v3444, 1.442695
        %v3449 = vpow.pop %v3448
        %v3450 = vmul.f32 %v3445, 1.442695
        %v3451 = vpow.pop %v3450
        %v3452 = vmul.f32 %v3446, 1.442695
        %v3453 = vpow.pop %v3452
        %v3454 = vmul.f32 %v3447, 1.442695
        %v3455 = vpow.pop %v3454
        %v3456 = vsel %vm1576, %v3449, 0.0
        %3457 = vadd.xlane.f32.xlu0 %v3456
        %v3458 = vpop.xlane.xlu0 %3457
        %v3459 = vsel %vm1576, %v3451, 0.0
        %3460 = vadd.xlane.f32.xlu0 %v3459
        %v3461 = vpop.xlane.xlu0 %3460
        %v3462 = vsel %vm1576, %v3453, 0.0
        %3463 = vadd.xlane.f32.xlu0 %v3462
        %v3464 = vpop.xlane.xlu0 %3463
        %v3465 = vsel %vm1576, %v3455, 0.0
        %3466 = vadd.xlane.f32.xlu0 %v3465
        %v3467 = vpop.xlane.xlu0 %3466
        %v3468 = vrcp.pop %v3458
        %v3469 = vrcp.pop %v3461
        %v3470 = vrcp.pop %v3464
        %v3471 = vrcp.pop %v3467
        %v3472 = vmul.f32 %v3449, %v3468
        %v3473 = vmul.f32 %v3451, %v3469
        %v3474 = vmul.f32 %v3453, %v3470
        %v3475 = vmul.f32 %v3455, %v3471
        %v3476 = vpack.c.bf16 %v3473, %v3472
        %v3477 = vpack.c.bf16 %v3475, %v3474
        %v3478 = vpack.c.bf16 %v3330, %v3326
        %v3479 = vpack.c.bf16 %v3340, %v3336
        %v3481 = vsel %vm1576, %v3476, 0
        %3483 = vmatprep.subr.bf16.mxu0 0
        %3484 = vmatpush1.bf16.msra.mxu0 %v3478
        %3485 = vmatprep.subr.bf16.mxu0 0
        %3486 = vmatpush1.bf16.msra.mxu0 0
        %3487 = vmatprep.subr.bf16.mxu0 0
        %3488 = vmatpush1.bf16.msra.mxu0 0
        %3489 = vmatprep.subr.bf16.mxu0 0
        %3490 = vmatpush1.bf16.msra.mxu0 0
        %3491 = vmatprep.subr.bf16.mxu0 0
        %3492 = vmatpush1.bf16.msra.mxu0 0
        %3493 = vmatprep.subr.bf16.mxu0 0
        %3494 = vmatpush1.bf16.msra.mxu0 0
        %3495 = vmatprep.subr.bf16.mxu0 0
        %3496 = vmatpush1.bf16.msra.mxu0 0
        %3497 = vmatprep.subr.bf16.mxu0 0
        %3498 = vmatpush1.bf16.msra.mxu0 0
        %3499 = vmatprep.subr.bf16.mxu0 0
        %3500 = vmatpush1.bf16.msra.mxu0 0
        %3501 = vmatprep.subr.bf16.mxu0 0
        %3502 = vmatpush1.bf16.msra.mxu0 0
        %3503 = vmatprep.subr.bf16.mxu0 0
        %3504 = vmatpush1.bf16.msra.mxu0 0
        %3505 = vmatprep.subr.bf16.mxu0 0
        %3506 = vmatpush1.bf16.msra.mxu0 0
        %3507 = vmatprep.subr.bf16.mxu0 0
        %3508 = vmatpush1.bf16.msra.mxu0 0
        %3509 = vmatprep.subr.bf16.mxu0 0
        %3510 = vmatpush1.bf16.msra.mxu0 0
        %3511 = vmatprep.subr.bf16.mxu0 0
        %3512 = vmatpush1.bf16.msra.mxu0 0
        %3513 = vmatprep.subr.bf16.mxu0 0
        %3514 = vmatpush1.bf16.msra.mxu0 0
        %3515 = vmatprep.mubr.bf16.mxu0 0
        %3516 = vmatmul.mubr.bf16.gmra.mrb[0].mxu0 %v3481
        %v3517 = vpop.f32.mrb[0].mxu0
        %v3518 = vadd.f32 0.0, %v3517
        %v3519 = vpop.f32.mrb[0].mxu0
        %v3520 = vpop.f32.mrb[0].mxu0
        %v3521 = vadd.f32 0.0, %v3520
        %v3522 = vpop.f32.mrb[0].mxu0
        %3523 = vdwg.mxu0
        %v3525 = vsel %vm1576, %v3477, 0
        %3527 = vmatprep.subr.bf16.mxu0 0
        %3528 = vmatpush1.bf16.msra.mxu0 %v3479
        %3529 = vmatprep.subr.bf16.mxu0 0
        %3530 = vmatpush1.bf16.msra.mxu0 0
        %3531 = vmatprep.subr.bf16.mxu0 0
        %3532 = vmatpush1.bf16.msra.mxu0 0
        %3533 = vmatprep.subr.bf16.mxu0 0
        %3534 = vmatpush1.bf16.msra.mxu0 0
        %3535 = vmatprep.subr.bf16.mxu0 0
        %3536 = vmatpush1.bf16.msra.mxu0 0
        %3537 = vmatprep.subr.bf16.mxu0 0
        %3538 = vmatpush1.bf16.msra.mxu0 0
        %3539 = vmatprep.subr.bf16.mxu0 0
        %3540 = vmatpush1.bf16.msra.mxu0 0
        %3541 = vmatprep.subr.bf16.mxu0 0
        %3542 = vmatpush1.bf16.msra.mxu0 0
        %3543 = vmatprep.subr.bf16.mxu0 0
        %3544 = vmatpush1.bf16.msra.mxu0 0
        %3545 = vmatprep.subr.bf16.mxu0 0
        %3546 = vmatpush1.bf16.msra.mxu0 0
        %3547 = vmatprep.subr.bf16.mxu0 0
        %3548 = vmatpush1.bf16.msra.mxu0 0
        %3549 = vmatprep.subr.bf16.mxu0 0
        %3550 = vmatpush1.bf16.msra.mxu0 0
        %3551 = vmatprep.subr.bf16.mxu0 0
        %3552 = vmatpush1.bf16.msra.mxu0 0
        %3553 = vmatprep.subr.bf16.mxu0 0
        %3554 = vmatpush1.bf16.msra.mxu0 0
        %3555 = vmatprep.subr.bf16.mxu0 0
        %3556 = vmatpush1.bf16.msra.mxu0 0
        %3557 = vmatprep.subr.bf16.mxu0 0
        %3558 = vmatpush1.bf16.msra.mxu0 0
        %3559 = vmatprep.mubr.bf16.mxu0 0
        %3560 = vmatmul.mubr.bf16.gmra.mrb[0].mxu0 %v3525
        %v3561 = vpop.f32.mrb[0].mxu0
        %v3562 = vadd.f32 0.0, %v3561
        %v3563 = vpop.f32.mrb[0].mxu0
        %v3564 = vpop.f32.mrb[0].mxu0
        %v3565 = vadd.f32 0.0, %v3564
        %v3566 = vpop.f32.mrb[0].mxu0
        %3567 = vdwg.mxu0
        %v3568 = vpack.c.bf16 %v3521, %v3518
        %v3569 = vpack.c.bf16 %v3565, %v3562
        %v3570 = vld [vmem:[#allocation7] sm:$0xf]
        %v3571 = vld [vmem:[#allocation7 + $0x4] sm:$0xf]
        %v3572 = vld [vmem:[#allocation7 + $0x8] sm:$0xf]
        %v3573 = vld [vmem:[#allocation7 + $0xc] sm:$0xf]
        %v3574 = vld [vmem:[#allocation7 + $0x10] sm:$0xf]
        %v3575 = vld [vmem:[#allocation7 + $0x14] sm:$0xf]
        %v3576 = vld [vmem:[#allocation7 + $0x18] sm:$0xf]
        %v3577 = vld [vmem:[#allocation7 + $0x1c] sm:$0xf]
        %v3578 = vld [vmem:[#allocation7 + $0x20] sm:$0xf]
        %v3579 = vld [vmem:[#allocation7 + $0x24] sm:$0xf]
        %v3580 = vld [vmem:[#allocation7 + $0x28] sm:$0xf]
        %v3581 = vld [vmem:[#allocation7 + $0x2c] sm:$0xf]
        %v3582 = vld [vmem:[#allocation7 + $0x30] sm:$0xf]
        %v3583 = vld [vmem:[#allocation7 + $0x34] sm:$0xf]
        %v3584 = vld [vmem:[#allocation7 + $0x38] sm:$0xf]
        %v3585 = vld [vmem:[#allocation7 + $0x3c] sm:$0xf]
        %v3586 = vld [vmem:[%s53] sm:$0x1]
        %v3588 = vlaneseq
        %v3589 = vshrl.u32 %v3588, 7
        %v3590 = vsub.s32 0, %v3589
        %v3591 = vrot.slane %v3586, %v3590
        %v3609 = vunpack.c.l.b16 %v3570
        %v3610 = vunpack.c.l.b16 %v3571
        %v3611 = vunpack.c.l.b16 %v3572
        %v3612 = vunpack.c.l.b16 %v3573
        %v3613 = vunpack.c.l.b16 %v3574
        %v3614 = vunpack.c.l.b16 %v3575
        %v3615 = vunpack.c.l.b16 %v3576
        %v3616 = vunpack.c.l.b16 %v3577
        %v3617 = vunpack.c.l.b16 %v3578
        %v3618 = vunpack.c.l.b16 %v3579
        %v3619 = vunpack.c.l.b16 %v3580
        %v3620 = vunpack.c.l.b16 %v3581
        %v3621 = vunpack.c.l.b16 %v3582
        %v3622 = vunpack.c.l.b16 %v3583
        %v3623 = vunpack.c.l.b16 %v3584
        %v3624 = vunpack.c.l.b16 %v3585
        %v3625 = vpack.c.b16 %v3610, %v3609
        %v3626 = vpack.c.b16 %v3612, %v3611
        %v3627 = vpack.c.b16 %v3614, %v3613
        %v3628 = vpack.c.b16 %v3616, %v3615
        %v3629 = vpack.c.b16 %v3618, %v3617
        %v3630 = vpack.c.b16 %v3620, %v3619
        %v3631 = vpack.c.b16 %v3622, %v3621
        %v3632 = vpack.c.b16 %v3624, %v3623
        %3641 = vmatprep.subr.bf16.mxu0 0
        %3642 = vmatpush1.bf16.msra.mxu0 %v3625
        %3643 = vmatprep.subr.bf16.mxu0 0
        %3644 = vmatpush1.bf16.msra.mxu0 %v3626
        %3645 = vmatprep.subr.bf16.mxu0 0
        %3646 = vmatpush1.bf16.msra.mxu0 %v3627
        %3647 = vmatprep.subr.bf16.mxu0 0
        %3648 = vmatpush1.bf16.msra.mxu0 %v3628
        %3649 = vmatprep.subr.bf16.mxu0 0
        %3650 = vmatpush1.bf16.msra.mxu0 %v3629
        %3651 = vmatprep.subr.bf16.mxu0 0
        %3652 = vmatpush1.bf16.msra.mxu0 %v3630
        %3653 = vmatprep.subr.bf16.mxu0 0
        %3654 = vmatpush1.bf16.msra.mxu0 %v3631
        %3655 = vmatprep.subr.bf16.mxu0 0
        %3656 = vmatpush1.bf16.msra.mxu0 %v3632
        %3657 = vmatprep.subr.bf16.mxu0 0
        %3658 = vmatpush1.bf16.msra.mxu0 0
        %3659 = vmatprep.subr.bf16.mxu0 0
        %3660 = vmatpush1.bf16.msra.mxu0 0
        %3661 = vmatprep.subr.bf16.mxu0 0
        %3662 = vmatpush1.bf16.msra.mxu0 0
        %3663 = vmatprep.subr.bf16.mxu0 0
        %3664 = vmatpush1.bf16.msra.mxu0 0
        %3665 = vmatprep.subr.bf16.mxu0 0
        %3666 = vmatpush1.bf16.msra.mxu0 0
        %3667 = vmatprep.subr.bf16.mxu0 0
        %3668 = vmatpush1.bf16.msra.mxu0 0
        %3669 = vmatprep.subr.bf16.mxu0 0
        %3670 = vmatpush1.bf16.msra.mxu0 0
        %3671 = vmatprep.subr.bf16.mxu0 0
        %3672 = vmatpush1.bf16.msra.mxu0 0
        %3673 = vmatprep.mubr.bf16.mxu0 0
        %3674 = vmatmul.mubr.bf16.gmra.mrb[0].mxu0 %v3568
        %v3675 = vpop.f32.mrb[0].mxu0
        %v3676 = vadd.f32 %v3591, %v3675
        %v3677 = vpop.f32.mrb[0].mxu0
        %v3678 = vpop.f32.mrb[0].mxu0
        %v3679 = vadd.f32 %v3591, %v3678
        %v3680 = vpop.f32.mrb[0].mxu0
        %3681 = vmatprep.mubr.bf16.mxu0 0
        %3682 = vmatmul.mubr.bf16.gmra.mrb[0].mxu0 %v3569
        %v3683 = vpop.f32.mrb[0].mxu0
        %v3684 = vadd.f32 %v3591, %v3683
        %v3685 = vpop.f32.mrb[0].mxu0
        %v3686 = vpop.f32.mrb[0].mxu0
        %v3687 = vadd.f32 %v3591, %v3686
        %v3688 = vpop.f32.mrb[0].mxu0
        %3689 = vdwg.mxu0
        %v3690 = vadd.f32 %v3053, %v3676
        %v3691 = vadd.f32 %v3054, %v3679
        %v3692 = vadd.f32 %v3055, %v3684
        %v3693 = vadd.f32 %v3056, %v3687
        %3694 = vadd.xlane.f32.xlu0 %v3690
        %v3695 = vpop.xlane.xlu0 %3694
        %3696 = vadd.xlane.f32.xlu0 %v3691
        %v3697 = vpop.xlane.xlu0 %3696
        %3698 = vadd.xlane.f32.xlu0 %v3692
        %v3699 = vpop.xlane.xlu0 %3698
        %3700 = vadd.xlane.f32.xlu0 %v3693
        %v3701 = vpop.xlane.xlu0 %3700
        %v3702 = vmul.f32 %v3695, %v1847
        %v3703 = vmul.f32 %v3697, %v1847
        %v3704 = vmul.f32 %v3699, %v1847
        %v3705 = vmul.f32 %v3701, %v1847
        %v3706 = vsub.f32 %v3690, %v3702
        %v3707 = vsub.f32 %v3691, %v3703
        %v3708 = vsub.f32 %v3692, %v3704
        %v3709 = vsub.f32 %v3693, %v3705
        %v3710 = vmul.f32 %v3706, %v3706
        %v3711 = vmul.f32 %v3707, %v3707
        %v3712 = vmul.f32 %v3708, %v3708
        %v3713 = vmul.f32 %v3709, %v3709
        %3714 = vadd.xlane.f32.xlu0 %v3710
        %v3715 = vpop.xlane.xlu0 %3714
        %3716 = vadd.xlane.f32.xlu0 %v3711
        %v3717 = vpop.xlane.xlu0 %3716
        %3718 = vadd.xlane.f32.xlu0 %v3712
        %v3719 = vpop.xlane.xlu0 %3718
        %3720 = vadd.xlane.f32.xlu0 %v3713
        %v3721 = vpop.xlane.xlu0 %3720
        %v3722 = vmul.f32 %v3715, %v1847
        %v3723 = vmul.f32 %v3717, %v1847
        %v3724 = vmul.f32 %v3719, %v1847
        %v3725 = vmul.f32 %v3721, %v1847
        %v3726 = vadd.f32 %v3722, 1e-05
        %v3727 = vadd.f32 %v3723, 1e-05
        %v3728 = vadd.f32 %v3724, 1e-05
        %v3729 = vadd.f32 %v3725, 1e-05
        %v3730 = vrsqrt.pop %v3726
        %v3731 = vrsqrt.pop %v3727
        %v3732 = vrsqrt.pop %v3728
        %v3733 = vrsqrt.pop %v3729
        %v3734 = vmul.f32 %v3706, %v3730
        %v3735 = vmul.f32 %v3707, %v3731
        %v3736 = vmul.f32 %v3708, %v3732
        %v3737 = vmul.f32 %v3709, %v3733
        %v3738 = vld [vmem:[%s55] sm:$0x1]
        %v3740 = vlaneseq
        %v3741 = vshrl.u32 %v3740, 7
        %v3742 = vsub.s32 0, %v3741
        %v3743 = vrot.slane %v3738, %v3742
        %v3745 = vmul.f32 %v3734, %v3743
        %v3746 = vmul.f32 %v3735, %v3743
        %v3747 = vmul.f32 %v3736, %v3743
        %v3748 = vmul.f32 %v3737, %v3743
        %v3749 = vld [vmem:[%s57] sm:$0x1]
        %v3751 = vlaneseq
        %v3752 = vshrl.u32 %v3751, 7
        %v3753 = vsub.s32 0, %v3752
        %v3754 = vrot.slane %v3749, %v3753
        %v3756 = vadd.f32 %v3745, %v3754
        %v3757 = vadd.f32 %v3746, %v3754
        %v3758 = vadd.f32 %v3747, %v3754
        %v3759 = vadd.f32 %v3748, %v3754
        %v3760 = vpack.c.bf16 %v3757, %v3756
        %v3761 = vpack.c.bf16 %v3759, %v3758
        %v3762 = vld [vmem:[#allocation9] sm:$0xff]
        %v3763 = vld [vmem:[#allocation9 + $0x8] sm:$0xff]
        %v3764 = vld [vmem:[#allocation9 + $0x10] sm:$0xff]
        %v3765 = vld [vmem:[#allocation9 + $0x18] sm:$0xff]
        %v3766 = vld [vmem:[#allocation9 + $0x20] sm:$0xff]
        %v3767 = vld [vmem:[#allocation9 + $0x28] sm:$0xff]
        %v3768 = vld [vmem:[#allocation9 + $0x30] sm:$0xff]
        %v3769 = vld [vmem:[#allocation9 + $0x38] sm:$0xff]
        %v3770 = vld [vmem:[#allocation9 + $0x40] sm:$0xff]
        %v3771 = vld [vmem:[#allocation9 + $0x48] sm:$0xff]
        %v3772 = vld [vmem:[#allocation9 + $0x50] sm:$0xff]
        %v3773 = vld [vmem:[#allocation9 + $0x58] sm:$0xff]
        %v3774 = vld [vmem:[#allocation9 + $0x60] sm:$0xff]
        %v3775 = vld [vmem:[#allocation9 + $0x68] sm:$0xff]
        %v3776 = vld [vmem:[#allocation9 + $0x70] sm:$0xff]
        %v3777 = vld [vmem:[#allocation9 + $0x78] sm:$0xff]
        %v3778 = vld [vmem:[%s61] sm:$0x3]
        %v3780 = vlaneseq
        %v3781 = vshrl.u32 %v3780, 7
        %v3782 = vsub.s32 0, %v3781
        %v3783 = vrot.slane %v3778, %v3782
        %v3784 = vlaneseq
        %v3785 = vshrl.u32 %v3784, 7
        %v3786 = vsub.s32 1, %v3785
        %v3787 = vrot.slane %v3778, %v3786
        %v3806 = vunpack.c.l.b16 %v3762
        %v3807 = vunpack.c.h.b16 %v3762
        %v3808 = vunpack.c.l.b16 %v3763
        %v3809 = vunpack.c.h.b16 %v3763
        %v3810 = vunpack.c.l.b16 %v3764
        %v3811 = vunpack.c.h.b16 %v3764
        %v3812 = vunpack.c.l.b16 %v3765
        %v3813 = vunpack.c.h.b16 %v3765
        %v3814 = vunpack.c.l.b16 %v3766
        %v3815 = vunpack.c.h.b16 %v3766
        %v3816 = vunpack.c.l.b16 %v3767
        %v3817 = vunpack.c.h.b16 %v3767
        %v3818 = vunpack.c.l.b16 %v3768
        %v3819 = vunpack.c.h.b16 %v3768
        %v3820 = vunpack.c.l.b16 %v3769
        %v3821 = vunpack.c.h.b16 %v3769
        %v3822 = vunpack.c.l.b16 %v3770
        %v3823 = vunpack.c.h.b16 %v3770
        %v3824 = vunpack.c.l.b16 %v3771
        %v3825 = vunpack.c.h.b16 %v3771
        %v3826 = vunpack.c.l.b16 %v3772
        %v3827 = vunpack.c.h.b16 %v3772
        %v3828 = vunpack.c.l.b16 %v3773
        %v3829 = vunpack.c.h.b16 %v3773
        %v3830 = vunpack.c.l.b16 %v3774
        %v3831 = vunpack.c.h.b16 %v3774
        %v3832 = vunpack.c.l.b16 %v3775
        %v3833 = vunpack.c.h.b16 %v3775
        %v3834 = vunpack.c.l.b16 %v3776
        %v3835 = vunpack.c.h.b16 %v3776
        %v3836 = vunpack.c.l.b16 %v3777
        %v3837 = vunpack.c.h.b16 %v3777
        %v3838 = vpack.c.b16 %v3808, %v3806
        %v3839 = vpack.c.b16 %v3809, %v3807
        %v3840 = vpack.c.b16 %v3812, %v3810
        %v3841 = vpack.c.b16 %v3813, %v3811
        %v3842 = vpack.c.b16 %v3816, %v3814
        %v3843 = vpack.c.b16 %v3817, %v3815
        %v3844 = vpack.c.b16 %v3820, %v3818
        %v3845 = vpack.c.b16 %v3821, %v3819
        %v3846 = vpack.c.b16 %v3824, %v3822
        %v3847 = vpack.c.b16 %v3825, %v3823
        %v3848 = vpack.c.b16 %v3828, %v3826
        %v3849 = vpack.c.b16 %v3829, %v3827
        %v3850 = vpack.c.b16 %v3832, %v3830
        %v3851 = vpack.c.b16 %v3833, %v3831
        %v3852 = vpack.c.b16 %v3836, %v3834
        %v3853 = vpack.c.b16 %v3837, %v3835
        %3870 = vmatprep.subr.bf16.mxu0 %v3839
        %3871 = vmatpush1.bf16.msra.mxu0 %v3838
        %3872 = vmatprep.subr.bf16.mxu0 %v3841
        %3873 = vmatpush1.bf16.msra.mxu0 %v3840
        %3874 = vmatprep.subr.bf16.mxu0 %v3843
        %3875 = vmatpush1.bf16.msra.mxu0 %v3842
        %3876 = vmatprep.subr.bf16.mxu0 %v3845
        %3877 = vmatpush1.bf16.msra.mxu0 %v3844
        %3878 = vmatprep.subr.bf16.mxu0 %v3847
        %3879 = vmatpush1.bf16.msra.mxu0 %v3846
        %3880 = vmatprep.subr.bf16.mxu0 %v3849
        %3881 = vmatpush1.bf16.msra.mxu0 %v3848
        %3882 = vmatprep.subr.bf16.mxu0 %v3851
        %3883 = vmatpush1.bf16.msra.mxu0 %v3850
        %3884 = vmatprep.subr.bf16.mxu0 %v3853
        %3885 = vmatpush1.bf16.msra.mxu0 %v3852
        %3886 = vmatprep.subr.bf16.mxu0 0
        %3887 = vmatpush1.bf16.msra.mxu0 0
        %3888 = vmatprep.subr.bf16.mxu0 0
        %3889 = vmatpush1.bf16.msra.mxu0 0
        %3890 = vmatprep.subr.bf16.mxu0 0
        %3891 = vmatpush1.bf16.msra.mxu0 0
        %3892 = vmatprep.subr.bf16.mxu0 0
        %3893 = vmatpush1.bf16.msra.mxu0 0
        %3894 = vmatprep.subr.bf16.mxu0 0
        %3895 = vmatpush1.bf16.msra.mxu0 0
        %3896 = vmatprep.subr.bf16.mxu0 0
        %3897 = vmatpush1.bf16.msra.mxu0 0
        %3898 = vmatprep.subr.bf16.mxu0 0
        %3899 = vmatpush1.bf16.msra.mxu0 0
        %3900 = vmatprep.subr.bf16.mxu0 0
        %3901 = vmatpush1.bf16.msra.mxu0 0
        %3902 = vmatprep.mubr.bf16.mxu0 0
        %3903 = vmatmul.mubr.bf16.gmra.mrb[0].mxu0 %v3760
        %v3904 = vpop.f32.mrb[0].mxu0
        %v3905 = vadd.f32 %v3783, %v3904
        %v3906 = vpop.f32.mrb[0].mxu0
        %v3907 = vadd.f32 %v3787, %v3906
        %v3908 = vpop.f32.mrb[0].mxu0
        %v3909 = vadd.f32 %v3783, %v3908
        %v3910 = vpop.f32.mrb[0].mxu0
        %v3911 = vadd.f32 %v3787, %v3910
        %3912 = vmatprep.mubr.bf16.mxu0 0
        %3913 = vmatmul.mubr.bf16.gmra.mrb[0].mxu0 %v3761
        %v3914 = vpop.f32.mrb[0].mxu0
        %v3915 = vadd.f32 %v3783, %v3914
        %v3916 = vpop.f32.mrb[0].mxu0
        %v3917 = vadd.f32 %v3787, %v3916
        %v3918 = vpop.f32.mrb[0].mxu0
        %v3919 = vadd.f32 %v3783, %v3918
        %v3920 = vpop.f32.mrb[0].mxu0
        %v3921 = vadd.f32 %v3787, %v3920
        %3922 = vdwg.mxu0
        %v3923 = vmax.f32 %v3905, 0.0
        %v3924 = vmax.f32 %v3907, 0.0
        %v3925 = vmax.f32 %v3909, 0.0
        %v3926 = vmax.f32 %v3911, 0.0
        %v3927 = vmax.f32 %v3915, 0.0
        %v3928 = vmax.f32 %v3917, 0.0
        %v3929 = vmax.f32 %v3919, 0.0
        %v3930 = vmax.f32 %v3921, 0.0
        %v3931 = vpack.c.bf16 %v3925, %v3923
        %v3932 = vpack.c.bf16 %v3926, %v3924
        %v3933 = vpack.c.bf16 %v3929, %v3927
        %v3934 = vpack.c.bf16 %v3930, %v3928
        %v3935 = vld [vmem:[#allocation10] sm:$0xf]
        %v3936 = vld [vmem:[#allocation10 + $0x4] sm:$0xf]
        %v3937 = vld [vmem:[#allocation10 + $0x8] sm:$0xf]
        %v3938 = vld [vmem:[#allocation10 + $0xc] sm:$0xf]
        %v3939 = vld [vmem:[#allocation10 + $0x10] sm:$0xf]
        %v3940 = vld [vmem:[#allocation10 + $0x14] sm:$0xf]
        %v3941 = vld [vmem:[#allocation10 + $0x18] sm:$0xf]
        %v3942 = vld [vmem:[#allocation10 + $0x1c] sm:$0xf]
        %v3943 = vld [vmem:[#allocation10 + $0x20] sm:$0xf]
        %v3944 = vld [vmem:[#allocation10 + $0x24] sm:$0xf]
        %v3945 = vld [vmem:[#allocation10 + $0x28] sm:$0xf]
        %v3946 = vld [vmem:[#allocation10 + $0x2c] sm:$0xf]
        %v3947 = vld [vmem:[#allocation10 + $0x30] sm:$0xf]
        %v3948 = vld [vmem:[#allocation10 + $0x34] sm:$0xf]
        %v3949 = vld [vmem:[#allocation10 + $0x38] sm:$0xf]
        %v3950 = vld [vmem:[#allocation10 + $0x3c] sm:$0xf]
        %v3951 = vld [vmem:[#allocation10 + $0x40] sm:$0xf]
        %v3952 = vld [vmem:[#allocation10 + $0x44] sm:$0xf]
        %v3953 = vld [vmem:[#allocation10 + $0x48] sm:$0xf]
        %v3954 = vld [vmem:[#allocation10 + $0x4c] sm:$0xf]
        %v3955 = vld [vmem:[#allocation10 + $0x50] sm:$0xf]
        %v3956 = vld [vmem:[#allocation10 + $0x54] sm:$0xf]
        %v3957 = vld [vmem:[#allocation10 + $0x58] sm:$0xf]
        %v3958 = vld [vmem:[#allocation10 + $0x5c] sm:$0xf]
        %v3959 = vld [vmem:[#allocation10 + $0x60] sm:$0xf]
        %v3960 = vld [vmem:[#allocation10 + $0x64] sm:$0xf]
        %v3961 = vld [vmem:[#allocation10 + $0x68] sm:$0xf]
        %v3962 = vld [vmem:[#allocation10 + $0x6c] sm:$0xf]
        %v3963 = vld [vmem:[#allocation10 + $0x70] sm:$0xf]
        %v3964 = vld [vmem:[#allocation10 + $0x74] sm:$0xf]
        %v3965 = vld [vmem:[#allocation10 + $0x78] sm:$0xf]
        %v3966 = vld [vmem:[#allocation10 + $0x7c] sm:$0xf]
        %v3967 = vld [vmem:[%s65] sm:$0x1]
        %v3969 = vlaneseq
        %v3970 = vshrl.u32 %v3969, 7
        %v3971 = vsub.s32 0, %v3970
        %v3972 = vrot.slane %v3967, %v3971
        %v4006 = vunpack.c.l.b16 %v3935
        %v4007 = vunpack.c.l.b16 %v3936
        %v4008 = vunpack.c.l.b16 %v3937
        %v4009 = vunpack.c.l.b16 %v3938
        %v4010 = vunpack.c.l.b16 %v3939
        %v4011 = vunpack.c.l.b16 %v3940
        %v4012 = vunpack.c.l.b16 %v3941
        %v4013 = vunpack.c.l.b16 %v3942
        %v4014 = vunpack.c.l.b16 %v3943
        %v4015 = vunpack.c.l.b16 %v3944
        %v4016 = vunpack.c.l.b16 %v3945
        %v4017 = vunpack.c.l.b16 %v3946
        %v4018 = vunpack.c.l.b16 %v3947
        %v4019 = vunpack.c.l.b16 %v3948
        %v4020 = vunpack.c.l.b16 %v3949
        %v4021 = vunpack.c.l.b16 %v3950
        %v4022 = vunpack.c.l.b16 %v3951
        %v4023 = vunpack.c.l.b16 %v3952
        %v4024 = vunpack.c.l.b16 %v3953
        %v4025 = vunpack.c.l.b16 %v3954
        %v4026 = vunpack.c.l.b16 %v3955
        %v4027 = vunpack.c.l.b16 %v3956
        %v4028 = vunpack.c.l.b16 %v3957
        %v4029 = vunpack.c.l.b16 %v3958
        %v4030 = vunpack.c.l.b16 %v3959
        %v4031 = vunpack.c.l.b16 %v3960
        %v4032 = vunpack.c.l.b16 %v3961
        %v4033 = vunpack.c.l.b16 %v3962
        %v4034 = vunpack.c.l.b16 %v3963
        %v4035 = vunpack.c.l.b16 %v3964
        %v4036 = vunpack.c.l.b16 %v3965
        %v4037 = vunpack.c.l.b16 %v3966
        %v4038 = vpack.c.b16 %v4007, %v4006
        %v4039 = vpack.c.b16 %v4009, %v4008
        %v4040 = vpack.c.b16 %v4011, %v4010
        %v4041 = vpack.c.b16 %v4013, %v4012
        %v4042 = vpack.c.b16 %v4015, %v4014
        %v4043 = vpack.c.b16 %v4017, %v4016
        %v4044 = vpack.c.b16 %v4019, %v4018
        %v4045 = vpack.c.b16 %v4021, %v4020
        %v4046 = vpack.c.b16 %v4023, %v4022
        %v4047 = vpack.c.b16 %v4025, %v4024
        %v4048 = vpack.c.b16 %v4027, %v4026
        %v4049 = vpack.c.b16 %v4029, %v4028
        %v4050 = vpack.c.b16 %v4031, %v4030
        %v4051 = vpack.c.b16 %v4033, %v4032
        %v4052 = vpack.c.b16 %v4035, %v4034
        %v4053 = vpack.c.b16 %v4037, %v4036
        %4070 = vmatprep.subr.bf16.mxu0 0
        %4071 = vmatpush1.bf16.msra.mxu0 %v4038
        %4072 = vmatprep.subr.bf16.mxu0 0
        %4073 = vmatpush1.bf16.msra.mxu0 %v4039
        %4074 = vmatprep.subr.bf16.mxu0 0
        %4075 = vmatpush1.bf16.msra.mxu0 %v4040
        %4076 = vmatprep.subr.bf16.mxu0 0
        %4077 = vmatpush1.bf16.msra.mxu0 %v4041
        %4078 = vmatprep.subr.bf16.mxu0 0
        %4079 = vmatpush1.bf16.msra.mxu0 %v4042
        %4080 = vmatprep.subr.bf16.mxu0 0
        %4081 = vmatpush1.bf16.msra.mxu0 %v4043
        %4082 = vmatprep.subr.bf16.mxu0 0
        %4083 = vmatpush1.bf16.msra.mxu0 %v4044
        %4084 = vmatprep.subr.bf16.mxu0 0
        %4085 = vmatpush1.bf16.msra.mxu0 %v4045
        %4086 = vmatprep.subr.bf16.mxu0 0
        %4087 = vmatpush1.bf16.msra.mxu0 %v4046
        %4088 = vmatprep.subr.bf16.mxu0 0
        %4089 = vmatpush1.bf16.msra.mxu0 %v4047
        %4090 = vmatprep.subr.bf16.mxu0 0
        %4091 = vmatpush1.bf16.msra.mxu0 %v4048
        %4092 = vmatprep.subr.bf16.mxu0 0
        %4093 = vmatpush1.bf16.msra.mxu0 %v4049
        %4094 = vmatprep.subr.bf16.mxu0 0
        %4095 = vmatpush1.bf16.msra.mxu0 %v4050
        %4096 = vmatprep.subr.bf16.mxu0 0
        %4097 = vmatpush1.bf16.msra.mxu0 %v4051
        %4098 = vmatprep.subr.bf16.mxu0 0
        %4099 = vmatpush1.bf16.msra.mxu0 %v4052
        %4100 = vmatprep.subr.bf16.mxu0 0
        %4101 = vmatpush1.bf16.msra.mxu0 %v4053
        %4102 = vmatprep.mubr.bf16.mxu0 %v3932
        %4103 = vmatmul.mubr.bf16.gmra.mrb[0].mxu0 %v3931
        %v4104 = vpop.f32.mrb[0].mxu0
        %v4105 = vadd.f32 %v3972, %v4104
        %v4106 = vpop.f32.mrb[0].mxu0
        %v4107 = vpop.f32.mrb[0].mxu0
        %v4108 = vadd.f32 %v3972, %v4107
        %v4109 = vpop.f32.mrb[0].mxu0
        %4110 = vmatprep.mubr.bf16.mxu0 %v3934
        %4111 = vmatmul.mubr.bf16.gmra.mrb[0].mxu0 %v3933
        %v4112 = vpop.f32.mrb[0].mxu0
        %v4113 = vadd.f32 %v3972, %v4112
        %v4114 = vpop.f32.mrb[0].mxu0
        %v4115 = vpop.f32.mrb[0].mxu0
        %v4116 = vadd.f32 %v3972, %v4115
        %v4117 = vpop.f32.mrb[0].mxu0
        %4118 = vdwg.mxu0
        %v4119 = vadd.f32 %v3756, %v4105
        %v4120 = vadd.f32 %v3757, %v4108
        %v4121 = vadd.f32 %v3758, %v4113
        %v4122 = vadd.f32 %v3759, %v4116
        %4123 = vadd.xlane.f32.xlu0 %v4119
        %v4124 = vpop.xlane.xlu0 %4123
        %4125 = vadd.xlane.f32.xlu0 %v4120
        %v4126 = vpop.xlane.xlu0 %4125
        %4127 = vadd.xlane.f32.xlu0 %v4121
        %v4128 = vpop.xlane.xlu0 %4127
        %4129 = vadd.xlane.f32.xlu0 %v4122
        %v4130 = vpop.xlane.xlu0 %4129
        %v4131 = vmul.f32 %v4124, %v1847
        %v4132 = vmul.f32 %v4126, %v1847
        %v4133 = vmul.f32 %v4128, %v1847
        %v4134 = vmul.f32 %v4130, %v1847
        %v4135 = vsub.f32 %v4119, %v4131
        %v4136 = vsub.f32 %v4120, %v4132
        %v4137 = vsub.f32 %v4121, %v4133
        %v4138 = vsub.f32 %v4122, %v4134
        %v4139 = vmul.f32 %v4135, %v4135
        %v4140 = vmul.f32 %v4136, %v4136
        %v4141 = vmul.f32 %v4137, %v4137
        %v4142 = vmul.f32 %v4138, %v4138
        %4143 = vadd.xlane.f32.xlu0 %v4139
        %v4144 = vpop.xlane.xlu0 %4143
        %4145 = vadd.xlane.f32.xlu0 %v4140
        %v4146 = vpop.xlane.xlu0 %4145
        %4147 = vadd.xlane.f32.xlu0 %v4141
        %v4148 = vpop.xlane.xlu0 %4147
        %4149 = vadd.xlane.f32.xlu0 %v4142
        %v4150 = vpop.xlane.xlu0 %4149
        %v4151 = vmul.f32 %v4144, %v1847
        %v4152 = vmul.f32 %v4146, %v1847
        %v4153 = vmul.f32 %v4148, %v1847
        %v4154 = vmul.f32 %v4150, %v1847
        %v4155 = vadd.f32 %v4151, 1e-05
        %v4156 = vadd.f32 %v4152, 1e-05
        %v4157 = vadd.f32 %v4153, 1e-05
        %v4158 = vadd.f32 %v4154, 1e-05
        %v4159 = vrsqrt.pop %v4155
        %v4160 = vrsqrt.pop %v4156
        %v4161 = vrsqrt.pop %v4157
        %v4162 = vrsqrt.pop %v4158
        %v4163 = vmul.f32 %v4135, %v4159
        %v4164 = vmul.f32 %v4136, %v4160
        %v4165 = vmul.f32 %v4137, %v4161
        %v4166 = vmul.f32 %v4138, %v4162
        %v4167 = vld [vmem:[%s67] sm:$0x1]
        %v4169 = vlaneseq
        %v4170 = vshrl.u32 %v4169, 7
        %v4171 = vsub.s32 0, %v4170
        %v4172 = vrot.slane %v4167, %v4171
        %v4174 = vmul.f32 %v4163, %v4172
        %v4175 = vmul.f32 %v4164, %v4172
        %v4176 = vmul.f32 %v4165, %v4172
        %v4177 = vmul.f32 %v4166, %v4172
        %v4178 = vld [vmem:[%s69] sm:$0x1]
        %v4180 = vlaneseq
        %v4181 = vshrl.u32 %v4180, 7
        %v4182 = vsub.s32 0, %v4181
        %v4183 = vrot.slane %v4178, %v4182
        %v4185 = vadd.f32 %v4174, %v4183
        %v4186 = vadd.f32 %v4175, %v4183
        %v4187 = vadd.f32 %v4176, %v4183
        %v4188 = vadd.f32 %v4177, %v4183
        %v4189 = vpack.c.bf16 %v4186, %v4185
        %v4190 = vpack.c.bf16 %v4188, %v4187
        %v4193 = vunpack.c.l.b16 %v4189
        %v4194 = vunpack.c.h.b16 %v4189
        %v4195 = vunpack.c.l.b16 %v4190
        %v4196 = vunpack.c.h.b16 %v4190
        %v4197 = vpack.c.b16 %v4193, %v4193
        %v4198 = vpack.c.b16 %v4194, %v4194
        %v4199 = vpack.c.b16 %v4195, %v4195
        %v4200 = vpack.c.b16 %v4196, %v4196
        %4205 = vst [vmem:[%s1188] sm:$0xf] %v4197
        %4206 = vst [vmem:[%s1188 + $0x4] sm:$0xf] %v4198
        %4207 = vst [vmem:[%s1188 + $0x8] sm:$0xf] %v4199
        %4208 = vst [vmem:[%s1188 + $0xc] sm:$0xf] %v4200
        %s4209 = smul.u32 4, %s86
        %p4210 = scmp.lt.s32.totalorder %s4209, 7
        %s4211 = scalar_select %p4210, %s4209, 7
        %s4212 = smul.addr %s4211, 4
        %s4213 = scalar_lea.vmem %s71, %s4212
        // Predicated region
        $region185: #{transformer_forward.2} parent=159 // pred_check
          %p4214 = pneg %p849
        $region186: #{transformer_forward.2} parent=159 // pred_check_branch
          %4216 = sbr.rel (%p4214) target = $region188
        $region187: #{transformer_forward.2} parent=159 // pred_region
          %s4217 = smul.u32 4, %s86
        $region188: #{transformer_forward.2} parent=159 // pred_fallthru
          _
      $region160: #{transformer_forward.2} parent=5 // pred_fallthru
        _
      %p4218 = scmp.le.s32.totalorder 2, %s81
      // Predicated region
      $region189: #{transformer_forward.2} parent=5 // pred_check
        %p4219 = pneg %p4218
      $region190: #{transformer_forward.2} parent=5 // pred_check_branch
        %4221 = sbr.rel (%p4219) target = $region192
      $region191: #{transformer_forward.2} parent=5 // pred_region
        %s4222 = ssub.s32 %s81, 2
        // Predicated region
        $region193: #{transformer_forward.2} parent=191 // pred_check
          %p4223 = pneg %p855
        $region194: #{transformer_forward.2} parent=191 // pred_check_branch
          %4225 = sbr.rel (%p4223) target = $region196
        $region195: #{transformer_forward.2} parent=191 // pred_region
          %s4226 = smul.u32 4, %s87
          %p4227 = scmp.lt.s32.totalorder %s4226, 7
          %s4228 = scalar_select %p4227, %s4226, 7
          %s4229 = smul.addr %s4228, 4
          %s4230 = scalar_lea.vmem %s71, %s4229
        $region196: #{transformer_forward.2} parent=191 // pred_fallthru
          _
      $region192: #{transformer_forward.2} parent=5 // pred_fallthru
        _
    $region6: #{transformer_forward.2} parent=1 // loop_footer
      %s85 = sadd.s32 1, %s81
    $region7: #{transformer_forward.2} parent=1 // loop_footer_branch
      %80 = sbr.rel target = $region3
    $region8: #{transformer_forward.2} parent=1 // loop_exit
      _
    %4231 = vsyncpa [#allocation3], 1
    %s4232 = scalar_lea.sflag [#allocation3], 1
    %4233 = vsyncpa %s4232, 1
    %4234 = vsyncpa [#allocation5], 1
    %4235 = vsyncpa [#allocation8], 1
    %4236 = vsyncpa [#allocation11], 1

</llo_original>
